<compile_context>
chip_gen: v7x
topology: tpu7x:2x2x1
jax: 0.10.0
libtpu: 0.0.40
codegen_flags: <defaults>
</compile_context>

<pallas_src>
import functools

import jax
import jax.numpy as jnp
from jax.experimental import pallas as pl
from jax.experimental.pallas import tpu as pltpu

PUNISH_COEF = -100.0
ILLEGAL_PENALTY = 1e10


def mean_field_kernel(logits_ref, mask_ref, conf_ref, m1_ref, m1t_ref, d_ref,
                      out_ref, *, iterations):
    logits = logits_ref[...]                       # (N, A) f32
    neg = ILLEGAL_PENALTY * mask_ref[...]          # (N, A) f32
    base = logits - neg                            # loop-invariant, tiny

    def body(q):
        # per-agent softmax over actions (last / lane axis)
        m = jnp.max(q, axis=-1, keepdims=True)
        e = jnp.exp(q - m)
        probs = e / jnp.sum(e, axis=-1, keepdims=True)                    # (N, A)

        # flatten probs -> lane-dense (1, N*A) row:
        #   pp[m, c] = probs[m, c % A];  d[m, c] = (c // A == m)
        pp = jnp.dot(probs, m1_ref[...],
                     preferred_element_type=jnp.float32)                  # (N, NA)
        pflat = jnp.sum(pp * d_ref[...], axis=0, keepdims=True)           # (1, NA)

        # main punishment matvec on the MXU (conf[c2, c1] = pair weight)
        punflat = jnp.dot(pflat, conf_ref[...],
                          preferred_element_type=jnp.float32)             # (1, NA)

        # unflatten (1, N*A) -> (N, A): select own-agent columns, fold actions
        pun = jnp.dot(punflat * d_ref[...], m1t_ref[...],
                      preferred_element_type=jnp.float32)                 # (N, A)

        # q_logits = logits + punishments - 1e10 * illegal_mask
        return base + PUNISH_COEF * pun

    q = jnp.zeros_like(logits) - neg               # initial q_logits
    if iterations <= 4:                            # static unroll (iterations=3)
        for _ in range(iterations):
            q = body(q)
    else:                                          # bound live ranges for big counts
        q = jax.lax.fori_loop(0, iterations, lambda _, qq: body(qq), q)
    out_ref[...] = q


def mean_field_forward(logits, illegal_action_masks, conflict_pairs, iterations):
    # matches `if len(conflict_pairs) == 0: return logits`
    if conflict_pairs.shape[0] == 0:
        return logits
    N, A = logits.shape
    NA = N * A
    cp = conflict_pairs.astype(jnp.int32)
    idx1 = cp[:, 0] * A + cp[:, 1]                 # punished (destination) cell
    idx2 = cp[:, 2] * A + cp[:, 3]                 # gathered (source) cell
    w = cp[:, 4].astype(jnp.float32)

    # Dense lane-dense conflict matrix: conf[c2, c1] = sum of pair weights
    # flowing from source cell c2 into destination cell c1.
    conf = jnp.zeros((NA, NA), jnp.float32).at[idx2, idx1].add(w)

    # Constant 0/1 selector matrices (built wrapper-side; exact in f32):
    #   d[m, c]   = 1 iff c // A == m          (agent-of-column mask, (N, NA))
    #   m1[b, c]  = 1 iff c %  A == b          (action selector,      (A, NA))
    #   m1t       = m1.T                       ((NA, A))
    d_mask = jnp.repeat(jnp.eye(N, dtype=jnp.float32), A, axis=1)
    m1 = jnp.tile(jnp.eye(A, dtype=jnp.float32), (1, N))
    m1t = m1.T

    iters = int(iterations)
    kernel = functools.partial(mean_field_kernel, iterations=iters)

    conf_bytes = NA * NA * 4
    io_bytes = conf_bytes + (A * NA + NA * A + N * NA + 3 * N * A) * 4
    vmem_limit = int(min(64 << 20, max(2 * conf_bytes + N * NA * 4 + (4 << 20),
                                       32 << 20)))
    cost = pl.CostEstimate(
        flops=int(6 * iters * NA * NA + 10 * iters * N * A),
        transcendentals=int(iters * N * A),
        bytes_accessed=int(io_bytes),
    )

    return pl.pallas_call(
        kernel,
        out_shape=jax.ShapeDtypeStruct((N, A), jnp.float32),
        in_specs=[pl.BlockSpec(memory_space=pltpu.MemorySpace.VMEM)] * 6,
        out_specs=pl.BlockSpec(memory_space=pltpu.MemorySpace.VMEM),
        compiler_params=pltpu.CompilerParams(vmem_limit_bytes=vmem_limit),
        cost_estimate=cost,
    )(logits.astype(jnp.float32),
      illegal_action_masks.astype(jnp.float32),
      conf, m1, m1t, d_mask)


def mean_field_reference(logits, illegal_action_masks, conflict_pairs, iterations):
    """Pure-JAX port of the PyTorch forward, used for verification."""
    N, A = logits.shape
    cp = conflict_pairs.astype(jnp.int32)
    idx1 = cp[:, 0] * A + cp[:, 1]
    idx2 = cp[:, 2] * A + cp[:, 3]
    w = cp[:, 4].astype(jnp.float32)
    q = -ILLEGAL_PENALTY * illegal_action_masks
    for _ in range(iterations):
        probs = jax.nn.softmax(q, axis=-1).reshape(-1)
        pun = jnp.zeros(N * A, jnp.float32).at[idx1].add(probs[idx2] * w)
        pun = pun * PUNISH_COEF
        q = logits + pun.reshape(N, A) - ILLEGAL_PENALTY * illegal_action_masks
    return q


if __name__ == "__main__":
    N, A, P, ITERS = 64, 8, 40, 3              # module __init__: iterations=3
    key = jax.random.PRNGKey(0)
    k = jax.random.split(key, 7)
    logits = jax.random.normal(k[0], (N, A), jnp.float32)
    illegal = (jax.random.uniform(k[1], (N, A)) < 0.2).astype(jnp.float32)
    agent1 = jax.random.randint(k[2], (P,), 0, N)
    act1 = jax.random.randint(k[3], (P,), 0, A)
    agent2 = jax.random.randint(k[4], (P,), 0, N)
    act2 = jax.random.randint(k[5], (P,), 0, A)
    pmask = jax.random.randint(k[6], (P,), 0, 2)
    conflict_pairs = jnp.stack([agent1, act1, agent2, act2, pmask], axis=1)

    out = mean_field_forward(logits, illegal, conflict_pairs, ITERS)
    out = jax.block_until_ready(out)

    ref = mean_field_reference(logits, illegal, conflict_pairs, ITERS)
    max_err = float(jnp.max(jnp.abs(out - ref)))
    assert jnp.allclose(out, ref, rtol=1e-5, atol=2e-3), max_err
    print("KERNEL_OK")
</pallas_src>

<mosaic_0001>
module attributes {stable_mosaic.version = 11 : i64} {
  func.func @mean_field_kernel(%arg0: memref<64x8xf32, #tpu.memory_space<vmem>>, %arg1: memref<64x8xf32, #tpu.memory_space<vmem>>, %arg2: memref<512x512xf32, #tpu.memory_space<vmem>>, %arg3: memref<8x512xf32, #tpu.memory_space<vmem>>, %arg4: memref<512x8xf32, #tpu.memory_space<vmem>>, %arg5: memref<64x512xf32, #tpu.memory_space<vmem>>, %arg6: memref<64x8xf32, #tpu.memory_space<vmem>>) attributes {dimension_semantics = [], scalar_prefetch = 0 : i64, scratch_operands = 0 : i64, tpu.core_type = #tpu.core_type<tc>} {
    %c0 = arith.constant 0 : index
    %c0_0 = arith.constant 0 : index
    %0 = vector.load %arg0[%c0, %c0_0] : memref<64x8xf32, #tpu.memory_space<vmem>>, vector<64x8xf32>
    %c0_1 = arith.constant 0 : index
    %c0_2 = arith.constant 0 : index
    %1 = vector.load %arg1[%c0_1, %c0_2] : memref<64x8xf32, #tpu.memory_space<vmem>>, vector<64x8xf32>
    %cst = arith.constant 1.000000e+10 : f32
    %2 = vector.broadcast %cst : f32 to vector<64x8xf32>
    %3 = arith.mulf %2, %1 : vector<64x8xf32>
    %4 = arith.subf %0, %3 : vector<64x8xf32>
    %cst_3 = arith.constant 0.000000e+00 : f32
    %5 = vector.broadcast %cst_3 : f32 to vector<64x8xf32>
    %6 = arith.subf %5, %3 : vector<64x8xf32>
    %cst_4 = arith.constant dense<0xFF800000> : vector<64xf32>
    %7 = vector.multi_reduction <maximumf>, %6, %cst_4 [1] : vector<64x8xf32> to vector<64xf32>
    %8 = vector.shape_cast %7 : vector<64xf32> to vector<64x1xf32>
    %9 = vector.broadcast %8 : vector<64x1xf32> to vector<64x8xf32>
    %10 = arith.subf %6, %9 : vector<64x8xf32>
    %11 = math.exp %10 : vector<64x8xf32>
    %cst_5 = arith.constant dense<0.000000e+00> : vector<64xf32>
    %12 = vector.multi_reduction <add>, %11, %cst_5 [1] : vector<64x8xf32> to vector<64xf32>
    %13 = vector.shape_cast %12 : vector<64xf32> to vector<64x1xf32>
    %14 = vector.broadcast %13 : vector<64x1xf32> to vector<64x8xf32>
    %15 = arith.divf %11, %14 : vector<64x8xf32>
    %c0_6 = arith.constant 0 : index
    %c0_7 = arith.constant 0 : index
    %16 = vector.load %arg3[%c0_6, %c0_7] : memref<8x512xf32, #tpu.memory_space<vmem>>, vector<8x512xf32>
    %cst_8 = arith.constant dense<0.000000e+00> : vector<64x512xf32>
    %17 = tpu.matmul %15, %16, %cst_8 {dimension_numbers = #tpu.dot_dimension_numbers<[1], [0], [0], [1], [0, 0, 1, 1], [], []>} : vector<64x8xf32>, vector<8x512xf32>, vector<64x512xf32> -> vector<64x512xf32>
    %c0_9 = arith.constant 0 : index
    %c0_10 = arith.constant 0 : index
    %18 = vector.load %arg5[%c0_9, %c0_10] : memref<64x512xf32, #tpu.memory_space<vmem>>, vector<64x512xf32>
    %19 = arith.mulf %17, %18 : vector<64x512xf32>
    %cst_11 = arith.constant dense<0.000000e+00> : vector<512xf32>
    %20 = vector.multi_reduction <add>, %19, %cst_11 [0] : vector<64x512xf32> to vector<512xf32>
    %21 = vector.shape_cast %20 : vector<512xf32> to vector<1x512xf32>
    %c0_12 = arith.constant 0 : index
    %c0_13 = arith.constant 0 : index
    %22 = vector.load %arg2[%c0_12, %c0_13] : memref<512x512xf32, #tpu.memory_space<vmem>>, vector<512x512xf32>
    %cst_14 = arith.constant dense<0.000000e+00> : vector<1x512xf32>
    %23 = tpu.matmul %21, %22, %cst_14 {dimension_numbers = #tpu.dot_dimension_numbers<[1], [0], [0], [1], [0, 0, 1, 1], [], []>} : vector<1x512xf32>, vector<512x512xf32>, vector<1x512xf32> -> vector<1x512xf32>
    %c0_15 = arith.constant 0 : index
    %c0_16 = arith.constant 0 : index
    %24 = vector.load %arg5[%c0_15, %c0_16] : memref<64x512xf32, #tpu.memory_space<vmem>>, vector<64x512xf32>
    %25 = vector.broadcast %23 : vector<1x512xf32> to vector<64x512xf32>
    %26 = arith.mulf %25, %24 : vector<64x512xf32>
    %c0_17 = arith.constant 0 : index
    %c0_18 = arith.constant 0 : index
    %27 = vector.load %arg4[%c0_17, %c0_18] : memref<512x8xf32, #tpu.memory_space<vmem>>, vector<512x8xf32>
    %cst_19 = arith.constant dense<0.000000e+00> : vector<64x8xf32>
    %28 = tpu.matmul %26, %27, %cst_19 {dimension_numbers = #tpu.dot_dimension_numbers<[1], [0], [0], [1], [0, 0, 1, 1], [], []>} : vector<64x512xf32>, vector<512x8xf32>, vector<64x8xf32> -> vector<64x8xf32>
    %cst_20 = arith.constant -1.000000e+02 : f32
    %29 = vector.broadcast %cst_20 : f32 to vector<64x8xf32>
    %30 = arith.mulf %29, %28 : vector<64x8xf32>
    %31 = arith.addf %4, %30 : vector<64x8xf32>
    %cst_21 = arith.constant dense<0xFF800000> : vector<64xf32>
    %32 = vector.multi_reduction <maximumf>, %31, %cst_21 [1] : vector<64x8xf32> to vector<64xf32>
    %33 = vector.shape_cast %32 : vector<64xf32> to vector<64x1xf32>
    %34 = vector.broadcast %33 : vector<64x1xf32> to vector<64x8xf32>
    %35 = arith.subf %31, %34 : vector<64x8xf32>
    %36 = math.exp %35 : vector<64x8xf32>
    %cst_22 = arith.constant dense<0.000000e+00> : vector<64xf32>
    %37 = vector.multi_reduction <add>, %36, %cst_22 [1] : vector<64x8xf32> to vector<64xf32>
    %38 = vector.shape_cast %37 : vector<64xf32> to vector<64x1xf32>
    %39 = vector.broadcast %38 : vector<64x1xf32> to vector<64x8xf32>
    %40 = arith.divf %36, %39 : vector<64x8xf32>
    %c0_23 = arith.constant 0 : index
    %c0_24 = arith.constant 0 : index
    %41 = vector.load %arg3[%c0_23, %c0_24] : memref<8x512xf32, #tpu.memory_space<vmem>>, vector<8x512xf32>
    %cst_25 = arith.constant dense<0.000000e+00> : vector<64x512xf32>
    %42 = tpu.matmul %40, %41, %cst_25 {dimension_numbers = #tpu.dot_dimension_numbers<[1], [0], [0], [1], [0, 0, 1, 1], [], []>} : vector<64x8xf32>, vector<8x512xf32>, vector<64x512xf32> -> vector<64x512xf32>
    %c0_26 = arith.constant 0 : index
    %c0_27 = arith.constant 0 : index
    %43 = vector.load %arg5[%c0_26, %c0_27] : memref<64x512xf32, #tpu.memory_space<vmem>>, vector<64x512xf32>
    %44 = arith.mulf %42, %43 : vector<64x512xf32>
    %cst_28 = arith.constant dense<0.000000e+00> : vector<512xf32>
    %45 = vector.multi_reduction <add>, %44, %cst_28 [0] : vector<64x512xf32> to vector<512xf32>
    %46 = vector.shape_cast %45 : vector<512xf32> to vector<1x512xf32>
    %c0_29 = arith.constant 0 : index
    %c0_30 = arith.constant 0 : index
    %47 = vector.load %arg2[%c0_29, %c0_30] : memref<512x512xf32, #tpu.memory_space<vmem>>, vector<512x512xf32>
    %cst_31 = arith.constant dense<0.000000e+00> : vector<1x512xf32>
    %48 = tpu.matmul %46, %47, %cst_31 {dimension_numbers = #tpu.dot_dimension_numbers<[1], [0], [0], [1], [0, 0, 1, 1], [], []>} : vector<1x512xf32>, vector<512x512xf32>, vector<1x512xf32> -> vector<1x512xf32>
    %c0_32 = arith.constant 0 : index
    %c0_33 = arith.constant 0 : index
    %49 = vector.load %arg5[%c0_32, %c0_33] : memref<64x512xf32, #tpu.memory_space<vmem>>, vector<64x512xf32>
    %50 = vector.broadcast %48 : vector<1x512xf32> to vector<64x512xf32>
    %51 = arith.mulf %50, %49 : vector<64x512xf32>
    %c0_34 = arith.constant 0 : index
    %c0_35 = arith.constant 0 : index
    %52 = vector.load %arg4[%c0_34, %c0_35] : memref<512x8xf32, #tpu.memory_space<vmem>>, vector<512x8xf32>
    %cst_36 = arith.constant dense<0.000000e+00> : vector<64x8xf32>
    %53 = tpu.matmul %51, %52, %cst_36 {dimension_numbers = #tpu.dot_dimension_numbers<[1], [0], [0], [1], [0, 0, 1, 1], [], []>} : vector<64x512xf32>, vector<512x8xf32>, vector<64x8xf32> -> vector<64x8xf32>
    %cst_37 = arith.constant -1.000000e+02 : f32
    %54 = vector.broadcast %cst_37 : f32 to vector<64x8xf32>
    %55 = arith.mulf %54, %53 : vector<64x8xf32>
    %56 = arith.addf %4, %55 : vector<64x8xf32>
    %cst_38 = arith.constant dense<0xFF800000> : vector<64xf32>
    %57 = vector.multi_reduction <maximumf>, %56, %cst_38 [1] : vector<64x8xf32> to vector<64xf32>
    %58 = vector.shape_cast %57 : vector<64xf32> to vector<64x1xf32>
    %59 = vector.broadcast %58 : vector<64x1xf32> to vector<64x8xf32>
    %60 = arith.subf %56, %59 : vector<64x8xf32>
    %61 = math.exp %60 : vector<64x8xf32>
    %cst_39 = arith.constant dense<0.000000e+00> : vector<64xf32>
    %62 = vector.multi_reduction <add>, %61, %cst_39 [1] : vector<64x8xf32> to vector<64xf32>
    %63 = vector.shape_cast %62 : vector<64xf32> to vector<64x1xf32>
    %64 = vector.broadcast %63 : vector<64x1xf32> to vector<64x8xf32>
    %65 = arith.divf %61, %64 : vector<64x8xf32>
    %c0_40 = arith.constant 0 : index
    %c0_41 = arith.constant 0 : index
    %66 = vector.load %arg3[%c0_40, %c0_41] : memref<8x512xf32, #tpu.memory_space<vmem>>, vector<8x512xf32>
    %cst_42 = arith.constant dense<0.000000e+00> : vector<64x512xf32>
    %67 = tpu.matmul %65, %66, %cst_42 {dimension_numbers = #tpu.dot_dimension_numbers<[1], [0], [0], [1], [0, 0, 1, 1], [], []>} : vector<64x8xf32>, vector<8x512xf32>, vector<64x512xf32> -> vector<64x512xf32>
    %c0_43 = arith.constant 0 : index
    %c0_44 = arith.constant 0 : index
    %68 = vector.load %arg5[%c0_43, %c0_44] : memref<64x512xf32, #tpu.memory_space<vmem>>, vector<64x512xf32>
    %69 = arith.mulf %67, %68 : vector<64x512xf32>
    %cst_45 = arith.constant dense<0.000000e+00> : vector<512xf32>
    %70 = vector.multi_reduction <add>, %69, %cst_45 [0] : vector<64x512xf32> to vector<512xf32>
    %71 = vector.shape_cast %70 : vector<512xf32> to vector<1x512xf32>
    %c0_46 = arith.constant 0 : index
    %c0_47 = arith.constant 0 : index
    %72 = vector.load %arg2[%c0_46, %c0_47] : memref<512x512xf32, #tpu.memory_space<vmem>>, vector<512x512xf32>
    %cst_48 = arith.constant dense<0.000000e+00> : vector<1x512xf32>
    %73 = tpu.matmul %71, %72, %cst_48 {dimension_numbers = #tpu.dot_dimension_numbers<[1], [0], [0], [1], [0, 0, 1, 1], [], []>} : vector<1x512xf32>, vector<512x512xf32>, vector<1x512xf32> -> vector<1x512xf32>
    %c0_49 = arith.constant 0 : index
    %c0_50 = arith.constant 0 : index
    %74 = vector.load %arg5[%c0_49, %c0_50] : memref<64x512xf32, #tpu.memory_space<vmem>>, vector<64x512xf32>
    %75 = vector.broadcast %73 : vector<1x512xf32> to vector<64x512xf32>
    %76 = arith.mulf %75, %74 : vector<64x512xf32>
    %c0_51 = arith.constant 0 : index
    %c0_52 = arith.constant 0 : index
    %77 = vector.load %arg4[%c0_51, %c0_52] : memref<512x8xf32, #tpu.memory_space<vmem>>, vector<512x8xf32>
    %cst_53 = arith.constant dense<0.000000e+00> : vector<64x8xf32>
    %78 = tpu.matmul %76, %77, %cst_53 {dimension_numbers = #tpu.dot_dimension_numbers<[1], [0], [0], [1], [0, 0, 1, 1], [], []>} : vector<64x512xf32>, vector<512x8xf32>, vector<64x8xf32> -> vector<64x8xf32>
    %cst_54 = arith.constant -1.000000e+02 : f32
    %79 = vector.broadcast %cst_54 : f32 to vector<64x8xf32>
    %80 = arith.mulf %79, %78 : vector<64x8xf32>
    %81 = arith.addf %4, %80 : vector<64x8xf32>
    %c0_55 = arith.constant 0 : index
    %c0_56 = arith.constant 0 : index
    %82 = vector.load %arg6[%c0_55, %c0_56] : memref<64x8xf32, #tpu.memory_space<vmem>>, vector<64x8xf32>
    tpu.vector_store %arg6[%c0_55, %c0_56], %81 {strides = array<i32>} : memref<64x8xf32, #tpu.memory_space<vmem>>, vector<64x8xf32>,
    return
  }
}

</mosaic_0001>

<llo_original>
// kernel: tpu_custom_call.1
$region0: #{tpu_custom_call.1}
  #allocation0 [shape = 'u32[]', space=smem, size = 0x4, offset = 0x4, fixed_abs, tag = 'smem constant byte address 0x4 - core index']
  #allocation1 [shape = 'u32[144,128]{1,0:T(1,128)}', space=vmem, size = 0x12000, scoped, tag = 'internal scratch']
  %s0 = inlined_call_operand.vmem [shape: f32[64,8], index: 0, kind: input, shape index: {}]
  %s1 = inlined_call_operand.vmem [shape: f32[64,8], index: 1, kind: input, shape index: {}]
  %s2 = inlined_call_operand.hbm [shape: f32[512,512], index: 2, kind: input, shape index: {}]
  %s3 = inlined_call_operand.vmem [shape: f32[8,512], index: 3, kind: input, shape index: {}]
  %s4 = inlined_call_operand.vmem [shape: f32[512,8], index: 4, kind: input, shape index: {}]
  %s5 = inlined_call_operand.vmem [shape: f32[64,512], index: 5, kind: input, shape index: {}]
  %s6 = inlined_call_operand.vmem [shape: f32[64,8], index: 6, kind: output, shape index: {}]
  %s7 = sld [smem:[#allocation0]]
  $region38: #{tpu_custom_call.1} parent=0
    _
  %s9 = ssub.s32 1, %s7
  %s10 = scalar_select 0, %s9, %s7
  $region1: #{tpu_custom_call.1} parent=0
    #allocation2 [shape = 'u8[1048576]{0}', space=vmem, size = 0x100000, scoped, tag = 'input window, operand 2, single buffered']
    #allocation3 [shape = 's32[1]{0}', space=sflag, size = 0x4, scoped, tag = 'scoped memory for tpu_custom_call.1']
    %11 = vsyncpa [#allocation3], 0
    // Predicated region
    $region2: #{tpu_custom_call.1} parent=1 // pred_check
      _
    $region3: #{tpu_custom_call.1} parent=1 // pred_check_branch
      %13 = sbr.rel (0) target = $region5
    $region4: #{tpu_custom_call.1} parent=1 // pred_region
      _
    $region5: #{tpu_custom_call.1} parent=1 // pred_fallthru
      _
    // Predicated region
    $region6: #{tpu_custom_call.1} parent=1 // pred_check
      _
    $region7: #{tpu_custom_call.1} parent=1 // pred_check_branch
      %15 = sbr.rel (0) target = $region9
    $region8: #{tpu_custom_call.1} parent=1 // pred_region
      _
    $region9: #{tpu_custom_call.1} parent=1 // pred_fallthru
      _
    // Predicated region
    $region10: #{tpu_custom_call.1} parent=1 // pred_check
      _
    $region11: #{tpu_custom_call.1} parent=1 // pred_check_branch
      %17 = sbr.rel (0) target = $region13
    $region12: #{tpu_custom_call.1} parent=1 // pred_region
      %s19 = ssub.s32 32768, 32768
      %20 = vsyncadd [#allocation3], %s19
      %s21 = sshll.u32 [#allocation2], 4
      %s22 = int_to_ptr.vmem [resolvable:$true] %s21
      %27 = dma.hbm_to_vmem [thread:$0]  %s2, 32768, %s22, [#allocation3], 512, 512, 32
    $region13: #{tpu_custom_call.1} parent=1 // pred_fallthru
      _
    // Predicated region
    $region14: #{tpu_custom_call.1} parent=1 // pred_check
      _
    $region15: #{tpu_custom_call.1} parent=1 // pred_check_branch
      %29 = sbr.rel (0) target = $region17
    $region16: #{tpu_custom_call.1} parent=1 // pred_region
      _
    $region17: #{tpu_custom_call.1} parent=1 // pred_fallthru
      _
    // Predicated region
    $region18: #{tpu_custom_call.1} parent=1 // pred_check
      _
    $region19: #{tpu_custom_call.1} parent=1 // pred_check_branch
      %31 = sbr.rel (0) target = $region21
    $region20: #{tpu_custom_call.1} parent=1 // pred_region
      _
    $region21: #{tpu_custom_call.1} parent=1 // pred_fallthru
      _
    // Predicated region
    $region22: #{tpu_custom_call.1} parent=1 // pred_check
      _
    $region23: #{tpu_custom_call.1} parent=1 // pred_check_branch
      %33 = sbr.rel (0) target = $region25
    $region24: #{tpu_custom_call.1} parent=1 // pred_region
      _
    $region25: #{tpu_custom_call.1} parent=1 // pred_fallthru
      _
    // Predicated region
    $region26: #{tpu_custom_call.1} parent=1 // pred_check
      _
    $region27: #{tpu_custom_call.1} parent=1 // pred_check_branch
      %35 = sbr.rel (0) target = $region29
    $region28: #{tpu_custom_call.1} parent=1 // pred_region
      %36 = dma.done [#allocation3], 32768
    $region29: #{tpu_custom_call.1} parent=1 // pred_fallthru
      _
    %v37 = vld [vmem:[%s0] sm:$0xff]
    %v38 = vld [vmem:[%s0 + $0x8] sm:$0xff]
    %v39 = vld [vmem:[%s0 + $0x10] sm:$0xff]
    %v40 = vld [vmem:[%s0 + $0x18] sm:$0xff]
    %v41 = vld [vmem:[%s0 + $0x20] sm:$0xff]
    %v42 = vld [vmem:[%s0 + $0x28] sm:$0xff]
    %v43 = vld [vmem:[%s0 + $0x30] sm:$0xff]
    %v44 = vld [vmem:[%s0 + $0x38] sm:$0xff]
    %v45 = vld [vmem:[%s1] sm:$0xff]
    %v46 = vld [vmem:[%s1 + $0x8] sm:$0xff]
    %v47 = vld [vmem:[%s1 + $0x10] sm:$0xff]
    %v48 = vld [vmem:[%s1 + $0x18] sm:$0xff]
    %v49 = vld [vmem:[%s1 + $0x20] sm:$0xff]
    %v50 = vld [vmem:[%s1 + $0x28] sm:$0xff]
    %v51 = vld [vmem:[%s1 + $0x30] sm:$0xff]
    %v52 = vld [vmem:[%s1 + $0x38] sm:$0xff]
    %v53 = vmul.f32 %v45, 1e+10
    %v54 = vmul.f32 %v46, 1e+10
    %v55 = vmul.f32 %v47, 1e+10
    %v56 = vmul.f32 %v48, 1e+10
    %v57 = vmul.f32 %v49, 1e+10
    %v58 = vmul.f32 %v50, 1e+10
    %v59 = vmul.f32 %v51, 1e+10
    %v60 = vmul.f32 %v52, 1e+10
    %v61 = vsub.f32 %v37, %v53
    %v62 = vsub.f32 %v38, %v54
    %v63 = vsub.f32 %v39, %v55
    %v64 = vsub.f32 %v40, %v56
    %v65 = vsub.f32 %v41, %v57
    %v66 = vsub.f32 %v42, %v58
    %v67 = vsub.f32 %v43, %v59
    %v68 = vsub.f32 %v44, %v60
    %v69 = vsub.f32 0.0, %v53
    %v70 = vsub.f32 0.0, %v54
    %v71 = vsub.f32 0.0, %v55
    %v72 = vsub.f32 0.0, %v56
    %v73 = vsub.f32 0.0, %v57
    %v74 = vsub.f32 0.0, %v58
    %v75 = vsub.f32 0.0, %v59
    %v76 = vsub.f32 0.0, %v60
    %vm77 = vcmask 64512
    %v78 = vsel %vm77, %v69, -inf
    %79 = vmax.xlane.f32.xlu0 %v78
    %v80 = vpop.xlane.xlu0 %79
    %v81 = vsel %vm77, %v70, -inf
    %82 = vmax.xlane.f32.xlu0 %v81
    %v83 = vpop.xlane.xlu0 %82
    %v84 = vsel %vm77, %v71, -inf
    %85 = vmax.xlane.f32.xlu0 %v84
    %v86 = vpop.xlane.xlu0 %85
    %v87 = vsel %vm77, %v72, -inf
    %88 = vmax.xlane.f32.xlu0 %v87
    %v89 = vpop.xlane.xlu0 %88
    %v90 = vsel %vm77, %v73, -inf
    %91 = vmax.xlane.f32.xlu0 %v90
    %v92 = vpop.xlane.xlu0 %91
    %v93 = vsel %vm77, %v74, -inf
    %94 = vmax.xlane.f32.xlu0 %v93
    %v95 = vpop.xlane.xlu0 %94
    %v96 = vsel %vm77, %v75, -inf
    %97 = vmax.xlane.f32.xlu0 %v96
    %v98 = vpop.xlane.xlu0 %97
    %v99 = vsel %vm77, %v76, -inf
    %100 = vmax.xlane.f32.xlu0 %v99
    %v101 = vpop.xlane.xlu0 %100
    %v102 = vsub.f32 %v69, %v80
    %v103 = vsub.f32 %v70, %v83
    %v104 = vsub.f32 %v71, %v86
    %v105 = vsub.f32 %v72, %v89
    %v106 = vsub.f32 %v73, %v92
    %v107 = vsub.f32 %v74, %v95
    %v108 = vsub.f32 %v75, %v98
    %v109 = vsub.f32 %v76, %v101
    %v110 = vmul.f32 %v102, 1.442695
    %v111 = vpow.pop %v110
    %v112 = vmul.f32 %v103, 1.442695
    %v113 = vpow.pop %v112
    %v114 = vmul.f32 %v104, 1.442695
    %v115 = vpow.pop %v114
    %v116 = vmul.f32 %v105, 1.442695
    %v117 = vpow.pop %v116
    %v118 = vmul.f32 %v106, 1.442695
    %v119 = vpow.pop %v118
    %v120 = vmul.f32 %v107, 1.442695
    %v121 = vpow.pop %v120
    %v122 = vmul.f32 %v108, 1.442695
    %v123 = vpow.pop %v122
    %v124 = vmul.f32 %v109, 1.442695
    %v125 = vpow.pop %v124
    %v126 = vsel %vm77, %v111, 0.0
    %127 = vadd.xlane.f32.xlu0 %v126
    %v128 = vpop.xlane.xlu0 %127
    %v129 = vsel %vm77, %v113, 0.0
    %130 = vadd.xlane.f32.xlu0 %v129
    %v131 = vpop.xlane.xlu0 %130
    %v132 = vsel %vm77, %v115, 0.0
    %133 = vadd.xlane.f32.xlu0 %v132
    %v134 = vpop.xlane.xlu0 %133
    %v135 = vsel %vm77, %v117, 0.0
    %136 = vadd.xlane.f32.xlu0 %v135
    %v137 = vpop.xlane.xlu0 %136
    %v138 = vsel %vm77, %v119, 0.0
    %139 = vadd.xlane.f32.xlu0 %v138
    %v140 = vpop.xlane.xlu0 %139
    %v141 = vsel %vm77, %v121, 0.0
    %142 = vadd.xlane.f32.xlu0 %v141
    %v143 = vpop.xlane.xlu0 %142
    %v144 = vsel %vm77, %v123, 0.0
    %145 = vadd.xlane.f32.xlu0 %v144
    %v146 = vpop.xlane.xlu0 %145
    %v147 = vsel %vm77, %v125, 0.0
    %148 = vadd.xlane.f32.xlu0 %v147
    %v149 = vpop.xlane.xlu0 %148
    %v150 = vrcp.pop %v128
    %v151 = vmul.f32 %v111, %v150
    %v152 = vrcp.pop %v131
    %v153 = vmul.f32 %v113, %v152
    %v154 = vrcp.pop %v134
    %v155 = vmul.f32 %v115, %v154
    %v156 = vrcp.pop %v137
    %v157 = vmul.f32 %v117, %v156
    %v158 = vrcp.pop %v140
    %v159 = vmul.f32 %v119, %v158
    %v160 = vrcp.pop %v143
    %v161 = vmul.f32 %v121, %v160
    %v162 = vrcp.pop %v146
    %v163 = vmul.f32 %v123, %v162
    %v164 = vrcp.pop %v149
    %v165 = vmul.f32 %v125, %v164
    %v166 = vld [vmem:[%s3] sm:$0xff]
    %v167 = vld [vmem:[%s3 + $0x8] sm:$0xff]
    %v168 = vld [vmem:[%s3 + $0x10] sm:$0xff]
    %v169 = vld [vmem:[%s3 + $0x18] sm:$0xff]
    %v171 = vsel %vm77, %v151, 0
    %v174 = vsel %vm77, %v153, 0
    %v177 = vsel %vm77, %v155, 0
    %v180 = vsel %vm77, %v157, 0
    %v183 = vsel %vm77, %v159, 0
    %v186 = vsel %vm77, %v161, 0
    %v189 = vsel %vm77, %v163, 0
    %v192 = vsel %vm77, %v165, 0
    %194 = vmatprep.subr.mxu0 %v167
    %195 = vmatpush1.msra.mxu0 %v166
    %196 = vmatprep.subr.mxu0 0.0
    %197 = vmatpush1.msra.mxu0 0.0
    %198 = vmatprep.subr.mxu0 0.0
    %199 = vmatpush1.msra.mxu0 0.0
    %200 = vmatprep.subr.mxu0 0.0
    %201 = vmatpush1.msra.mxu0 0.0
    %202 = vmatprep.subr.mxu0 0.0
    %203 = vmatpush1.msra.mxu0 0.0
    %204 = vmatprep.subr.mxu0 0.0
    %205 = vmatpush1.msra.mxu0 0.0
    %206 = vmatprep.subr.mxu0 0.0
    %207 = vmatpush1.msra.mxu0 0.0
    %208 = vmatprep.subr.mxu0 0.0
    %209 = vmatpush1.msra.mxu0 0.0
    %210 = vmatprep.subr.mxu0 0.0
    %211 = vmatpush1.msra.mxu0 0.0
    %212 = vmatprep.subr.mxu0 0.0
    %213 = vmatpush1.msra.mxu0 0.0
    %214 = vmatprep.subr.mxu0 0.0
    %215 = vmatpush1.msra.mxu0 0.0
    %216 = vmatprep.subr.mxu0 0.0
    %217 = vmatpush1.msra.mxu0 0.0
    %218 = vmatprep.subr.mxu0 0.0
    %219 = vmatpush1.msra.mxu0 0.0
    %220 = vmatprep.subr.mxu0 0.0
    %221 = vmatpush1.msra.mxu0 0.0
    %222 = vmatprep.subr.mxu0 0.0
    %223 = vmatpush1.msra.mxu0 0.0
    %224 = vmatprep.subr.mxu0 0.0
    %225 = vmatpush1.msra.mxu0 0.0
    %226 = vmatprep.subr.mxu0 0.0
    %227 = vmatpush1.msra.mxu0 0.0
    %228 = vmatprep.subr.mxu0 0.0
    %229 = vmatpush1.msra.mxu0 0.0
    %230 = vmatprep.subr.mxu0 0.0
    %231 = vmatpush1.msra.mxu0 0.0
    %232 = vmatprep.subr.mxu0 0.0
    %233 = vmatpush1.msra.mxu0 0.0
    %234 = vmatprep.subr.mxu0 0.0
    %235 = vmatpush1.msra.mxu0 0.0
    %236 = vmatprep.subr.mxu0 0.0
    %237 = vmatpush1.msra.mxu0 0.0
    %238 = vmatprep.subr.mxu0 0.0
    %239 = vmatpush1.msra.mxu0 0.0
    %240 = vmatprep.subr.mxu0 0.0
    %241 = vmatpush1.msra.mxu0 0.0
    %242 = vmatprep.subr.mxu0 0.0
    %243 = vmatpush1.msra.mxu0 0.0
    %244 = vmatprep.subr.mxu0 0.0
    %245 = vmatpush1.msra.mxu0 0.0
    %246 = vmatprep.subr.mxu0 0.0
    %247 = vmatpush1.msra.mxu0 0.0
    %248 = vmatprep.subr.mxu0 0.0
    %249 = vmatpush1.msra.mxu0 0.0
    %250 = vmatprep.subr.mxu0 0.0
    %251 = vmatpush1.msra.mxu0 0.0
    %252 = vmatprep.subr.mxu0 0.0
    %253 = vmatpush1.msra.mxu0 0.0
    %254 = vmatprep.subr.mxu0 0.0
    %255 = vmatpush1.msra.mxu0 0.0
    %256 = vmatprep.subr.mxu0 0.0
    %257 = vmatpush1.msra.mxu0 0.0
    %258 = vmatprep.mubr.f32.mxu0 0.0
    %259 = vmatmul.mubr.f32.gmra.mrb[0].mxu0 %v171
    %v260 = vpop.f32.mrb[0].mxu0
    %v261 = vadd.f32 0.0, %v260
    %v262 = vpop.f32.mrb[0].mxu0
    %v263 = vadd.f32 0.0, %v262
    %264 = vmatprep.mubr.f32.mxu0 0.0
    %265 = vmatmul.mubr.f32.gmra.mrb[0].mxu0 %v174
    %v266 = vpop.f32.mrb[0].mxu0
    %v267 = vadd.f32 0.0, %v266
    %v268 = vpop.f32.mrb[0].mxu0
    %v269 = vadd.f32 0.0, %v268
    %270 = vmatprep.mubr.f32.mxu0 0.0
    %271 = vmatmul.mubr.f32.gmra.mrb[0].mxu0 %v177
    %v272 = vpop.f32.mrb[0].mxu0
    %v273 = vadd.f32 0.0, %v272
    %v274 = vpop.f32.mrb[0].mxu0
    %v275 = vadd.f32 0.0, %v274
    %276 = vmatprep.mubr.f32.mxu0 0.0
    %277 = vmatmul.mubr.f32.gmra.mrb[0].mxu0 %v180
    %v278 = vpop.f32.mrb[0].mxu0
    %v279 = vadd.f32 0.0, %v278
    %v280 = vpop.f32.mrb[0].mxu0
    %v281 = vadd.f32 0.0, %v280
    %282 = vmatprep.mubr.f32.mxu0 0.0
    %283 = vmatmul.mubr.f32.gmra.mrb[0].mxu0 %v183
    %v284 = vpop.f32.mrb[0].mxu0
    %v285 = vadd.f32 0.0, %v284
    %v286 = vpop.f32.mrb[0].mxu0
    %v287 = vadd.f32 0.0, %v286
    %288 = vmatprep.mubr.f32.mxu0 0.0
    %289 = vmatmul.mubr.f32.gmra.mrb[0].mxu0 %v186
    %v290 = vpop.f32.mrb[0].mxu0
    %v291 = vadd.f32 0.0, %v290
    %v292 = vpop.f32.mrb[0].mxu0
    %v293 = vadd.f32 0.0, %v292
    %294 = vmatprep.mubr.f32.mxu0 0.0
    %295 = vmatmul.mubr.f32.gmra.mrb[0].mxu0 %v189
    %v296 = vpop.f32.mrb[0].mxu0
    %v297 = vadd.f32 0.0, %v296
    %v298 = vpop.f32.mrb[0].mxu0
    %v299 = vadd.f32 0.0, %v298
    %300 = vmatprep.mubr.f32.mxu0 0.0
    %301 = vmatmul.mubr.f32.gmra.mrb[0].mxu0 %v192
    %v302 = vpop.f32.mrb[0].mxu0
    %v303 = vadd.f32 0.0, %v302
    %v304 = vpop.f32.mrb[0].mxu0
    %v305 = vadd.f32 0.0, %v304
    %306 = vdwg.mxu0
    %307 = vmatprep.subr.mxu0 %v169
    %308 = vmatpush1.msra.mxu0 %v168
    %309 = vmatprep.subr.mxu0 0.0
    %310 = vmatpush1.msra.mxu0 0.0
    %311 = vmatprep.subr.mxu0 0.0
    %312 = vmatpush1.msra.mxu0 0.0
    %313 = vmatprep.subr.mxu0 0.0
    %314 = vmatpush1.msra.mxu0 0.0
    %315 = vmatprep.subr.mxu0 0.0
    %316 = vmatpush1.msra.mxu0 0.0
    %317 = vmatprep.subr.mxu0 0.0
    %318 = vmatpush1.msra.mxu0 0.0
    %319 = vmatprep.subr.mxu0 0.0
    %320 = vmatpush1.msra.mxu0 0.0
    %321 = vmatprep.subr.mxu0 0.0
    %322 = vmatpush1.msra.mxu0 0.0
    %323 = vmatprep.subr.mxu0 0.0
    %324 = vmatpush1.msra.mxu0 0.0
    %325 = vmatprep.subr.mxu0 0.0
    %326 = vmatpush1.msra.mxu0 0.0
    %327 = vmatprep.subr.mxu0 0.0
    %328 = vmatpush1.msra.mxu0 0.0
    %329 = vmatprep.subr.mxu0 0.0
    %330 = vmatpush1.msra.mxu0 0.0
    %331 = vmatprep.subr.mxu0 0.0
    %332 = vmatpush1.msra.mxu0 0.0
    %333 = vmatprep.subr.mxu0 0.0
    %334 = vmatpush1.msra.mxu0 0.0
    %335 = vmatprep.subr.mxu0 0.0
    %336 = vmatpush1.msra.mxu0 0.0
    %337 = vmatprep.subr.mxu0 0.0
    %338 = vmatpush1.msra.mxu0 0.0
    %339 = vmatprep.subr.mxu0 0.0
    %340 = vmatpush1.msra.mxu0 0.0
    %341 = vmatprep.subr.mxu0 0.0
    %342 = vmatpush1.msra.mxu0 0.0
    %343 = vmatprep.subr.mxu0 0.0
    %344 = vmatpush1.msra.mxu0 0.0
    %345 = vmatprep.subr.mxu0 0.0
    %346 = vmatpush1.msra.mxu0 0.0
    %347 = vmatprep.subr.mxu0 0.0
    %348 = vmatpush1.msra.mxu0 0.0
    %349 = vmatprep.subr.mxu0 0.0
    %350 = vmatpush1.msra.mxu0 0.0
    %351 = vmatprep.subr.mxu0 0.0
    %352 = vmatpush1.msra.mxu0 0.0
    %353 = vmatprep.subr.mxu0 0.0
    %354 = vmatpush1.msra.mxu0 0.0
    %355 = vmatprep.subr.mxu0 0.0
    %356 = vmatpush1.msra.mxu0 0.0
    %357 = vmatprep.subr.mxu0 0.0
    %358 = vmatpush1.msra.mxu0 0.0
    %359 = vmatprep.subr.mxu0 0.0
    %360 = vmatpush1.msra.mxu0 0.0
    %361 = vmatprep.subr.mxu0 0.0
    %362 = vmatpush1.msra.mxu0 0.0
    %363 = vmatprep.subr.mxu0 0.0
    %364 = vmatpush1.msra.mxu0 0.0
    %365 = vmatprep.subr.mxu0 0.0
    %366 = vmatpush1.msra.mxu0 0.0
    %367 = vmatprep.subr.mxu0 0.0
    %368 = vmatpush1.msra.mxu0 0.0
    %369 = vmatprep.subr.mxu0 0.0
    %370 = vmatpush1.msra.mxu0 0.0
    %371 = vmatprep.mubr.f32.mxu0 0.0
    %372 = vmatmul.mubr.f32.gmra.mrb[0].mxu0 %v171
    %v373 = vpop.f32.mrb[0].mxu0
    %v374 = vadd.f32 0.0, %v373
    %v375 = vpop.f32.mrb[0].mxu0
    %v376 = vadd.f32 0.0, %v375
    %377 = vmatprep.mubr.f32.mxu0 0.0
    %378 = vmatmul.mubr.f32.gmra.mrb[0].mxu0 %v174
    %v379 = vpop.f32.mrb[0].mxu0
    %v380 = vadd.f32 0.0, %v379
    %v381 = vpop.f32.mrb[0].mxu0
    %v382 = vadd.f32 0.0, %v381
    %383 = vmatprep.mubr.f32.mxu0 0.0
    %384 = vmatmul.mubr.f32.gmra.mrb[0].mxu0 %v177
    %v385 = vpop.f32.mrb[0].mxu0
    %v386 = vadd.f32 0.0, %v385
    %v387 = vpop.f32.mrb[0].mxu0
    %v388 = vadd.f32 0.0, %v387
    %389 = vmatprep.mubr.f32.mxu0 0.0
    %390 = vmatmul.mubr.f32.gmra.mrb[0].mxu0 %v180
    %v391 = vpop.f32.mrb[0].mxu0
    %v392 = vadd.f32 0.0, %v391
    %v393 = vpop.f32.mrb[0].mxu0
    %v394 = vadd.f32 0.0, %v393
    %395 = vmatprep.mubr.f32.mxu0 0.0
    %396 = vmatmul.mubr.f32.gmra.mrb[0].mxu0 %v183
    %v397 = vpop.f32.mrb[0].mxu0
    %v398 = vadd.f32 0.0, %v397
    %v399 = vpop.f32.mrb[0].mxu0
    %v400 = vadd.f32 0.0, %v399
    %401 = vmatprep.mubr.f32.mxu0 0.0
    %402 = vmatmul.mubr.f32.gmra.mrb[0].mxu0 %v186
    %v403 = vpop.f32.mrb[0].mxu0
    %v404 = vadd.f32 0.0, %v403
    %v405 = vpop.f32.mrb[0].mxu0
    %v406 = vadd.f32 0.0, %v405
    %407 = vmatprep.mubr.f32.mxu0 0.0
    %408 = vmatmul.mubr.f32.gmra.mrb[0].mxu0 %v189
    %v409 = vpop.f32.mrb[0].mxu0
    %v410 = vadd.f32 0.0, %v409
    %v411 = vpop.f32.mrb[0].mxu0
    %v412 = vadd.f32 0.0, %v411
    %413 = vmatprep.mubr.f32.mxu0 0.0
    %414 = vmatmul.mubr.f32.gmra.mrb[0].mxu0 %v192
    %v415 = vpop.f32.mrb[0].mxu0
    %v416 = vadd.f32 0.0, %v415
    %v417 = vpop.f32.mrb[0].mxu0
    %v418 = vadd.f32 0.0, %v417
    %419 = vdwg.mxu0
    %v420 = vld [vmem:[%s5] sm:$0xff]
    %v421 = vld [vmem:[%s5 + $0x8] sm:$0xff]
    %v422 = vld [vmem:[%s5 + $0x10] sm:$0xff]
    %v423 = vld [vmem:[%s5 + $0x18] sm:$0xff]
    %v424 = vld [vmem:[%s5 + $0x20] sm:$0xff]
    %v425 = vld [vmem:[%s5 + $0x28] sm:$0xff]
    %v426 = vld [vmem:[%s5 + $0x30] sm:$0xff]
    %v427 = vld [vmem:[%s5 + $0x38] sm:$0xff]
    %v428 = vld [vmem:[%s5 + $0x40] sm:$0xff]
    %v429 = vld [vmem:[%s5 + $0x48] sm:$0xff]
    %v430 = vld [vmem:[%s5 + $0x50] sm:$0xff]
    %v431 = vld [vmem:[%s5 + $0x58] sm:$0xff]
    %v432 = vld [vmem:[%s5 + $0x60] sm:$0xff]
    %v433 = vld [vmem:[%s5 + $0x68] sm:$0xff]
    %v434 = vld [vmem:[%s5 + $0x70] sm:$0xff]
    %v435 = vld [vmem:[%s5 + $0x78] sm:$0xff]
    %v436 = vld [vmem:[%s5 + $0x80] sm:$0xff]
    %v437 = vld [vmem:[%s5 + $0x88] sm:$0xff]
    %v438 = vld [vmem:[%s5 + $0x90] sm:$0xff]
    %v439 = vld [vmem:[%s5 + $0x98] sm:$0xff]
    %v440 = vld [vmem:[%s5 + $0xa0] sm:$0xff]
    %v441 = vld [vmem:[%s5 + $0xa8] sm:$0xff]
    %v442 = vld [vmem:[%s5 + $0xb0] sm:$0xff]
    %v443 = vld [vmem:[%s5 + $0xb8] sm:$0xff]
    %v444 = vld [vmem:[%s5 + $0xc0] sm:$0xff]
    %v445 = vld [vmem:[%s5 + $0xc8] sm:$0xff]
    %v446 = vld [vmem:[%s5 + $0xd0] sm:$0xff]
    %v447 = vld [vmem:[%s5 + $0xd8] sm:$0xff]
    %v448 = vld [vmem:[%s5 + $0xe0] sm:$0xff]
    %v449 = vld [vmem:[%s5 + $0xe8] sm:$0xff]
    %v450 = vld [vmem:[%s5 + $0xf0] sm:$0xff]
    %v451 = vld [vmem:[%s5 + $0xf8] sm:$0xff]
    %v452 = vmul.f32 %v261, %v420
    %v453 = vmul.f32 %v263, %v421
    %v454 = vmul.f32 %v374, %v422
    %v455 = vmul.f32 %v376, %v423
    %v456 = vmul.f32 %v267, %v424
    %v457 = vmul.f32 %v269, %v425
    %v458 = vmul.f32 %v380, %v426
    %v459 = vmul.f32 %v382, %v427
    %v460 = vmul.f32 %v273, %v428
    %v461 = vmul.f32 %v275, %v429
    %v462 = vmul.f32 %v386, %v430
    %v463 = vmul.f32 %v388, %v431
    %v464 = vmul.f32 %v279, %v432
    %v465 = vmul.f32 %v281, %v433
    %v466 = vmul.f32 %v392, %v434
    %v467 = vmul.f32 %v394, %v435
    %v468 = vmul.f32 %v285, %v436
    %v469 = vmul.f32 %v287, %v437
    %v470 = vmul.f32 %v398, %v438
    %v471 = vmul.f32 %v400, %v439
    %v472 = vmul.f32 %v291, %v440
    %v473 = vmul.f32 %v293, %v441
    %v474 = vmul.f32 %v404, %v442
    %v475 = vmul.f32 %v406, %v443
    %v476 = vmul.f32 %v297, %v444
    %v477 = vmul.f32 %v299, %v445
    %v478 = vmul.f32 %v410, %v446
    %v479 = vmul.f32 %v412, %v447
    %v480 = vmul.f32 %v303, %v448
    %v481 = vmul.f32 %v305, %v449
    %v482 = vmul.f32 %v416, %v450
    %v483 = vmul.f32 %v418, %v451
    %v484 = vadd.f32 %v452, %v456
    %v485 = vadd.f32 %v484, %v460
    %v486 = vadd.f32 %v485, %v464
    %v487 = vadd.f32 %v486, %v468
    %v488 = vadd.f32 %v487, %v472
    %v489 = vadd.f32 %v488, %v476
    %v490 = vadd.f32 %v489, %v480
    %v491 = vrot.slane %v490, 4
    %v492 = vadd.f32 %v490, %v491
    %v493 = vrot.slane %v492, 2
    %v494 = vadd.f32 %v492, %v493
    %v495 = vrot.slane %v494, 1
    %v496 = vadd.f32 %v494, %v495
    %v497 = vadd.f32 %v453, %v457
    %v498 = vadd.f32 %v497, %v461
    %v499 = vadd.f32 %v498, %v465
    %v500 = vadd.f32 %v499, %v469
    %v501 = vadd.f32 %v500, %v473
    %v502 = vadd.f32 %v501, %v477
    %v503 = vadd.f32 %v502, %v481
    %v504 = vrot.slane %v503, 4
    %v505 = vadd.f32 %v503, %v504
    %v506 = vrot.slane %v505, 2
    %v507 = vadd.f32 %v505, %v506
    %v508 = vrot.slane %v507, 1
    %v509 = vadd.f32 %v507, %v508
    %v510 = vadd.f32 %v454, %v458
    %v511 = vadd.f32 %v510, %v462
    %v512 = vadd.f32 %v511, %v466
    %v513 = vadd.f32 %v512, %v470
    %v514 = vadd.f32 %v513, %v474
    %v515 = vadd.f32 %v514, %v478
    %v516 = vadd.f32 %v515, %v482
    %v517 = vrot.slane %v516, 4
    %v518 = vadd.f32 %v516, %v517
    %v519 = vrot.slane %v518, 2
    %v520 = vadd.f32 %v518, %v519
    %v521 = vrot.slane %v520, 1
    %v522 = vadd.f32 %v520, %v521
    %v523 = vadd.f32 %v455, %v459
    %v524 = vadd.f32 %v523, %v463
    %v525 = vadd.f32 %v524, %v467
    %v526 = vadd.f32 %v525, %v471
    %v527 = vadd.f32 %v526, %v475
    %v528 = vadd.f32 %v527, %v479
    %v529 = vadd.f32 %v528, %v483
    %v530 = vrot.slane %v529, 4
    %v531 = vadd.f32 %v529, %v530
    %v532 = vrot.slane %v531, 2
    %v533 = vadd.f32 %v531, %v532
    %v534 = vrot.slane %v533, 1
    %v535 = vadd.f32 %v533, %v534
    %v536 = vld [vmem:[#allocation2] sm:$0xff]
    %v537 = vld [vmem:[#allocation2 + $0x8] sm:$0xff]
    %v538 = vld [vmem:[#allocation2 + $0x10] sm:$0xff]
    %v539 = vld [vmem:[#allocation2 + $0x18] sm:$0xff]
    %v540 = vld [vmem:[#allocation2 + $0x20] sm:$0xff]
    %v541 = vld [vmem:[#allocation2 + $0x28] sm:$0xff]
    %v542 = vld [vmem:[#allocation2 + $0x30] sm:$0xff]
    %v543 = vld [vmem:[#allocation2 + $0x38] sm:$0xff]
    %v544 = vld [vmem:[#allocation2 + $0x40] sm:$0xff]
    %v545 = vld [vmem:[#allocation2 + $0x48] sm:$0xff]
    %v546 = vld [vmem:[#allocation2 + $0x50] sm:$0xff]
    %v547 = vld [vmem:[#allocation2 + $0x58] sm:$0xff]
    %v548 = vld [vmem:[#allocation2 + $0x60] sm:$0xff]
    %v549 = vld [vmem:[#allocation2 + $0x68] sm:$0xff]
    %v550 = vld [vmem:[#allocation2 + $0x70] sm:$0xff]
    %v551 = vld [vmem:[#allocation2 + $0x78] sm:$0xff]
    %v552 = vld [vmem:[#allocation2 + $0x80] sm:$0xff]
    %v553 = vld [vmem:[#allocation2 + $0x88] sm:$0xff]
    %v554 = vld [vmem:[#allocation2 + $0x90] sm:$0xff]
    %v555 = vld [vmem:[#allocation2 + $0x98] sm:$0xff]
    %v556 = vld [vmem:[#allocation2 + $0xa0] sm:$0xff]
    %v557 = vld [vmem:[#allocation2 + $0xa8] sm:$0xff]
    %v558 = vld [vmem:[#allocation2 + $0xb0] sm:$0xff]
    %v559 = vld [vmem:[#allocation2 + $0xb8] sm:$0xff]
    %v560 = vld [vmem:[#allocation2 + $0xc0] sm:$0xff]
    %v561 = vld [vmem:[#allocation2 + $0xc8] sm:$0xff]
    %v562 = vld [vmem:[#allocation2 + $0xd0] sm:$0xff]
    %v563 = vld [vmem:[#allocation2 + $0xd8] sm:$0xff]
    %v564 = vld [vmem:[#allocation2 + $0xe0] sm:$0xff]
    %v565 = vld [vmem:[#allocation2 + $0xe8] sm:$0xff]
    %v566 = vld [vmem:[#allocation2 + $0xf0] sm:$0xff]
    %v567 = vld [vmem:[#allocation2 + $0xf8] sm:$0xff]
    %v568 = vld [vmem:[#allocation2 + $0x100] sm:$0xff]
    %v569 = vld [vmem:[#allocation2 + $0x108] sm:$0xff]
    %v570 = vld [vmem:[#allocation2 + $0x110] sm:$0xff]
    %v571 = vld [vmem:[#allocation2 + $0x118] sm:$0xff]
    %v572 = vld [vmem:[#allocation2 + $0x120] sm:$0xff]
    %v573 = vld [vmem:[#allocation2 + $0x128] sm:$0xff]
    %v574 = vld [vmem:[#allocation2 + $0x130] sm:$0xff]
    %v575 = vld [vmem:[#allocation2 + $0x138] sm:$0xff]
    %v576 = vld [vmem:[#allocation2 + $0x140] sm:$0xff]
    %v577 = vld [vmem:[#allocation2 + $0x148] sm:$0xff]
    %v578 = vld [vmem:[#allocation2 + $0x150] sm:$0xff]
    %v579 = vld [vmem:[#allocation2 + $0x158] sm:$0xff]
    %v580 = vld [vmem:[#allocation2 + $0x160] sm:$0xff]
    %v581 = vld [vmem:[#allocation2 + $0x168] sm:$0xff]
    %v582 = vld [vmem:[#allocation2 + $0x170] sm:$0xff]
    %v583 = vld [vmem:[#allocation2 + $0x178] sm:$0xff]
    %v584 = vld [vmem:[#allocation2 + $0x180] sm:$0xff]
    %v585 = vld [vmem:[#allocation2 + $0x188] sm:$0xff]
    %v586 = vld [vmem:[#allocation2 + $0x190] sm:$0xff]
    %v587 = vld [vmem:[#allocation2 + $0x198] sm:$0xff]
    %v588 = vld [vmem:[#allocation2 + $0x1a0] sm:$0xff]
    %v589 = vld [vmem:[#allocation2 + $0x1a8] sm:$0xff]
    %v590 = vld [vmem:[#allocation2 + $0x1b0] sm:$0xff]
    %v591 = vld [vmem:[#allocation2 + $0x1b8] sm:$0xff]
    %v592 = vld [vmem:[#allocation2 + $0x1c0] sm:$0xff]
    %v593 = vld [vmem:[#allocation2 + $0x1c8] sm:$0xff]
    %v594 = vld [vmem:[#allocation2 + $0x1d0] sm:$0xff]
    %v595 = vld [vmem:[#allocation2 + $0x1d8] sm:$0xff]
    %v596 = vld [vmem:[#allocation2 + $0x1e0] sm:$0xff]
    %v597 = vld [vmem:[#allocation2 + $0x1e8] sm:$0xff]
    %v598 = vld [vmem:[#allocation2 + $0x1f0] sm:$0xff]
    %v599 = vld [vmem:[#allocation2 + $0x1f8] sm:$0xff]
    %v600 = vld [vmem:[#allocation2 + $0x200] sm:$0xff]
    %v601 = vld [vmem:[#allocation2 + $0x208] sm:$0xff]
    %v602 = vld [vmem:[#allocation2 + $0x210] sm:$0xff]
    %v603 = vld [vmem:[#allocation2 + $0x218] sm:$0xff]
    %v604 = vld [vmem:[#allocation2 + $0x220] sm:$0xff]
    %v605 = vld [vmem:[#allocation2 + $0x228] sm:$0xff]
    %v606 = vld [vmem:[#allocation2 + $0x230] sm:$0xff]
    %v607 = vld [vmem:[#allocation2 + $0x238] sm:$0xff]
    %v608 = vld [vmem:[#allocation2 + $0x240] sm:$0xff]
    %v609 = vld [vmem:[#allocation2 + $0x248] sm:$0xff]
    %v610 = vld [vmem:[#allocation2 + $0x250] sm:$0xff]
    %v611 = vld [vmem:[#allocation2 + $0x258] sm:$0xff]
    %v612 = vld [vmem:[#allocation2 + $0x260] sm:$0xff]
    %v613 = vld [vmem:[#allocation2 + $0x268] sm:$0xff]
    %v614 = vld [vmem:[#allocation2 + $0x270] sm:$0xff]
    %v615 = vld [vmem:[#allocation2 + $0x278] sm:$0xff]
    %v616 = vld [vmem:[#allocation2 + $0x280] sm:$0xff]
    %v617 = vld [vmem:[#allocation2 + $0x288] sm:$0xff]
    %v618 = vld [vmem:[#allocation2 + $0x290] sm:$0xff]
    %v619 = vld [vmem:[#allocation2 + $0x298] sm:$0xff]
    %v620 = vld [vmem:[#allocation2 + $0x2a0] sm:$0xff]
    %v621 = vld [vmem:[#allocation2 + $0x2a8] sm:$0xff]
    %v622 = vld [vmem:[#allocation2 + $0x2b0] sm:$0xff]
    %v623 = vld [vmem:[#allocation2 + $0x2b8] sm:$0xff]
    %v624 = vld [vmem:[#allocation2 + $0x2c0] sm:$0xff]
    %v625 = vld [vmem:[#allocation2 + $0x2c8] sm:$0xff]
    %v626 = vld [vmem:[#allocation2 + $0x2d0] sm:$0xff]
    %v627 = vld [vmem:[#allocation2 + $0x2d8] sm:$0xff]
    %v628 = vld [vmem:[#allocation2 + $0x2e0] sm:$0xff]
    %v629 = vld [vmem:[#allocation2 + $0x2e8] sm:$0xff]
    %v630 = vld [vmem:[#allocation2 + $0x2f0] sm:$0xff]
    %v631 = vld [vmem:[#allocation2 + $0x2f8] sm:$0xff]
    %v632 = vld [vmem:[#allocation2 + $0x300] sm:$0xff]
    %v633 = vld [vmem:[#allocation2 + $0x308] sm:$0xff]
    %v634 = vld [vmem:[#allocation2 + $0x310] sm:$0xff]
    %v635 = vld [vmem:[#allocation2 + $0x318] sm:$0xff]
    %v636 = vld [vmem:[#allocation2 + $0x320] sm:$0xff]
    %v637 = vld [vmem:[#allocation2 + $0x328] sm:$0xff]
    %v638 = vld [vmem:[#allocation2 + $0x330] sm:$0xff]
    %v639 = vld [vmem:[#allocation2 + $0x338] sm:$0xff]
    %v640 = vld [vmem:[#allocation2 + $0x340] sm:$0xff]
    %v641 = vld [vmem:[#allocation2 + $0x348] sm:$0xff]
    %v642 = vld [vmem:[#allocation2 + $0x350] sm:$0xff]
    %v643 = vld [vmem:[#allocation2 + $0x358] sm:$0xff]
    %v644 = vld [vmem:[#allocation2 + $0x360] sm:$0xff]
    %v645 = vld [vmem:[#allocation2 + $0x368] sm:$0xff]
    %v646 = vld [vmem:[#allocation2 + $0x370] sm:$0xff]
    %v647 = vld [vmem:[#allocation2 + $0x378] sm:$0xff]
    %v648 = vld [vmem:[#allocation2 + $0x380] sm:$0xff]
    %v649 = vld [vmem:[#allocation2 + $0x388] sm:$0xff]
    %v650 = vld [vmem:[#allocation2 + $0x390] sm:$0xff]
    %v651 = vld [vmem:[#allocation2 + $0x398] sm:$0xff]
    %v652 = vld [vmem:[#allocation2 + $0x3a0] sm:$0xff]
    %v653 = vld [vmem:[#allocation2 + $0x3a8] sm:$0xff]
    %v654 = vld [vmem:[#allocation2 + $0x3b0] sm:$0xff]
    %v655 = vld [vmem:[#allocation2 + $0x3b8] sm:$0xff]
    %v656 = vld [vmem:[#allocation2 + $0x3c0] sm:$0xff]
    %v657 = vld [vmem:[#allocation2 + $0x3c8] sm:$0xff]
    %v658 = vld [vmem:[#allocation2 + $0x3d0] sm:$0xff]
    %v659 = vld [vmem:[#allocation2 + $0x3d8] sm:$0xff]
    %v660 = vld [vmem:[#allocation2 + $0x3e0] sm:$0xff]
    %v661 = vld [vmem:[#allocation2 + $0x3e8] sm:$0xff]
    %v662 = vld [vmem:[#allocation2 + $0x3f0] sm:$0xff]
    %v663 = vld [vmem:[#allocation2 + $0x3f8] sm:$0xff]
    %v664 = vld [vmem:[#allocation2 + $0x400] sm:$0xff]
    %v665 = vld [vmem:[#allocation2 + $0x408] sm:$0xff]
    %v666 = vld [vmem:[#allocation2 + $0x410] sm:$0xff]
    %v667 = vld [vmem:[#allocation2 + $0x418] sm:$0xff]
    %v668 = vld [vmem:[#allocation2 + $0x420] sm:$0xff]
    %v669 = vld [vmem:[#allocation2 + $0x428] sm:$0xff]
    %v670 = vld [vmem:[#allocation2 + $0x430] sm:$0xff]
    %v671 = vld [vmem:[#allocation2 + $0x438] sm:$0xff]
    %v672 = vld [vmem:[#allocation2 + $0x440] sm:$0xff]
    %v673 = vld [vmem:[#allocation2 + $0x448] sm:$0xff]
    %v674 = vld [vmem:[#allocation2 + $0x450] sm:$0xff]
    %v675 = vld [vmem:[#allocation2 + $0x458] sm:$0xff]
    %v676 = vld [vmem:[#allocation2 + $0x460] sm:$0xff]
    %v677 = vld [vmem:[#allocation2 + $0x468] sm:$0xff]
    %v678 = vld [vmem:[#allocation2 + $0x470] sm:$0xff]
    %v679 = vld [vmem:[#allocation2 + $0x478] sm:$0xff]
    %v680 = vld [vmem:[#allocation2 + $0x480] sm:$0xff]
    %v681 = vld [vmem:[#allocation2 + $0x488] sm:$0xff]
    %v682 = vld [vmem:[#allocation2 + $0x490] sm:$0xff]
    %v683 = vld [vmem:[#allocation2 + $0x498] sm:$0xff]
    %v684 = vld [vmem:[#allocation2 + $0x4a0] sm:$0xff]
    %v685 = vld [vmem:[#allocation2 + $0x4a8] sm:$0xff]
    %v686 = vld [vmem:[#allocation2 + $0x4b0] sm:$0xff]
    %v687 = vld [vmem:[#allocation2 + $0x4b8] sm:$0xff]
    %v688 = vld [vmem:[#allocation2 + $0x4c0] sm:$0xff]
    %v689 = vld [vmem:[#allocation2 + $0x4c8] sm:$0xff]
    %v690 = vld [vmem:[#allocation2 + $0x4d0] sm:$0xff]
    %v691 = vld [vmem:[#allocation2 + $0x4d8] sm:$0xff]
    %v692 = vld [vmem:[#allocation2 + $0x4e0] sm:$0xff]
    %v693 = vld [vmem:[#allocation2 + $0x4e8] sm:$0xff]
    %v694 = vld [vmem:[#allocation2 + $0x4f0] sm:$0xff]
    %v695 = vld [vmem:[#allocation2 + $0x4f8] sm:$0xff]
    %v696 = vld [vmem:[#allocation2 + $0x500] sm:$0xff]
    %v697 = vld [vmem:[#allocation2 + $0x508] sm:$0xff]
    %v698 = vld [vmem:[#allocation2 + $0x510] sm:$0xff]
    %v699 = vld [vmem:[#allocation2 + $0x518] sm:$0xff]
    %v700 = vld [vmem:[#allocation2 + $0x520] sm:$0xff]
    %v701 = vld [vmem:[#allocation2 + $0x528] sm:$0xff]
    %v702 = vld [vmem:[#allocation2 + $0x530] sm:$0xff]
    %v703 = vld [vmem:[#allocation2 + $0x538] sm:$0xff]
    %v704 = vld [vmem:[#allocation2 + $0x540] sm:$0xff]
    %v705 = vld [vmem:[#allocation2 + $0x548] sm:$0xff]
    %v706 = vld [vmem:[#allocation2 + $0x550] sm:$0xff]
    %v707 = vld [vmem:[#allocation2 + $0x558] sm:$0xff]
    %v708 = vld [vmem:[#allocation2 + $0x560] sm:$0xff]
    %v709 = vld [vmem:[#allocation2 + $0x568] sm:$0xff]
    %v710 = vld [vmem:[#allocation2 + $0x570] sm:$0xff]
    %v711 = vld [vmem:[#allocation2 + $0x578] sm:$0xff]
    %v712 = vld [vmem:[#allocation2 + $0x580] sm:$0xff]
    %v713 = vld [vmem:[#allocation2 + $0x588] sm:$0xff]
    %v714 = vld [vmem:[#allocation2 + $0x590] sm:$0xff]
    %v715 = vld [vmem:[#allocation2 + $0x598] sm:$0xff]
    %v716 = vld [vmem:[#allocation2 + $0x5a0] sm:$0xff]
    %v717 = vld [vmem:[#allocation2 + $0x5a8] sm:$0xff]
    %v718 = vld [vmem:[#allocation2 + $0x5b0] sm:$0xff]
    %v719 = vld [vmem:[#allocation2 + $0x5b8] sm:$0xff]
    %v720 = vld [vmem:[#allocation2 + $0x5c0] sm:$0xff]
    %v721 = vld [vmem:[#allocation2 + $0x5c8] sm:$0xff]
    %v722 = vld [vmem:[#allocation2 + $0x5d0] sm:$0xff]
    %v723 = vld [vmem:[#allocation2 + $0x5d8] sm:$0xff]
    %v724 = vld [vmem:[#allocation2 + $0x5e0] sm:$0xff]
    %v725 = vld [vmem:[#allocation2 + $0x5e8] sm:$0xff]
    %v726 = vld [vmem:[#allocation2 + $0x5f0] sm:$0xff]
    %v727 = vld [vmem:[#allocation2 + $0x5f8] sm:$0xff]
    %v728 = vld [vmem:[#allocation2 + $0x600] sm:$0xff]
    %v729 = vld [vmem:[#allocation2 + $0x608] sm:$0xff]
    %v730 = vld [vmem:[#allocation2 + $0x610] sm:$0xff]
    %v731 = vld [vmem:[#allocation2 + $0x618] sm:$0xff]
    %v732 = vld [vmem:[#allocation2 + $0x620] sm:$0xff]
    %v733 = vld [vmem:[#allocation2 + $0x628] sm:$0xff]
    %v734 = vld [vmem:[#allocation2 + $0x630] sm:$0xff]
    %v735 = vld [vmem:[#allocation2 + $0x638] sm:$0xff]
    %v736 = vld [vmem:[#allocation2 + $0x640] sm:$0xff]
    %v737 = vld [vmem:[#allocation2 + $0x648] sm:$0xff]
    %v738 = vld [vmem:[#allocation2 + $0x650] sm:$0xff]
    %v739 = vld [vmem:[#allocation2 + $0x658] sm:$0xff]
    %v740 = vld [vmem:[#allocation2 + $0x660] sm:$0xff]
    %v741 = vld [vmem:[#allocation2 + $0x668] sm:$0xff]
    %v742 = vld [vmem:[#allocation2 + $0x670] sm:$0xff]
    %v743 = vld [vmem:[#allocation2 + $0x678] sm:$0xff]
    %v744 = vld [vmem:[#allocation2 + $0x680] sm:$0xff]
    %v745 = vld [vmem:[#allocation2 + $0x688] sm:$0xff]
    %v746 = vld [vmem:[#allocation2 + $0x690] sm:$0xff]
    %v747 = vld [vmem:[#allocation2 + $0x698] sm:$0xff]
    %v748 = vld [vmem:[#allocation2 + $0x6a0] sm:$0xff]
    %v749 = vld [vmem:[#allocation2 + $0x6a8] sm:$0xff]
    %v750 = vld [vmem:[#allocation2 + $0x6b0] sm:$0xff]
    %v751 = vld [vmem:[#allocation2 + $0x6b8] sm:$0xff]
    %v752 = vld [vmem:[#allocation2 + $0x6c0] sm:$0xff]
    %v753 = vld [vmem:[#allocation2 + $0x6c8] sm:$0xff]
    %v754 = vld [vmem:[#allocation2 + $0x6d0] sm:$0xff]
    %v755 = vld [vmem:[#allocation2 + $0x6d8] sm:$0xff]
    %v756 = vld [vmem:[#allocation2 + $0x6e0] sm:$0xff]
    %v757 = vld [vmem:[#allocation2 + $0x6e8] sm:$0xff]
    %v758 = vld [vmem:[#allocation2 + $0x6f0] sm:$0xff]
    %v759 = vld [vmem:[#allocation2 + $0x6f8] sm:$0xff]
    %v760 = vld [vmem:[#allocation2 + $0x700] sm:$0xff]
    %v761 = vld [vmem:[#allocation2 + $0x708] sm:$0xff]
    %v762 = vld [vmem:[#allocation2 + $0x710] sm:$0xff]
    %v763 = vld [vmem:[#allocation2 + $0x718] sm:$0xff]
    %v764 = vld [vmem:[#allocation2 + $0x720] sm:$0xff]
    %v765 = vld [vmem:[#allocation2 + $0x728] sm:$0xff]
    %v766 = vld [vmem:[#allocation2 + $0x730] sm:$0xff]
    %v767 = vld [vmem:[#allocation2 + $0x738] sm:$0xff]
    %v768 = vld [vmem:[#allocation2 + $0x740] sm:$0xff]
    %v769 = vld [vmem:[#allocation2 + $0x748] sm:$0xff]
    %v770 = vld [vmem:[#allocation2 + $0x750] sm:$0xff]
    %v771 = vld [vmem:[#allocation2 + $0x758] sm:$0xff]
    %v772 = vld [vmem:[#allocation2 + $0x760] sm:$0xff]
    %v773 = vld [vmem:[#allocation2 + $0x768] sm:$0xff]
    %v774 = vld [vmem:[#allocation2 + $0x770] sm:$0xff]
    %v775 = vld [vmem:[#allocation2 + $0x778] sm:$0xff]
    %v776 = vld [vmem:[#allocation2 + $0x780] sm:$0xff]
    %v777 = vld [vmem:[#allocation2 + $0x788] sm:$0xff]
    %v778 = vld [vmem:[#allocation2 + $0x790] sm:$0xff]
    %v779 = vld [vmem:[#allocation2 + $0x798] sm:$0xff]
    %v780 = vld [vmem:[#allocation2 + $0x7a0] sm:$0xff]
    %v781 = vld [vmem:[#allocation2 + $0x7a8] sm:$0xff]
    %v782 = vld [vmem:[#allocation2 + $0x7b0] sm:$0xff]
    %v783 = vld [vmem:[#allocation2 + $0x7b8] sm:$0xff]
    %v784 = vld [vmem:[#allocation2 + $0x7c0] sm:$0xff]
    %v785 = vld [vmem:[#allocation2 + $0x7c8] sm:$0xff]
    %v786 = vld [vmem:[#allocation2 + $0x7d0] sm:$0xff]
    %v787 = vld [vmem:[#allocation2 + $0x7d8] sm:$0xff]
    %v788 = vld [vmem:[#allocation2 + $0x7e0] sm:$0xff]
    %v789 = vld [vmem:[#allocation2 + $0x7e8] sm:$0xff]
    %v790 = vld [vmem:[#allocation2 + $0x7f0] sm:$0xff]
    %v791 = vld [vmem:[#allocation2 + $0x7f8] sm:$0xff]
    %792 = vmatprep.subr.mxu0 %v537
    %793 = vmatpush1.msra.mxu0 %v536
    %794 = vmatprep.subr.mxu0 %v541
    %795 = vmatpush1.msra.mxu0 %v540
    %796 = vmatprep.subr.mxu0 %v545
    %797 = vmatpush1.msra.mxu0 %v544
    %798 = vmatprep.subr.mxu0 %v549
    %799 = vmatpush1.msra.mxu0 %v548
    %800 = vmatprep.subr.mxu0 %v553
    %801 = vmatpush1.msra.mxu0 %v552
    %802 = vmatprep.subr.mxu0 %v557
    %803 = vmatpush1.msra.mxu0 %v556
    %804 = vmatprep.subr.mxu0 %v561
    %805 = vmatpush1.msra.mxu0 %v560
    %806 = vmatprep.subr.mxu0 %v565
    %807 = vmatpush1.msra.mxu0 %v564
    %808 = vmatprep.subr.mxu0 %v569
    %809 = vmatpush1.msra.mxu0 %v568
    %810 = vmatprep.subr.mxu0 %v573
    %811 = vmatpush1.msra.mxu0 %v572
    %812 = vmatprep.subr.mxu0 %v577
    %813 = vmatpush1.msra.mxu0 %v576
    %814 = vmatprep.subr.mxu0 %v581
    %815 = vmatpush1.msra.mxu0 %v580
    %816 = vmatprep.subr.mxu0 %v585
    %817 = vmatpush1.msra.mxu0 %v584
    %818 = vmatprep.subr.mxu0 %v589
    %819 = vmatpush1.msra.mxu0 %v588
    %820 = vmatprep.subr.mxu0 %v593
    %821 = vmatpush1.msra.mxu0 %v592
    %822 = vmatprep.subr.mxu0 %v597
    %823 = vmatpush1.msra.mxu0 %v596
    %824 = vmatprep.subr.mxu0 %v601
    %825 = vmatpush1.msra.mxu0 %v600
    %826 = vmatprep.subr.mxu0 %v605
    %827 = vmatpush1.msra.mxu0 %v604
    %828 = vmatprep.subr.mxu0 %v609
    %829 = vmatpush1.msra.mxu0 %v608
    %830 = vmatprep.subr.mxu0 %v613
    %831 = vmatpush1.msra.mxu0 %v612
    %832 = vmatprep.subr.mxu0 %v617
    %833 = vmatpush1.msra.mxu0 %v616
    %834 = vmatprep.subr.mxu0 %v621
    %835 = vmatpush1.msra.mxu0 %v620
    %836 = vmatprep.subr.mxu0 %v625
    %837 = vmatpush1.msra.mxu0 %v624
    %838 = vmatprep.subr.mxu0 %v629
    %839 = vmatpush1.msra.mxu0 %v628
    %840 = vmatprep.subr.mxu0 %v633
    %841 = vmatpush1.msra.mxu0 %v632
    %842 = vmatprep.subr.mxu0 %v637
    %843 = vmatpush1.msra.mxu0 %v636
    %844 = vmatprep.subr.mxu0 %v641
    %845 = vmatpush1.msra.mxu0 %v640
    %846 = vmatprep.subr.mxu0 %v645
    %847 = vmatpush1.msra.mxu0 %v644
    %848 = vmatprep.subr.mxu0 %v649
    %849 = vmatpush1.msra.mxu0 %v648
    %850 = vmatprep.subr.mxu0 %v653
    %851 = vmatpush1.msra.mxu0 %v652
    %852 = vmatprep.subr.mxu0 %v657
    %853 = vmatpush1.msra.mxu0 %v656
    %854 = vmatprep.subr.mxu0 %v661
    %855 = vmatpush1.msra.mxu0 %v660
    %856 = vmatprep.mubr.f32.mxu0 %v509
    %857 = vmatmul.mubr.f32.gmra.mrb[0].mxu0 %v496
    %v858 = vpop.f32.mrb[0].mxu0
    %v859 = vadd.f32 0.0, %v858
    %v860 = vpop.f32.mrb[0].mxu0
    %v861 = vadd.f32 0.0, %v860
    %862 = vdwg.mxu0
    %863 = vmatprep.subr.mxu0 %v665
    %864 = vmatpush1.msra.mxu0 %v664
    %865 = vmatprep.subr.mxu0 %v669
    %866 = vmatpush1.msra.mxu0 %v668
    %867 = vmatprep.subr.mxu0 %v673
    %868 = vmatpush1.msra.mxu0 %v672
    %869 = vmatprep.subr.mxu0 %v677
    %870 = vmatpush1.msra.mxu0 %v676
    %871 = vmatprep.subr.mxu0 %v681
    %872 = vmatpush1.msra.mxu0 %v680
    %873 = vmatprep.subr.mxu0 %v685
    %874 = vmatpush1.msra.mxu0 %v684
    %875 = vmatprep.subr.mxu0 %v689
    %876 = vmatpush1.msra.mxu0 %v688
    %877 = vmatprep.subr.mxu0 %v693
    %878 = vmatpush1.msra.mxu0 %v692
    %879 = vmatprep.subr.mxu0 %v697
    %880 = vmatpush1.msra.mxu0 %v696
    %881 = vmatprep.subr.mxu0 %v701
    %882 = vmatpush1.msra.mxu0 %v700
    %883 = vmatprep.subr.mxu0 %v705
    %884 = vmatpush1.msra.mxu0 %v704
    %885 = vmatprep.subr.mxu0 %v709
    %886 = vmatpush1.msra.mxu0 %v708
    %887 = vmatprep.subr.mxu0 %v713
    %888 = vmatpush1.msra.mxu0 %v712
    %889 = vmatprep.subr.mxu0 %v717
    %890 = vmatpush1.msra.mxu0 %v716
    %891 = vmatprep.subr.mxu0 %v721
    %892 = vmatpush1.msra.mxu0 %v720
    %893 = vmatprep.subr.mxu0 %v725
    %894 = vmatpush1.msra.mxu0 %v724
    %895 = vmatprep.subr.mxu0 %v729
    %896 = vmatpush1.msra.mxu0 %v728
    %897 = vmatprep.subr.mxu0 %v733
    %898 = vmatpush1.msra.mxu0 %v732
    %899 = vmatprep.subr.mxu0 %v737
    %900 = vmatpush1.msra.mxu0 %v736
    %901 = vmatprep.subr.mxu0 %v741
    %902 = vmatpush1.msra.mxu0 %v740
    %903 = vmatprep.subr.mxu0 %v745
    %904 = vmatpush1.msra.mxu0 %v744
    %905 = vmatprep.subr.mxu0 %v749
    %906 = vmatpush1.msra.mxu0 %v748
    %907 = vmatprep.subr.mxu0 %v753
    %908 = vmatpush1.msra.mxu0 %v752
    %909 = vmatprep.subr.mxu0 %v757
    %910 = vmatpush1.msra.mxu0 %v756
    %911 = vmatprep.subr.mxu0 %v761
    %912 = vmatpush1.msra.mxu0 %v760
    %913 = vmatprep.subr.mxu0 %v765
    %914 = vmatpush1.msra.mxu0 %v764
    %915 = vmatprep.subr.mxu0 %v769
    %916 = vmatpush1.msra.mxu0 %v768
    %917 = vmatprep.subr.mxu0 %v773
    %918 = vmatpush1.msra.mxu0 %v772
    %919 = vmatprep.subr.mxu0 %v777
    %920 = vmatpush1.msra.mxu0 %v776
    %921 = vmatprep.subr.mxu0 %v781
    %922 = vmatpush1.msra.mxu0 %v780
    %923 = vmatprep.subr.mxu0 %v785
    %924 = vmatpush1.msra.mxu0 %v784
    %925 = vmatprep.subr.mxu0 %v789
    %926 = vmatpush1.msra.mxu0 %v788
    %927 = vmatprep.mubr.f32.mxu0 %v535
    %928 = vmatmul.mubr.f32.gmra.mrb[0].mxu0 %v522
    %v929 = vpop.f32.mrb[0].mxu0
    %v930 = vadd.f32 %v859, %v929
    %v931 = vpop.f32.mrb[0].mxu0
    %v932 = vadd.f32 %v861, %v931
    %933 = vdwg.mxu0
    %934 = vmatprep.subr.mxu0 %v539
    %935 = vmatpush1.msra.mxu0 %v538
    %936 = vmatprep.subr.mxu0 %v543
    %937 = vmatpush1.msra.mxu0 %v542
    %938 = vmatprep.subr.mxu0 %v547
    %939 = vmatpush1.msra.mxu0 %v546
    %940 = vmatprep.subr.mxu0 %v551
    %941 = vmatpush1.msra.mxu0 %v550
    %942 = vmatprep.subr.mxu0 %v555
    %943 = vmatpush1.msra.mxu0 %v554
    %944 = vmatprep.subr.mxu0 %v559
    %945 = vmatpush1.msra.mxu0 %v558
    %946 = vmatprep.subr.mxu0 %v563
    %947 = vmatpush1.msra.mxu0 %v562
    %948 = vmatprep.subr.mxu0 %v567
    %949 = vmatpush1.msra.mxu0 %v566
    %950 = vmatprep.subr.mxu0 %v571
    %951 = vmatpush1.msra.mxu0 %v570
    %952 = vmatprep.subr.mxu0 %v575
    %953 = vmatpush1.msra.mxu0 %v574
    %954 = vmatprep.subr.mxu0 %v579
    %955 = vmatpush1.msra.mxu0 %v578
    %956 = vmatprep.subr.mxu0 %v583
    %957 = vmatpush1.msra.mxu0 %v582
    %958 = vmatprep.subr.mxu0 %v587
    %959 = vmatpush1.msra.mxu0 %v586
    %960 = vmatprep.subr.mxu0 %v591
    %961 = vmatpush1.msra.mxu0 %v590
    %962 = vmatprep.subr.mxu0 %v595
    %963 = vmatpush1.msra.mxu0 %v594
    %964 = vmatprep.subr.mxu0 %v599
    %965 = vmatpush1.msra.mxu0 %v598
    %966 = vmatprep.subr.mxu0 %v603
    %967 = vmatpush1.msra.mxu0 %v602
    %968 = vmatprep.subr.mxu0 %v607
    %969 = vmatpush1.msra.mxu0 %v606
    %970 = vmatprep.subr.mxu0 %v611
    %971 = vmatpush1.msra.mxu0 %v610
    %972 = vmatprep.subr.mxu0 %v615
    %973 = vmatpush1.msra.mxu0 %v614
    %974 = vmatprep.subr.mxu0 %v619
    %975 = vmatpush1.msra.mxu0 %v618
    %976 = vmatprep.subr.mxu0 %v623
    %977 = vmatpush1.msra.mxu0 %v622
    %978 = vmatprep.subr.mxu0 %v627
    %979 = vmatpush1.msra.mxu0 %v626
    %980 = vmatprep.subr.mxu0 %v631
    %981 = vmatpush1.msra.mxu0 %v630
    %982 = vmatprep.subr.mxu0 %v635
    %983 = vmatpush1.msra.mxu0 %v634
    %984 = vmatprep.subr.mxu0 %v639
    %985 = vmatpush1.msra.mxu0 %v638
    %986 = vmatprep.subr.mxu0 %v643
    %987 = vmatpush1.msra.mxu0 %v642
    %988 = vmatprep.subr.mxu0 %v647
    %989 = vmatpush1.msra.mxu0 %v646
    %990 = vmatprep.subr.mxu0 %v651
    %991 = vmatpush1.msra.mxu0 %v650
    %992 = vmatprep.subr.mxu0 %v655
    %993 = vmatpush1.msra.mxu0 %v654
    %994 = vmatprep.subr.mxu0 %v659
    %995 = vmatpush1.msra.mxu0 %v658
    %996 = vmatprep.subr.mxu0 %v663
    %997 = vmatpush1.msra.mxu0 %v662
    %998 = vmatprep.mubr.f32.mxu0 %v509
    %999 = vmatmul.mubr.f32.gmra.mrb[0].mxu0 %v496
    %v1000 = vpop.f32.mrb[0].mxu0
    %v1001 = vadd.f32 0.0, %v1000
    %v1002 = vpop.f32.mrb[0].mxu0
    %v1003 = vadd.f32 0.0, %v1002
    %1004 = vdwg.mxu0
    %1005 = vmatprep.subr.mxu0 %v667
    %1006 = vmatpush1.msra.mxu0 %v666
    %1007 = vmatprep.subr.mxu0 %v671
    %1008 = vmatpush1.msra.mxu0 %v670
    %1009 = vmatprep.subr.mxu0 %v675
    %1010 = vmatpush1.msra.mxu0 %v674
    %1011 = vmatprep.subr.mxu0 %v679
    %1012 = vmatpush1.msra.mxu0 %v678
    %1013 = vmatprep.subr.mxu0 %v683
    %1014 = vmatpush1.msra.mxu0 %v682
    %1015 = vmatprep.subr.mxu0 %v687
    %1016 = vmatpush1.msra.mxu0 %v686
    %1017 = vmatprep.subr.mxu0 %v691
    %1018 = vmatpush1.msra.mxu0 %v690
    %1019 = vmatprep.subr.mxu0 %v695
    %1020 = vmatpush1.msra.mxu0 %v694
    %1021 = vmatprep.subr.mxu0 %v699
    %1022 = vmatpush1.msra.mxu0 %v698
    %1023 = vmatprep.subr.mxu0 %v703
    %1024 = vmatpush1.msra.mxu0 %v702
    %1025 = vmatprep.subr.mxu0 %v707
    %1026 = vmatpush1.msra.mxu0 %v706
    %1027 = vmatprep.subr.mxu0 %v711
    %1028 = vmatpush1.msra.mxu0 %v710
    %1029 = vmatprep.subr.mxu0 %v715
    %1030 = vmatpush1.msra.mxu0 %v714
    %1031 = vmatprep.subr.mxu0 %v719
    %1032 = vmatpush1.msra.mxu0 %v718
    %1033 = vmatprep.subr.mxu0 %v723
    %1034 = vmatpush1.msra.mxu0 %v722
    %1035 = vmatprep.subr.mxu0 %v727
    %1036 = vmatpush1.msra.mxu0 %v726
    %1037 = vmatprep.subr.mxu0 %v731
    %1038 = vmatpush1.msra.mxu0 %v730
    %1039 = vmatprep.subr.mxu0 %v735
    %1040 = vmatpush1.msra.mxu0 %v734
    %1041 = vmatprep.subr.mxu0 %v739
    %1042 = vmatpush1.msra.mxu0 %v738
    %1043 = vmatprep.subr.mxu0 %v743
    %1044 = vmatpush1.msra.mxu0 %v742
    %1045 = vmatprep.subr.mxu0 %v747
    %1046 = vmatpush1.msra.mxu0 %v746
    %1047 = vmatprep.subr.mxu0 %v751
    %1048 = vmatpush1.msra.mxu0 %v750
    %1049 = vmatprep.subr.mxu0 %v755
    %1050 = vmatpush1.msra.mxu0 %v754
    %1051 = vmatprep.subr.mxu0 %v759
    %1052 = vmatpush1.msra.mxu0 %v758
    %1053 = vmatprep.subr.mxu0 %v763
    %1054 = vmatpush1.msra.mxu0 %v762
    %1055 = vmatprep.subr.mxu0 %v767
    %1056 = vmatpush1.msra.mxu0 %v766
    %1057 = vmatprep.subr.mxu0 %v771
    %1058 = vmatpush1.msra.mxu0 %v770
    %1059 = vmatprep.subr.mxu0 %v775
    %1060 = vmatpush1.msra.mxu0 %v774
    %1061 = vmatprep.subr.mxu0 %v779
    %1062 = vmatpush1.msra.mxu0 %v778
    %1063 = vmatprep.subr.mxu0 %v783
    %1064 = vmatpush1.msra.mxu0 %v782
    %1065 = vmatprep.subr.mxu0 %v787
    %1066 = vmatpush1.msra.mxu0 %v786
    %1067 = vmatprep.subr.mxu0 %v791
    %1068 = vmatpush1.msra.mxu0 %v790
    %1069 = vmatprep.mubr.f32.mxu0 %v535
    %1070 = vmatmul.mubr.f32.gmra.mrb[0].mxu0 %v522
    %v1071 = vpop.f32.mrb[0].mxu0
    %v1072 = vadd.f32 %v1001, %v1071
    %v1073 = vpop.f32.mrb[0].mxu0
    %v1074 = vadd.f32 %v1003, %v1073
    %1075 = vdwg.mxu0
    %v1076 = vlaneseq
    %v1077 = vshrl.u32 %v1076, 7
    %v1078 = vsub.s32 0, %v1077
    %v1079 = vrot.slane %v930, %v1078
    %v1080 = vlaneseq
    %v1081 = vshrl.u32 %v1080, 7
    %v1082 = vsub.s32 0, %v1081
    %v1083 = vrot.slane %v932, %v1082
    %v1084 = vlaneseq
    %v1085 = vshrl.u32 %v1084, 7
    %v1086 = vsub.s32 0, %v1085
    %v1087 = vrot.slane %v1072, %v1086
    %v1088 = vlaneseq
    %v1089 = vshrl.u32 %v1088, 7
    %v1090 = vsub.s32 0, %v1089
    %v1091 = vrot.slane %v1074, %v1090
    %v1092 = vmul.f32 %v1079, %v420
    %v1093 = vmul.f32 %v1083, %v421
    %v1094 = vmul.f32 %v1087, %v422
    %v1095 = vmul.f32 %v1091, %v423
    %v1096 = vmul.f32 %v1079, %v424
    %v1097 = vmul.f32 %v1083, %v425
    %v1098 = vmul.f32 %v1087, %v426
    %v1099 = vmul.f32 %v1091, %v427
    %v1100 = vmul.f32 %v1079, %v428
    %v1101 = vmul.f32 %v1083, %v429
    %v1102 = vmul.f32 %v1087, %v430
    %v1103 = vmul.f32 %v1091, %v431
    %v1104 = vmul.f32 %v1079, %v432
    %v1105 = vmul.f32 %v1083, %v433
    %v1106 = vmul.f32 %v1087, %v434
    %v1107 = vmul.f32 %v1091, %v435
    %v1108 = vmul.f32 %v1079, %v436
    %v1109 = vmul.f32 %v1083, %v437
    %v1110 = vmul.f32 %v1087, %v438
    %v1111 = vmul.f32 %v1091, %v439
    %v1112 = vmul.f32 %v1079, %v440
    %v1113 = vmul.f32 %v1083, %v441
    %v1114 = vmul.f32 %v1087, %v442
    %v1115 = vmul.f32 %v1091, %v443
    %v1116 = vmul.f32 %v1079, %v444
    %v1117 = vmul.f32 %v1083, %v445
    %v1118 = vmul.f32 %v1087, %v446
    %v1119 = vmul.f32 %v1091, %v447
    %v1120 = vmul.f32 %v1079, %v448
    %v1121 = vmul.f32 %v1083, %v449
    %v1122 = vmul.f32 %v1087, %v450
    %v1123 = vmul.f32 %v1091, %v451
    %v1124 = vld [vmem:[%s4] sm:$0xff]
    %v1125 = vld [vmem:[%s4 + $0x8] sm:$0xff]
    %v1126 = vld [vmem:[%s4 + $0x10] sm:$0xff]
    %v1127 = vld [vmem:[%s4 + $0x18] sm:$0xff]
    %v1128 = vld [vmem:[%s4 + $0x20] sm:$0xff]
    %v1129 = vld [vmem:[%s4 + $0x28] sm:$0xff]
    %v1130 = vld [vmem:[%s4 + $0x30] sm:$0xff]
    %v1131 = vld [vmem:[%s4 + $0x38] sm:$0xff]
    %v1132 = vld [vmem:[%s4 + $0x40] sm:$0xff]
    %v1133 = vld [vmem:[%s4 + $0x48] sm:$0xff]
    %v1134 = vld [vmem:[%s4 + $0x50] sm:$0xff]
    %v1135 = vld [vmem:[%s4 + $0x58] sm:$0xff]
    %v1136 = vld [vmem:[%s4 + $0x60] sm:$0xff]
    %v1137 = vld [vmem:[%s4 + $0x68] sm:$0xff]
    %v1138 = vld [vmem:[%s4 + $0x70] sm:$0xff]
    %v1139 = vld [vmem:[%s4 + $0x78] sm:$0xff]
    %v1140 = vld [vmem:[%s4 + $0x80] sm:$0xff]
    %v1141 = vld [vmem:[%s4 + $0x88] sm:$0xff]
    %v1142 = vld [vmem:[%s4 + $0x90] sm:$0xff]
    %v1143 = vld [vmem:[%s4 + $0x98] sm:$0xff]
    %v1144 = vld [vmem:[%s4 + $0xa0] sm:$0xff]
    %v1145 = vld [vmem:[%s4 + $0xa8] sm:$0xff]
    %v1146 = vld [vmem:[%s4 + $0xb0] sm:$0xff]
    %v1147 = vld [vmem:[%s4 + $0xb8] sm:$0xff]
    %v1148 = vld [vmem:[%s4 + $0xc0] sm:$0xff]
    %v1149 = vld [vmem:[%s4 + $0xc8] sm:$0xff]
    %v1150 = vld [vmem:[%s4 + $0xd0] sm:$0xff]
    %v1151 = vld [vmem:[%s4 + $0xd8] sm:$0xff]
    %v1152 = vld [vmem:[%s4 + $0xe0] sm:$0xff]
    %v1153 = vld [vmem:[%s4 + $0xe8] sm:$0xff]
    %v1154 = vld [vmem:[%s4 + $0xf0] sm:$0xff]
    %v1155 = vld [vmem:[%s4 + $0xf8] sm:$0xff]
    %v1156 = vld [vmem:[%s4 + $0x100] sm:$0xff]
    %v1157 = vld [vmem:[%s4 + $0x108] sm:$0xff]
    %v1158 = vld [vmem:[%s4 + $0x110] sm:$0xff]
    %v1159 = vld [vmem:[%s4 + $0x118] sm:$0xff]
    %v1160 = vld [vmem:[%s4 + $0x120] sm:$0xff]
    %v1161 = vld [vmem:[%s4 + $0x128] sm:$0xff]
    %v1162 = vld [vmem:[%s4 + $0x130] sm:$0xff]
    %v1163 = vld [vmem:[%s4 + $0x138] sm:$0xff]
    %v1164 = vld [vmem:[%s4 + $0x140] sm:$0xff]
    %v1165 = vld [vmem:[%s4 + $0x148] sm:$0xff]
    %v1166 = vld [vmem:[%s4 + $0x150] sm:$0xff]
    %v1167 = vld [vmem:[%s4 + $0x158] sm:$0xff]
    %v1168 = vld [vmem:[%s4 + $0x160] sm:$0xff]
    %v1169 = vld [vmem:[%s4 + $0x168] sm:$0xff]
    %v1170 = vld [vmem:[%s4 + $0x170] sm:$0xff]
    %v1171 = vld [vmem:[%s4 + $0x178] sm:$0xff]
    %v1172 = vld [vmem:[%s4 + $0x180] sm:$0xff]
    %v1173 = vld [vmem:[%s4 + $0x188] sm:$0xff]
    %v1174 = vld [vmem:[%s4 + $0x190] sm:$0xff]
    %v1175 = vld [vmem:[%s4 + $0x198] sm:$0xff]
    %v1176 = vld [vmem:[%s4 + $0x1a0] sm:$0xff]
    %v1177 = vld [vmem:[%s4 + $0x1a8] sm:$0xff]
    %v1178 = vld [vmem:[%s4 + $0x1b0] sm:$0xff]
    %v1179 = vld [vmem:[%s4 + $0x1b8] sm:$0xff]
    %v1180 = vld [vmem:[%s4 + $0x1c0] sm:$0xff]
    %v1181 = vld [vmem:[%s4 + $0x1c8] sm:$0xff]
    %v1182 = vld [vmem:[%s4 + $0x1d0] sm:$0xff]
    %v1183 = vld [vmem:[%s4 + $0x1d8] sm:$0xff]
    %v1184 = vld [vmem:[%s4 + $0x1e0] sm:$0xff]
    %v1185 = vld [vmem:[%s4 + $0x1e8] sm:$0xff]
    %v1186 = vld [vmem:[%s4 + $0x1f0] sm:$0xff]
    %v1187 = vld [vmem:[%s4 + $0x1f8] sm:$0xff]
    %1188 = vmatprep.subr.mxu0 0.0
    %1189 = vmatpush1.msra.mxu0 %v1124
    %1190 = vmatprep.subr.mxu0 0.0
    %1191 = vmatpush1.msra.mxu0 %v1125
    %1192 = vmatprep.subr.mxu0 0.0
    %1193 = vmatpush1.msra.mxu0 %v1126
    %1194 = vmatprep.subr.mxu0 0.0
    %1195 = vmatpush1.msra.mxu0 %v1127
    %1196 = vmatprep.subr.mxu0 0.0
    %1197 = vmatpush1.msra.mxu0 %v1128
    %1198 = vmatprep.subr.mxu0 0.0
    %1199 = vmatpush1.msra.mxu0 %v1129
    %1200 = vmatprep.subr.mxu0 0.0
    %1201 = vmatpush1.msra.mxu0 %v1130
    %1202 = vmatprep.subr.mxu0 0.0
    %1203 = vmatpush1.msra.mxu0 %v1131
    %1204 = vmatprep.subr.mxu0 0.0
    %1205 = vmatpush1.msra.mxu0 %v1132
    %1206 = vmatprep.subr.mxu0 0.0
    %1207 = vmatpush1.msra.mxu0 %v1133
    %1208 = vmatprep.subr.mxu0 0.0
    %1209 = vmatpush1.msra.mxu0 %v1134
    %1210 = vmatprep.subr.mxu0 0.0
    %1211 = vmatpush1.msra.mxu0 %v1135
    %1212 = vmatprep.subr.mxu0 0.0
    %1213 = vmatpush1.msra.mxu0 %v1136
    %1214 = vmatprep.subr.mxu0 0.0
    %1215 = vmatpush1.msra.mxu0 %v1137
    %1216 = vmatprep.subr.mxu0 0.0
    %1217 = vmatpush1.msra.mxu0 %v1138
    %1218 = vmatprep.subr.mxu0 0.0
    %1219 = vmatpush1.msra.mxu0 %v1139
    %1220 = vmatprep.subr.mxu0 0.0
    %1221 = vmatpush1.msra.mxu0 %v1140
    %1222 = vmatprep.subr.mxu0 0.0
    %1223 = vmatpush1.msra.mxu0 %v1141
    %1224 = vmatprep.subr.mxu0 0.0
    %1225 = vmatpush1.msra.mxu0 %v1142
    %1226 = vmatprep.subr.mxu0 0.0
    %1227 = vmatpush1.msra.mxu0 %v1143
    %1228 = vmatprep.subr.mxu0 0.0
    %1229 = vmatpush1.msra.mxu0 %v1144
    %1230 = vmatprep.subr.mxu0 0.0
    %1231 = vmatpush1.msra.mxu0 %v1145
    %1232 = vmatprep.subr.mxu0 0.0
    %1233 = vmatpush1.msra.mxu0 %v1146
    %1234 = vmatprep.subr.mxu0 0.0
    %1235 = vmatpush1.msra.mxu0 %v1147
    %1236 = vmatprep.subr.mxu0 0.0
    %1237 = vmatpush1.msra.mxu0 %v1148
    %1238 = vmatprep.subr.mxu0 0.0
    %1239 = vmatpush1.msra.mxu0 %v1149
    %1240 = vmatprep.subr.mxu0 0.0
    %1241 = vmatpush1.msra.mxu0 %v1150
    %1242 = vmatprep.subr.mxu0 0.0
    %1243 = vmatpush1.msra.mxu0 %v1151
    %1244 = vmatprep.subr.mxu0 0.0
    %1245 = vmatpush1.msra.mxu0 %v1152
    %1246 = vmatprep.subr.mxu0 0.0
    %1247 = vmatpush1.msra.mxu0 %v1153
    %1248 = vmatprep.subr.mxu0 0.0
    %1249 = vmatpush1.msra.mxu0 %v1154
    %1250 = vmatprep.subr.mxu0 0.0
    %1251 = vmatpush1.msra.mxu0 %v1155
    %1252 = vmatprep.mubr.f32.mxu0 %v1093
    %1253 = vmatmul.mubr.f32.gmra.mrb[0].mxu0 %v1092
    %v1254 = vpop.f32.mrb[0].mxu0
    %v1255 = vadd.f32 0.0, %v1254
    %v1256 = vpop.f32.mrb[0].mxu0
    %1257 = vmatprep.mubr.f32.mxu0 %v1097
    %1258 = vmatmul.mubr.f32.gmra.mrb[0].mxu0 %v1096
    %v1259 = vpop.f32.mrb[0].mxu0
    %v1260 = vadd.f32 0.0, %v1259
    %v1261 = vpop.f32.mrb[0].mxu0
    %1262 = vmatprep.mubr.f32.mxu0 %v1101
    %1263 = vmatmul.mubr.f32.gmra.mrb[0].mxu0 %v1100
    %v1264 = vpop.f32.mrb[0].mxu0
    %v1265 = vadd.f32 0.0, %v1264
    %v1266 = vpop.f32.mrb[0].mxu0
    %1267 = vmatprep.mubr.f32.mxu0 %v1105
    %1268 = vmatmul.mubr.f32.gmra.mrb[0].mxu0 %v1104
    %v1269 = vpop.f32.mrb[0].mxu0
    %v1270 = vadd.f32 0.0, %v1269
    %v1271 = vpop.f32.mrb[0].mxu0
    %1272 = vmatprep.mubr.f32.mxu0 %v1109
    %1273 = vmatmul.mubr.f32.gmra.mrb[0].mxu0 %v1108
    %v1274 = vpop.f32.mrb[0].mxu0
    %v1275 = vadd.f32 0.0, %v1274
    %v1276 = vpop.f32.mrb[0].mxu0
    %1277 = vmatprep.mubr.f32.mxu0 %v1113
    %1278 = vmatmul.mubr.f32.gmra.mrb[0].mxu0 %v1112
    %v1279 = vpop.f32.mrb[0].mxu0
    %v1280 = vadd.f32 0.0, %v1279
    %v1281 = vpop.f32.mrb[0].mxu0
    %1282 = vmatprep.mubr.f32.mxu0 %v1117
    %1283 = vmatmul.mubr.f32.gmra.mrb[0].mxu0 %v1116
    %v1284 = vpop.f32.mrb[0].mxu0
    %v1285 = vadd.f32 0.0, %v1284
    %v1286 = vpop.f32.mrb[0].mxu0
    %1287 = vmatprep.mubr.f32.mxu0 %v1121
    %1288 = vmatmul.mubr.f32.gmra.mrb[0].mxu0 %v1120
    %v1289 = vpop.f32.mrb[0].mxu0
    %v1290 = vadd.f32 0.0, %v1289
    %v1291 = vpop.f32.mrb[0].mxu0
    %1292 = vdwg.mxu0
    %1293 = vmatprep.subr.mxu0 0.0
    %1294 = vmatpush1.msra.mxu0 %v1156
    %1295 = vmatprep.subr.mxu0 0.0
    %1296 = vmatpush1.msra.mxu0 %v1157
    %1297 = vmatprep.subr.mxu0 0.0
    %1298 = vmatpush1.msra.mxu0 %v1158
    %1299 = vmatprep.subr.mxu0 0.0
    %1300 = vmatpush1.msra.mxu0 %v1159
    %1301 = vmatprep.subr.mxu0 0.0
    %1302 = vmatpush1.msra.mxu0 %v1160
    %1303 = vmatprep.subr.mxu0 0.0
    %1304 = vmatpush1.msra.mxu0 %v1161
    %1305 = vmatprep.subr.mxu0 0.0
    %1306 = vmatpush1.msra.mxu0 %v1162
    %1307 = vmatprep.subr.mxu0 0.0
    %1308 = vmatpush1.msra.mxu0 %v1163
    %1309 = vmatprep.subr.mxu0 0.0
    %1310 = vmatpush1.msra.mxu0 %v1164
    %1311 = vmatprep.subr.mxu0 0.0
    %1312 = vmatpush1.msra.mxu0 %v1165
    %1313 = vmatprep.subr.mxu0 0.0
    %1314 = vmatpush1.msra.mxu0 %v1166
    %1315 = vmatprep.subr.mxu0 0.0
    %1316 = vmatpush1.msra.mxu0 %v1167
    %1317 = vmatprep.subr.mxu0 0.0
    %1318 = vmatpush1.msra.mxu0 %v1168
    %1319 = vmatprep.subr.mxu0 0.0
    %1320 = vmatpush1.msra.mxu0 %v1169
    %1321 = vmatprep.subr.mxu0 0.0
    %1322 = vmatpush1.msra.mxu0 %v1170
    %1323 = vmatprep.subr.mxu0 0.0
    %1324 = vmatpush1.msra.mxu0 %v1171
    %1325 = vmatprep.subr.mxu0 0.0
    %1326 = vmatpush1.msra.mxu0 %v1172
    %1327 = vmatprep.subr.mxu0 0.0
    %1328 = vmatpush1.msra.mxu0 %v1173
    %1329 = vmatprep.subr.mxu0 0.0
    %1330 = vmatpush1.msra.mxu0 %v1174
    %1331 = vmatprep.subr.mxu0 0.0
    %1332 = vmatpush1.msra.mxu0 %v1175
    %1333 = vmatprep.subr.mxu0 0.0
    %1334 = vmatpush1.msra.mxu0 %v1176
    %1335 = vmatprep.subr.mxu0 0.0
    %1336 = vmatpush1.msra.mxu0 %v1177
    %1337 = vmatprep.subr.mxu0 0.0
    %1338 = vmatpush1.msra.mxu0 %v1178
    %1339 = vmatprep.subr.mxu0 0.0
    %1340 = vmatpush1.msra.mxu0 %v1179
    %1341 = vmatprep.subr.mxu0 0.0
    %1342 = vmatpush1.msra.mxu0 %v1180
    %1343 = vmatprep.subr.mxu0 0.0
    %1344 = vmatpush1.msra.mxu0 %v1181
    %1345 = vmatprep.subr.mxu0 0.0
    %1346 = vmatpush1.msra.mxu0 %v1182
    %1347 = vmatprep.subr.mxu0 0.0
    %1348 = vmatpush1.msra.mxu0 %v1183
    %1349 = vmatprep.subr.mxu0 0.0
    %1350 = vmatpush1.msra.mxu0 %v1184
    %1351 = vmatprep.subr.mxu0 0.0
    %1352 = vmatpush1.msra.mxu0 %v1185
    %1353 = vmatprep.subr.mxu0 0.0
    %1354 = vmatpush1.msra.mxu0 %v1186
    %1355 = vmatprep.subr.mxu0 0.0
    %1356 = vmatpush1.msra.mxu0 %v1187
    %1357 = vmatprep.mubr.f32.mxu0 %v1095
    %1358 = vmatmul.mubr.f32.gmra.mrb[0].mxu0 %v1094
    %v1359 = vpop.f32.mrb[0].mxu0
    %v1360 = vadd.f32 %v1255, %v1359
    %v1361 = vpop.f32.mrb[0].mxu0
    %1362 = vmatprep.mubr.f32.mxu0 %v1099
    %1363 = vmatmul.mubr.f32.gmra.mrb[0].mxu0 %v1098
    %v1364 = vpop.f32.mrb[0].mxu0
    %v1365 = vadd.f32 %v1260, %v1364
    %v1366 = vpop.f32.mrb[0].mxu0
    %1367 = vmatprep.mubr.f32.mxu0 %v1103
    %1368 = vmatmul.mubr.f32.gmra.mrb[0].mxu0 %v1102
    %v1369 = vpop.f32.mrb[0].mxu0
    %v1370 = vadd.f32 %v1265, %v1369
    %v1371 = vpop.f32.mrb[0].mxu0
    %1372 = vmatprep.mubr.f32.mxu0 %v1107
    %1373 = vmatmul.mubr.f32.gmra.mrb[0].mxu0 %v1106
    %v1374 = vpop.f32.mrb[0].mxu0
    %v1375 = vadd.f32 %v1270, %v1374
    %v1376 = vpop.f32.mrb[0].mxu0
    %1377 = vmatprep.mubr.f32.mxu0 %v1111
    %1378 = vmatmul.mubr.f32.gmra.mrb[0].mxu0 %v1110
    %v1379 = vpop.f32.mrb[0].mxu0
    %v1380 = vadd.f32 %v1275, %v1379
    %v1381 = vpop.f32.mrb[0].mxu0
    %1382 = vmatprep.mubr.f32.mxu0 %v1115
    %1383 = vmatmul.mubr.f32.gmra.mrb[0].mxu0 %v1114
    %v1384 = vpop.f32.mrb[0].mxu0
    %v1385 = vadd.f32 %v1280, %v1384
    %v1386 = vpop.f32.mrb[0].mxu0
    %1387 = vmatprep.mubr.f32.mxu0 %v1119
    %1388 = vmatmul.mubr.f32.gmra.mrb[0].mxu0 %v1118
    %v1389 = vpop.f32.mrb[0].mxu0
    %v1390 = vadd.f32 %v1285, %v1389
    %v1391 = vpop.f32.mrb[0].mxu0
    %1392 = vmatprep.mubr.f32.mxu0 %v1123
    %1393 = vmatmul.mubr.f32.gmra.mrb[0].mxu0 %v1122
    %v1394 = vpop.f32.mrb[0].mxu0
    %v1395 = vadd.f32 %v1290, %v1394
    %v1396 = vpop.f32.mrb[0].mxu0
    %1397 = vdwg.mxu0
    %v1398 = vmul.f32 %v1360, -100.0
    %v1399 = vmul.f32 %v1365, -100.0
    %v1400 = vmul.f32 %v1370, -100.0
    %v1401 = vmul.f32 %v1375, -100.0
    %v1402 = vmul.f32 %v1380, -100.0
    %v1403 = vmul.f32 %v1385, -100.0
    %v1404 = vmul.f32 %v1390, -100.0
    %v1405 = vmul.f32 %v1395, -100.0
    %v1406 = vadd.f32 %v61, %v1398
    %v1407 = vadd.f32 %v62, %v1399
    %v1408 = vadd.f32 %v63, %v1400
    %v1409 = vadd.f32 %v64, %v1401
    %v1410 = vadd.f32 %v65, %v1402
    %v1411 = vadd.f32 %v66, %v1403
    %v1412 = vadd.f32 %v67, %v1404
    %v1413 = vadd.f32 %v68, %v1405
    %v1414 = vsel %vm77, %v1406, -inf
    %1415 = vmax.xlane.f32.xlu0 %v1414
    %v1416 = vpop.xlane.xlu0 %1415
    %v1417 = vsel %vm77, %v1407, -inf
    %1418 = vmax.xlane.f32.xlu0 %v1417
    %v1419 = vpop.xlane.xlu0 %1418
    %v1420 = vsel %vm77, %v1408, -inf
    %1421 = vmax.xlane.f32.xlu0 %v1420
    %v1422 = vpop.xlane.xlu0 %1421
    %v1423 = vsel %vm77, %v1409, -inf
    %1424 = vmax.xlane.f32.xlu0 %v1423
    %v1425 = vpop.xlane.xlu0 %1424
    %v1426 = vsel %vm77, %v1410, -inf
    %1427 = vmax.xlane.f32.xlu0 %v1426
    %v1428 = vpop.xlane.xlu0 %1427
    %v1429 = vsel %vm77, %v1411, -inf
    %1430 = vmax.xlane.f32.xlu0 %v1429
    %v1431 = vpop.xlane.xlu0 %1430
    %v1432 = vsel %vm77, %v1412, -inf
    %1433 = vmax.xlane.f32.xlu0 %v1432
    %v1434 = vpop.xlane.xlu0 %1433
    %v1435 = vsel %vm77, %v1413, -inf
    %1436 = vmax.xlane.f32.xlu0 %v1435
    %v1437 = vpop.xlane.xlu0 %1436
    %v1438 = vsub.f32 %v1406, %v1416
    %v1439 = vsub.f32 %v1407, %v1419
    %v1440 = vsub.f32 %v1408, %v1422
    %v1441 = vsub.f32 %v1409, %v1425
    %v1442 = vsub.f32 %v1410, %v1428
    %v1443 = vsub.f32 %v1411, %v1431
    %v1444 = vsub.f32 %v1412, %v1434
    %v1445 = vsub.f32 %v1413, %v1437
    %v1446 = vmul.f32 %v1438, 1.442695
    %v1447 = vpow.pop %v1446
    %v1448 = vmul.f32 %v1439, 1.442695
    %v1449 = vpow.pop %v1448
    %v1450 = vmul.f32 %v1440, 1.442695
    %v1451 = vpow.pop %v1450
    %v1452 = vmul.f32 %v1441, 1.442695
    %v1453 = vpow.pop %v1452
    %v1454 = vmul.f32 %v1442, 1.442695
    %v1455 = vpow.pop %v1454
    %v1456 = vmul.f32 %v1443, 1.442695
    %v1457 = vpow.pop %v1456
    %v1458 = vmul.f32 %v1444, 1.442695
    %v1459 = vpow.pop %v1458
    %v1460 = vmul.f32 %v1445, 1.442695
    %v1461 = vpow.pop %v1460
    %v1462 = vsel %vm77, %v1447, 0.0
    %1463 = vadd.xlane.f32.xlu0 %v1462
    %v1464 = vpop.xlane.xlu0 %1463
    %v1465 = vsel %vm77, %v1449, 0.0
    %1466 = vadd.xlane.f32.xlu0 %v1465
    %v1467 = vpop.xlane.xlu0 %1466
    %v1468 = vsel %vm77, %v1451, 0.0
    %1469 = vadd.xlane.f32.xlu0 %v1468
    %v1470 = vpop.xlane.xlu0 %1469
    %v1471 = vsel %vm77, %v1453, 0.0
    %1472 = vadd.xlane.f32.xlu0 %v1471
    %v1473 = vpop.xlane.xlu0 %1472
    %v1474 = vsel %vm77, %v1455, 0.0
    %1475 = vadd.xlane.f32.xlu0 %v1474
    %v1476 = vpop.xlane.xlu0 %1475
    %v1477 = vsel %vm77, %v1457, 0.0
    %1478 = vadd.xlane.f32.xlu0 %v1477
    %v1479 = vpop.xlane.xlu0 %1478
    %v1480 = vsel %vm77, %v1459, 0.0
    %1481 = vadd.xlane.f32.xlu0 %v1480
    %v1482 = vpop.xlane.xlu0 %1481
    %v1483 = vsel %vm77, %v1461, 0.0
    %1484 = vadd.xlane.f32.xlu0 %v1483
    %v1485 = vpop.xlane.xlu0 %1484
    %v1486 = vrcp.pop %v1464
    %v1487 = vmul.f32 %v1447, %v1486
    %v1488 = vrcp.pop %v1467
    %v1489 = vmul.f32 %v1449, %v1488
    %v1490 = vrcp.pop %v1470
    %v1491 = vmul.f32 %v1451, %v1490
    %v1492 = vrcp.pop %v1473
    %v1493 = vmul.f32 %v1453, %v1492
    %v1494 = vrcp.pop %v1476
    %v1495 = vmul.f32 %v1455, %v1494
    %v1496 = vrcp.pop %v1479
    %v1497 = vmul.f32 %v1457, %v1496
    %v1498 = vrcp.pop %v1482
    %v1499 = vmul.f32 %v1459, %v1498
    %v1500 = vrcp.pop %v1485
    %v1501 = vmul.f32 %v1461, %v1500
    %v1503 = vsel %vm77, %v1487, 0
    %v1506 = vsel %vm77, %v1489, 0
    %v1509 = vsel %vm77, %v1491, 0
    %v1512 = vsel %vm77, %v1493, 0
    %v1515 = vsel %vm77, %v1495, 0
    %v1518 = vsel %vm77, %v1497, 0
    %v1521 = vsel %vm77, %v1499, 0
    %v1524 = vsel %vm77, %v1501, 0
    %1526 = vmatprep.subr.mxu0 %v167
    %1527 = vmatpush1.msra.mxu0 %v166
    %1528 = vmatprep.subr.mxu0 0.0
    %1529 = vmatpush1.msra.mxu0 0.0
    %1530 = vmatprep.subr.mxu0 0.0
    %1531 = vmatpush1.msra.mxu0 0.0
    %1532 = vmatprep.subr.mxu0 0.0
    %1533 = vmatpush1.msra.mxu0 0.0
    %1534 = vmatprep.subr.mxu0 0.0
    %1535 = vmatpush1.msra.mxu0 0.0
    %1536 = vmatprep.subr.mxu0 0.0
    %1537 = vmatpush1.msra.mxu0 0.0
    %1538 = vmatprep.subr.mxu0 0.0
    %1539 = vmatpush1.msra.mxu0 0.0
    %1540 = vmatprep.subr.mxu0 0.0
    %1541 = vmatpush1.msra.mxu0 0.0
    %1542 = vmatprep.subr.mxu0 0.0
    %1543 = vmatpush1.msra.mxu0 0.0
    %1544 = vmatprep.subr.mxu0 0.0
    %1545 = vmatpush1.msra.mxu0 0.0
    %1546 = vmatprep.subr.mxu0 0.0
    %1547 = vmatpush1.msra.mxu0 0.0
    %1548 = vmatprep.subr.mxu0 0.0
    %1549 = vmatpush1.msra.mxu0 0.0
    %1550 = vmatprep.subr.mxu0 0.0
    %1551 = vmatpush1.msra.mxu0 0.0
    %1552 = vmatprep.subr.mxu0 0.0
    %1553 = vmatpush1.msra.mxu0 0.0
    %1554 = vmatprep.subr.mxu0 0.0
    %1555 = vmatpush1.msra.mxu0 0.0
    %1556 = vmatprep.subr.mxu0 0.0
    %1557 = vmatpush1.msra.mxu0 0.0
    %1558 = vmatprep.subr.mxu0 0.0
    %1559 = vmatpush1.msra.mxu0 0.0
    %1560 = vmatprep.subr.mxu0 0.0
    %1561 = vmatpush1.msra.mxu0 0.0
    %1562 = vmatprep.subr.mxu0 0.0
    %1563 = vmatpush1.msra.mxu0 0.0
    %1564 = vmatprep.subr.mxu0 0.0
    %1565 = vmatpush1.msra.mxu0 0.0
    %1566 = vmatprep.subr.mxu0 0.0
    %1567 = vmatpush1.msra.mxu0 0.0
    %1568 = vmatprep.subr.mxu0 0.0
    %1569 = vmatpush1.msra.mxu0 0.0
    %1570 = vmatprep.subr.mxu0 0.0
    %1571 = vmatpush1.msra.mxu0 0.0
    %1572 = vmatprep.subr.mxu0 0.0
    %1573 = vmatpush1.msra.mxu0 0.0
    %1574 = vmatprep.subr.mxu0 0.0
    %1575 = vmatpush1.msra.mxu0 0.0
    %1576 = vmatprep.subr.mxu0 0.0
    %1577 = vmatpush1.msra.mxu0 0.0
    %1578 = vmatprep.subr.mxu0 0.0
    %1579 = vmatpush1.msra.mxu0 0.0
    %1580 = vmatprep.subr.mxu0 0.0
    %1581 = vmatpush1.msra.mxu0 0.0
    %1582 = vmatprep.subr.mxu0 0.0
    %1583 = vmatpush1.msra.mxu0 0.0
    %1584 = vmatprep.subr.mxu0 0.0
    %1585 = vmatpush1.msra.mxu0 0.0
    %1586 = vmatprep.subr.mxu0 0.0
    %1587 = vmatpush1.msra.mxu0 0.0
    %1588 = vmatprep.subr.mxu0 0.0
    %1589 = vmatpush1.msra.mxu0 0.0
    %1590 = vmatprep.mubr.f32.mxu0 0.0
    %1591 = vmatmul.mubr.f32.gmra.mrb[0].mxu0 %v1503
    %v1592 = vpop.f32.mrb[0].mxu0
    %v1593 = vadd.f32 0.0, %v1592
    %v1594 = vpop.f32.mrb[0].mxu0
    %v1595 = vadd.f32 0.0, %v1594
    %1596 = vmatprep.mubr.f32.mxu0 0.0
    %1597 = vmatmul.mubr.f32.gmra.mrb[0].mxu0 %v1506
    %v1598 = vpop.f32.mrb[0].mxu0
    %v1599 = vadd.f32 0.0, %v1598
    %v1600 = vpop.f32.mrb[0].mxu0
    %v1601 = vadd.f32 0.0, %v1600
    %1602 = vmatprep.mubr.f32.mxu0 0.0
    %1603 = vmatmul.mubr.f32.gmra.mrb[0].mxu0 %v1509
    %v1604 = vpop.f32.mrb[0].mxu0
    %v1605 = vadd.f32 0.0, %v1604
    %v1606 = vpop.f32.mrb[0].mxu0
    %v1607 = vadd.f32 0.0, %v1606
    %1608 = vmatprep.mubr.f32.mxu0 0.0
    %1609 = vmatmul.mubr.f32.gmra.mrb[0].mxu0 %v1512
    %v1610 = vpop.f32.mrb[0].mxu0
    %v1611 = vadd.f32 0.0, %v1610
    %v1612 = vpop.f32.mrb[0].mxu0
    %v1613 = vadd.f32 0.0, %v1612
    %1614 = vmatprep.mubr.f32.mxu0 0.0
    %1615 = vmatmul.mubr.f32.gmra.mrb[0].mxu0 %v1515
    %v1616 = vpop.f32.mrb[0].mxu0
    %v1617 = vadd.f32 0.0, %v1616
    %v1618 = vpop.f32.mrb[0].mxu0
    %v1619 = vadd.f32 0.0, %v1618
    %1620 = vmatprep.mubr.f32.mxu0 0.0
    %1621 = vmatmul.mubr.f32.gmra.mrb[0].mxu0 %v1518
    %v1622 = vpop.f32.mrb[0].mxu0
    %v1623 = vadd.f32 0.0, %v1622
    %v1624 = vpop.f32.mrb[0].mxu0
    %v1625 = vadd.f32 0.0, %v1624
    %1626 = vmatprep.mubr.f32.mxu0 0.0
    %1627 = vmatmul.mubr.f32.gmra.mrb[0].mxu0 %v1521
    %v1628 = vpop.f32.mrb[0].mxu0
    %v1629 = vadd.f32 0.0, %v1628
    %v1630 = vpop.f32.mrb[0].mxu0
    %v1631 = vadd.f32 0.0, %v1630
    %1632 = vmatprep.mubr.f32.mxu0 0.0
    %1633 = vmatmul.mubr.f32.gmra.mrb[0].mxu0 %v1524
    %v1634 = vpop.f32.mrb[0].mxu0
    %v1635 = vadd.f32 0.0, %v1634
    %v1636 = vpop.f32.mrb[0].mxu0
    %v1637 = vadd.f32 0.0, %v1636
    %1638 = vdwg.mxu0
    %1639 = vmatprep.subr.mxu0 %v169
    %1640 = vmatpush1.msra.mxu0 %v168
    %1641 = vmatprep.subr.mxu0 0.0
    %1642 = vmatpush1.msra.mxu0 0.0
    %1643 = vmatprep.subr.mxu0 0.0
    %1644 = vmatpush1.msra.mxu0 0.0
    %1645 = vmatprep.subr.mxu0 0.0
    %1646 = vmatpush1.msra.mxu0 0.0
    %1647 = vmatprep.subr.mxu0 0.0
    %1648 = vmatpush1.msra.mxu0 0.0
    %1649 = vmatprep.subr.mxu0 0.0
    %1650 = vmatpush1.msra.mxu0 0.0
    %1651 = vmatprep.subr.mxu0 0.0
    %1652 = vmatpush1.msra.mxu0 0.0
    %1653 = vmatprep.subr.mxu0 0.0
    %1654 = vmatpush1.msra.mxu0 0.0
    %1655 = vmatprep.subr.mxu0 0.0
    %1656 = vmatpush1.msra.mxu0 0.0
    %1657 = vmatprep.subr.mxu0 0.0
    %1658 = vmatpush1.msra.mxu0 0.0
    %1659 = vmatprep.subr.mxu0 0.0
    %1660 = vmatpush1.msra.mxu0 0.0
    %1661 = vmatprep.subr.mxu0 0.0
    %1662 = vmatpush1.msra.mxu0 0.0
    %1663 = vmatprep.subr.mxu0 0.0
    %1664 = vmatpush1.msra.mxu0 0.0
    %1665 = vmatprep.subr.mxu0 0.0
    %1666 = vmatpush1.msra.mxu0 0.0
    %1667 = vmatprep.subr.mxu0 0.0
    %1668 = vmatpush1.msra.mxu0 0.0
    %1669 = vmatprep.subr.mxu0 0.0
    %1670 = vmatpush1.msra.mxu0 0.0
    %1671 = vmatprep.subr.mxu0 0.0
    %1672 = vmatpush1.msra.mxu0 0.0
    %1673 = vmatprep.subr.mxu0 0.0
    %1674 = vmatpush1.msra.mxu0 0.0
    %1675 = vmatprep.subr.mxu0 0.0
    %1676 = vmatpush1.msra.mxu0 0.0
    %1677 = vmatprep.subr.mxu0 0.0
    %1678 = vmatpush1.msra.mxu0 0.0
    %1679 = vmatprep.subr.mxu0 0.0
    %1680 = vmatpush1.msra.mxu0 0.0
    %1681 = vmatprep.subr.mxu0 0.0
    %1682 = vmatpush1.msra.mxu0 0.0
    %1683 = vmatprep.subr.mxu0 0.0
    %1684 = vmatpush1.msra.mxu0 0.0
    %1685 = vmatprep.subr.mxu0 0.0
    %1686 = vmatpush1.msra.mxu0 0.0
    %1687 = vmatprep.subr.mxu0 0.0
    %1688 = vmatpush1.msra.mxu0 0.0
    %1689 = vmatprep.subr.mxu0 0.0
    %1690 = vmatpush1.msra.mxu0 0.0
    %1691 = vmatprep.subr.mxu0 0.0
    %1692 = vmatpush1.msra.mxu0 0.0
    %1693 = vmatprep.subr.mxu0 0.0
    %1694 = vmatpush1.msra.mxu0 0.0
    %1695 = vmatprep.subr.mxu0 0.0
    %1696 = vmatpush1.msra.mxu0 0.0
    %1697 = vmatprep.subr.mxu0 0.0
    %1698 = vmatpush1.msra.mxu0 0.0
    %1699 = vmatprep.subr.mxu0 0.0
    %1700 = vmatpush1.msra.mxu0 0.0
    %1701 = vmatprep.subr.mxu0 0.0
    %1702 = vmatpush1.msra.mxu0 0.0
    %1703 = vmatprep.mubr.f32.mxu0 0.0
    %1704 = vmatmul.mubr.f32.gmra.mrb[0].mxu0 %v1503
    %v1705 = vpop.f32.mrb[0].mxu0
    %v1706 = vadd.f32 0.0, %v1705
    %v1707 = vpop.f32.mrb[0].mxu0
    %v1708 = vadd.f32 0.0, %v1707
    %1709 = vmatprep.mubr.f32.mxu0 0.0
    %1710 = vmatmul.mubr.f32.gmra.mrb[0].mxu0 %v1506
    %v1711 = vpop.f32.mrb[0].mxu0
    %v1712 = vadd.f32 0.0, %v1711
    %v1713 = vpop.f32.mrb[0].mxu0
    %v1714 = vadd.f32 0.0, %v1713
    %1715 = vmatprep.mubr.f32.mxu0 0.0
    %1716 = vmatmul.mubr.f32.gmra.mrb[0].mxu0 %v1509
    %v1717 = vpop.f32.mrb[0].mxu0
    %v1718 = vadd.f32 0.0, %v1717
    %v1719 = vpop.f32.mrb[0].mxu0
    %v1720 = vadd.f32 0.0, %v1719
    %1721 = vmatprep.mubr.f32.mxu0 0.0
    %1722 = vmatmul.mubr.f32.gmra.mrb[0].mxu0 %v1512
    %v1723 = vpop.f32.mrb[0].mxu0
    %v1724 = vadd.f32 0.0, %v1723
    %v1725 = vpop.f32.mrb[0].mxu0
    %v1726 = vadd.f32 0.0, %v1725
    %1727 = vmatprep.mubr.f32.mxu0 0.0
    %1728 = vmatmul.mubr.f32.gmra.mrb[0].mxu0 %v1515
    %v1729 = vpop.f32.mrb[0].mxu0
    %v1730 = vadd.f32 0.0, %v1729
    %v1731 = vpop.f32.mrb[0].mxu0
    %v1732 = vadd.f32 0.0, %v1731
    %1733 = vmatprep.mubr.f32.mxu0 0.0
    %1734 = vmatmul.mubr.f32.gmra.mrb[0].mxu0 %v1518
    %v1735 = vpop.f32.mrb[0].mxu0
    %v1736 = vadd.f32 0.0, %v1735
    %v1737 = vpop.f32.mrb[0].mxu0
    %v1738 = vadd.f32 0.0, %v1737
    %1739 = vmatprep.mubr.f32.mxu0 0.0
    %1740 = vmatmul.mubr.f32.gmra.mrb[0].mxu0 %v1521
    %v1741 = vpop.f32.mrb[0].mxu0
    %v1742 = vadd.f32 0.0, %v1741
    %v1743 = vpop.f32.mrb[0].mxu0
    %v1744 = vadd.f32 0.0, %v1743
    %1745 = vmatprep.mubr.f32.mxu0 0.0
    %1746 = vmatmul.mubr.f32.gmra.mrb[0].mxu0 %v1524
    %v1747 = vpop.f32.mrb[0].mxu0
    %v1748 = vadd.f32 0.0, %v1747
    %v1749 = vpop.f32.mrb[0].mxu0
    %v1750 = vadd.f32 0.0, %v1749
    %1751 = vdwg.mxu0
    %v1752 = vmul.f32 %v1593, %v420
    %v1753 = vmul.f32 %v1595, %v421
    %v1754 = vmul.f32 %v1706, %v422
    %v1755 = vmul.f32 %v1708, %v423
    %v1756 = vmul.f32 %v1599, %v424
    %v1757 = vmul.f32 %v1601, %v425
    %v1758 = vmul.f32 %v1712, %v426
    %v1759 = vmul.f32 %v1714, %v427
    %v1760 = vmul.f32 %v1605, %v428
    %v1761 = vmul.f32 %v1607, %v429
    %v1762 = vmul.f32 %v1718, %v430
    %v1763 = vmul.f32 %v1720, %v431
    %v1764 = vmul.f32 %v1611, %v432
    %v1765 = vmul.f32 %v1613, %v433
    %v1766 = vmul.f32 %v1724, %v434
    %v1767 = vmul.f32 %v1726, %v435
    %v1768 = vmul.f32 %v1617, %v436
    %v1769 = vmul.f32 %v1619, %v437
    %v1770 = vmul.f32 %v1730, %v438
    %v1771 = vmul.f32 %v1732, %v439
    %v1772 = vmul.f32 %v1623, %v440
    %v1773 = vmul.f32 %v1625, %v441
    %v1774 = vmul.f32 %v1736, %v442
    %v1775 = vmul.f32 %v1738, %v443
    %v1776 = vmul.f32 %v1629, %v444
    %v1777 = vmul.f32 %v1631, %v445
    %v1778 = vmul.f32 %v1742, %v446
    %v1779 = vmul.f32 %v1744, %v447
    %v1780 = vmul.f32 %v1635, %v448
    %v1781 = vmul.f32 %v1637, %v449
    %v1782 = vmul.f32 %v1748, %v450
    %v1783 = vmul.f32 %v1750, %v451
    %v1784 = vadd.f32 %v1752, %v1756
    %v1785 = vadd.f32 %v1784, %v1760
    %v1786 = vadd.f32 %v1785, %v1764
    %v1787 = vadd.f32 %v1786, %v1768
    %v1788 = vadd.f32 %v1787, %v1772
    %v1789 = vadd.f32 %v1788, %v1776
    %v1790 = vadd.f32 %v1789, %v1780
    %v1791 = vrot.slane %v1790, 4
    %v1792 = vadd.f32 %v1790, %v1791
    %v1793 = vrot.slane %v1792, 2
    %v1794 = vadd.f32 %v1792, %v1793
    %v1795 = vrot.slane %v1794, 1
    %v1796 = vadd.f32 %v1794, %v1795
    %v1797 = vadd.f32 %v1753, %v1757
    %v1798 = vadd.f32 %v1797, %v1761
    %v1799 = vadd.f32 %v1798, %v1765
    %v1800 = vadd.f32 %v1799, %v1769
    %v1801 = vadd.f32 %v1800, %v1773
    %v1802 = vadd.f32 %v1801, %v1777
    %v1803 = vadd.f32 %v1802, %v1781
    %v1804 = vrot.slane %v1803, 4
    %v1805 = vadd.f32 %v1803, %v1804
    %v1806 = vrot.slane %v1805, 2
    %v1807 = vadd.f32 %v1805, %v1806
    %v1808 = vrot.slane %v1807, 1
    %v1809 = vadd.f32 %v1807, %v1808
    %v1810 = vadd.f32 %v1754, %v1758
    %v1811 = vadd.f32 %v1810, %v1762
    %v1812 = vadd.f32 %v1811, %v1766
    %v1813 = vadd.f32 %v1812, %v1770
    %v1814 = vadd.f32 %v1813, %v1774
    %v1815 = vadd.f32 %v1814, %v1778
    %v1816 = vadd.f32 %v1815, %v1782
    %v1817 = vrot.slane %v1816, 4
    %v1818 = vadd.f32 %v1816, %v1817
    %v1819 = vrot.slane %v1818, 2
    %v1820 = vadd.f32 %v1818, %v1819
    %v1821 = vrot.slane %v1820, 1
    %v1822 = vadd.f32 %v1820, %v1821
    %v1823 = vadd.f32 %v1755, %v1759
    %v1824 = vadd.f32 %v1823, %v1763
    %v1825 = vadd.f32 %v1824, %v1767
    %v1826 = vadd.f32 %v1825, %v1771
    %v1827 = vadd.f32 %v1826, %v1775
    %v1828 = vadd.f32 %v1827, %v1779
    %v1829 = vadd.f32 %v1828, %v1783
    %v1830 = vrot.slane %v1829, 4
    %v1831 = vadd.f32 %v1829, %v1830
    %v1832 = vrot.slane %v1831, 2
    %v1833 = vadd.f32 %v1831, %v1832
    %v1834 = vrot.slane %v1833, 1
    %v1835 = vadd.f32 %v1833, %v1834
    %1836 = vmatprep.subr.mxu0 %v537
    %1837 = vmatpush1.msra.mxu0 %v536
    %1838 = vmatprep.subr.mxu0 %v541
    %1839 = vmatpush1.msra.mxu0 %v540
    %1840 = vmatprep.subr.mxu0 %v545
    %1841 = vmatpush1.msra.mxu0 %v544
    %1842 = vmatprep.subr.mxu0 %v549
    %1843 = vmatpush1.msra.mxu0 %v548
    %1844 = vmatprep.subr.mxu0 %v553
    %1845 = vmatpush1.msra.mxu0 %v552
    %1846 = vmatprep.subr.mxu0 %v557
    %1847 = vmatpush1.msra.mxu0 %v556
    %1848 = vmatprep.subr.mxu0 %v561
    %1849 = vmatpush1.msra.mxu0 %v560
    %1850 = vmatprep.subr.mxu0 %v565
    %1851 = vmatpush1.msra.mxu0 %v564
    %1852 = vmatprep.subr.mxu0 %v569
    %1853 = vmatpush1.msra.mxu0 %v568
    %1854 = vmatprep.subr.mxu0 %v573
    %1855 = vmatpush1.msra.mxu0 %v572
    %1856 = vmatprep.subr.mxu0 %v577
    %1857 = vmatpush1.msra.mxu0 %v576
    %1858 = vmatprep.subr.mxu0 %v581
    %1859 = vmatpush1.msra.mxu0 %v580
    %1860 = vmatprep.subr.mxu0 %v585
    %1861 = vmatpush1.msra.mxu0 %v584
    %1862 = vmatprep.subr.mxu0 %v589
    %1863 = vmatpush1.msra.mxu0 %v588
    %1864 = vmatprep.subr.mxu0 %v593
    %1865 = vmatpush1.msra.mxu0 %v592
    %1866 = vmatprep.subr.mxu0 %v597
    %1867 = vmatpush1.msra.mxu0 %v596
    %1868 = vmatprep.subr.mxu0 %v601
    %1869 = vmatpush1.msra.mxu0 %v600
    %1870 = vmatprep.subr.mxu0 %v605
    %1871 = vmatpush1.msra.mxu0 %v604
    %1872 = vmatprep.subr.mxu0 %v609
    %1873 = vmatpush1.msra.mxu0 %v608
    %1874 = vmatprep.subr.mxu0 %v613
    %1875 = vmatpush1.msra.mxu0 %v612
    %1876 = vmatprep.subr.mxu0 %v617
    %1877 = vmatpush1.msra.mxu0 %v616
    %1878 = vmatprep.subr.mxu0 %v621
    %1879 = vmatpush1.msra.mxu0 %v620
    %1880 = vmatprep.subr.mxu0 %v625
    %1881 = vmatpush1.msra.mxu0 %v624
    %1882 = vmatprep.subr.mxu0 %v629
    %1883 = vmatpush1.msra.mxu0 %v628
    %1884 = vmatprep.subr.mxu0 %v633
    %1885 = vmatpush1.msra.mxu0 %v632
    %1886 = vmatprep.subr.mxu0 %v637
    %1887 = vmatpush1.msra.mxu0 %v636
    %1888 = vmatprep.subr.mxu0 %v641
    %1889 = vmatpush1.msra.mxu0 %v640
    %1890 = vmatprep.subr.mxu0 %v645
    %1891 = vmatpush1.msra.mxu0 %v644
    %1892 = vmatprep.subr.mxu0 %v649
    %1893 = vmatpush1.msra.mxu0 %v648
    %1894 = vmatprep.subr.mxu0 %v653
    %1895 = vmatpush1.msra.mxu0 %v652
    %1896 = vmatprep.subr.mxu0 %v657
    %1897 = vmatpush1.msra.mxu0 %v656
    %1898 = vmatprep.subr.mxu0 %v661
    %1899 = vmatpush1.msra.mxu0 %v660
    %1900 = vmatprep.mubr.f32.mxu0 %v1809
    %1901 = vmatmul.mubr.f32.gmra.mrb[0].mxu0 %v1796
    %v1902 = vpop.f32.mrb[0].mxu0
    %v1903 = vadd.f32 0.0, %v1902
    %v1904 = vpop.f32.mrb[0].mxu0
    %v1905 = vadd.f32 0.0, %v1904
    %1906 = vdwg.mxu0
    %1907 = vmatprep.subr.mxu0 %v665
    %1908 = vmatpush1.msra.mxu0 %v664
    %1909 = vmatprep.subr.mxu0 %v669
    %1910 = vmatpush1.msra.mxu0 %v668
    %1911 = vmatprep.subr.mxu0 %v673
    %1912 = vmatpush1.msra.mxu0 %v672
    %1913 = vmatprep.subr.mxu0 %v677
    %1914 = vmatpush1.msra.mxu0 %v676
    %1915 = vmatprep.subr.mxu0 %v681
    %1916 = vmatpush1.msra.mxu0 %v680
    %1917 = vmatprep.subr.mxu0 %v685
    %1918 = vmatpush1.msra.mxu0 %v684
    %1919 = vmatprep.subr.mxu0 %v689
    %1920 = vmatpush1.msra.mxu0 %v688
    %1921 = vmatprep.subr.mxu0 %v693
    %1922 = vmatpush1.msra.mxu0 %v692
    %1923 = vmatprep.subr.mxu0 %v697
    %1924 = vmatpush1.msra.mxu0 %v696
    %1925 = vmatprep.subr.mxu0 %v701
    %1926 = vmatpush1.msra.mxu0 %v700
    %1927 = vmatprep.subr.mxu0 %v705
    %1928 = vmatpush1.msra.mxu0 %v704
    %1929 = vmatprep.subr.mxu0 %v709
    %1930 = vmatpush1.msra.mxu0 %v708
    %1931 = vmatprep.subr.mxu0 %v713
    %1932 = vmatpush1.msra.mxu0 %v712
    %1933 = vmatprep.subr.mxu0 %v717
    %1934 = vmatpush1.msra.mxu0 %v716
    %1935 = vmatprep.subr.mxu0 %v721
    %1936 = vmatpush1.msra.mxu0 %v720
    %1937 = vmatprep.subr.mxu0 %v725
    %1938 = vmatpush1.msra.mxu0 %v724
    %1939 = vmatprep.subr.mxu0 %v729
    %1940 = vmatpush1.msra.mxu0 %v728
    %1941 = vmatprep.subr.mxu0 %v733
    %1942 = vmatpush1.msra.mxu0 %v732
    %1943 = vmatprep.subr.mxu0 %v737
    %1944 = vmatpush1.msra.mxu0 %v736
    %1945 = vmatprep.subr.mxu0 %v741
    %1946 = vmatpush1.msra.mxu0 %v740
    %1947 = vmatprep.subr.mxu0 %v745
    %1948 = vmatpush1.msra.mxu0 %v744
    %1949 = vmatprep.subr.mxu0 %v749
    %1950 = vmatpush1.msra.mxu0 %v748
    %1951 = vmatprep.subr.mxu0 %v753
    %1952 = vmatpush1.msra.mxu0 %v752
    %1953 = vmatprep.subr.mxu0 %v757
    %1954 = vmatpush1.msra.mxu0 %v756
    %1955 = vmatprep.subr.mxu0 %v761
    %1956 = vmatpush1.msra.mxu0 %v760
    %1957 = vmatprep.subr.mxu0 %v765
    %1958 = vmatpush1.msra.mxu0 %v764
    %1959 = vmatprep.subr.mxu0 %v769
    %1960 = vmatpush1.msra.mxu0 %v768
    %1961 = vmatprep.subr.mxu0 %v773
    %1962 = vmatpush1.msra.mxu0 %v772
    %1963 = vmatprep.subr.mxu0 %v777
    %1964 = vmatpush1.msra.mxu0 %v776
    %1965 = vmatprep.subr.mxu0 %v781
    %1966 = vmatpush1.msra.mxu0 %v780
    %1967 = vmatprep.subr.mxu0 %v785
    %1968 = vmatpush1.msra.mxu0 %v784
    %1969 = vmatprep.subr.mxu0 %v789
    %1970 = vmatpush1.msra.mxu0 %v788
    %1971 = vmatprep.mubr.f32.mxu0 %v1835
    %1972 = vmatmul.mubr.f32.gmra.mrb[0].mxu0 %v1822
    %v1973 = vpop.f32.mrb[0].mxu0
    %v1974 = vadd.f32 %v1903, %v1973
    %v1975 = vpop.f32.mrb[0].mxu0
    %v1976 = vadd.f32 %v1905, %v1975
    %1977 = vdwg.mxu0
    %1978 = vmatprep.subr.mxu0 %v539
    %1979 = vmatpush1.msra.mxu0 %v538
    %1980 = vmatprep.subr.mxu0 %v543
    %1981 = vmatpush1.msra.mxu0 %v542
    %1982 = vmatprep.subr.mxu0 %v547
    %1983 = vmatpush1.msra.mxu0 %v546
    %1984 = vmatprep.subr.mxu0 %v551
    %1985 = vmatpush1.msra.mxu0 %v550
    %1986 = vmatprep.subr.mxu0 %v555
    %1987 = vmatpush1.msra.mxu0 %v554
    %1988 = vmatprep.subr.mxu0 %v559
    %1989 = vmatpush1.msra.mxu0 %v558
    %1990 = vmatprep.subr.mxu0 %v563
    %1991 = vmatpush1.msra.mxu0 %v562
    %1992 = vmatprep.subr.mxu0 %v567
    %1993 = vmatpush1.msra.mxu0 %v566
    %1994 = vmatprep.subr.mxu0 %v571
    %1995 = vmatpush1.msra.mxu0 %v570
    %1996 = vmatprep.subr.mxu0 %v575
    %1997 = vmatpush1.msra.mxu0 %v574
    %1998 = vmatprep.subr.mxu0 %v579
    %1999 = vmatpush1.msra.mxu0 %v578
    %2000 = vmatprep.subr.mxu0 %v583
    %2001 = vmatpush1.msra.mxu0 %v582
    %2002 = vmatprep.subr.mxu0 %v587
    %2003 = vmatpush1.msra.mxu0 %v586
    %2004 = vmatprep.subr.mxu0 %v591
    %2005 = vmatpush1.msra.mxu0 %v590
    %2006 = vmatprep.subr.mxu0 %v595
    %2007 = vmatpush1.msra.mxu0 %v594
    %2008 = vmatprep.subr.mxu0 %v599
    %2009 = vmatpush1.msra.mxu0 %v598
    %2010 = vmatprep.subr.mxu0 %v603
    %2011 = vmatpush1.msra.mxu0 %v602
    %2012 = vmatprep.subr.mxu0 %v607
    %2013 = vmatpush1.msra.mxu0 %v606
    %2014 = vmatprep.subr.mxu0 %v611
    %2015 = vmatpush1.msra.mxu0 %v610
    %2016 = vmatprep.subr.mxu0 %v615
    %2017 = vmatpush1.msra.mxu0 %v614
    %2018 = vmatprep.subr.mxu0 %v619
    %2019 = vmatpush1.msra.mxu0 %v618
    %2020 = vmatprep.subr.mxu0 %v623
    %2021 = vmatpush1.msra.mxu0 %v622
    %2022 = vmatprep.subr.mxu0 %v627
    %2023 = vmatpush1.msra.mxu0 %v626
    %2024 = vmatprep.subr.mxu0 %v631
    %2025 = vmatpush1.msra.mxu0 %v630
    %2026 = vmatprep.subr.mxu0 %v635
    %2027 = vmatpush1.msra.mxu0 %v634
    %2028 = vmatprep.subr.mxu0 %v639
    %2029 = vmatpush1.msra.mxu0 %v638
    %2030 = vmatprep.subr.mxu0 %v643
    %2031 = vmatpush1.msra.mxu0 %v642
    %2032 = vmatprep.subr.mxu0 %v647
    %2033 = vmatpush1.msra.mxu0 %v646
    %2034 = vmatprep.subr.mxu0 %v651
    %2035 = vmatpush1.msra.mxu0 %v650
    %2036 = vmatprep.subr.mxu0 %v655
    %2037 = vmatpush1.msra.mxu0 %v654
    %2038 = vmatprep.subr.mxu0 %v659
    %2039 = vmatpush1.msra.mxu0 %v658
    %2040 = vmatprep.subr.mxu0 %v663
    %2041 = vmatpush1.msra.mxu0 %v662
    %2042 = vmatprep.mubr.f32.mxu0 %v1809
    %2043 = vmatmul.mubr.f32.gmra.mrb[0].mxu0 %v1796
    %v2044 = vpop.f32.mrb[0].mxu0
    %v2045 = vadd.f32 0.0, %v2044
    %v2046 = vpop.f32.mrb[0].mxu0
    %v2047 = vadd.f32 0.0, %v2046
    %2048 = vdwg.mxu0
    %2049 = vmatprep.subr.mxu0 %v667
    %2050 = vmatpush1.msra.mxu0 %v666
    %2051 = vmatprep.subr.mxu0 %v671
    %2052 = vmatpush1.msra.mxu0 %v670
    %2053 = vmatprep.subr.mxu0 %v675
    %2054 = vmatpush1.msra.mxu0 %v674
    %2055 = vmatprep.subr.mxu0 %v679
    %2056 = vmatpush1.msra.mxu0 %v678
    %2057 = vmatprep.subr.mxu0 %v683
    %2058 = vmatpush1.msra.mxu0 %v682
    %2059 = vmatprep.subr.mxu0 %v687
    %2060 = vmatpush1.msra.mxu0 %v686
    %2061 = vmatprep.subr.mxu0 %v691
    %2062 = vmatpush1.msra.mxu0 %v690
    %2063 = vmatprep.subr.mxu0 %v695
    %2064 = vmatpush1.msra.mxu0 %v694
    %2065 = vmatprep.subr.mxu0 %v699
    %2066 = vmatpush1.msra.mxu0 %v698
    %2067 = vmatprep.subr.mxu0 %v703
    %2068 = vmatpush1.msra.mxu0 %v702
    %2069 = vmatprep.subr.mxu0 %v707
    %2070 = vmatpush1.msra.mxu0 %v706
    %2071 = vmatprep.subr.mxu0 %v711
    %2072 = vmatpush1.msra.mxu0 %v710
    %2073 = vmatprep.subr.mxu0 %v715
    %2074 = vmatpush1.msra.mxu0 %v714
    %2075 = vmatprep.subr.mxu0 %v719
    %2076 = vmatpush1.msra.mxu0 %v718
    %2077 = vmatprep.subr.mxu0 %v723
    %2078 = vmatpush1.msra.mxu0 %v722
    %2079 = vmatprep.subr.mxu0 %v727
    %2080 = vmatpush1.msra.mxu0 %v726
    %2081 = vmatprep.subr.mxu0 %v731
    %2082 = vmatpush1.msra.mxu0 %v730
    %2083 = vmatprep.subr.mxu0 %v735
    %2084 = vmatpush1.msra.mxu0 %v734
    %2085 = vmatprep.subr.mxu0 %v739
    %2086 = vmatpush1.msra.mxu0 %v738
    %2087 = vmatprep.subr.mxu0 %v743
    %2088 = vmatpush1.msra.mxu0 %v742
    %2089 = vmatprep.subr.mxu0 %v747
    %2090 = vmatpush1.msra.mxu0 %v746
    %2091 = vmatprep.subr.mxu0 %v751
    %2092 = vmatpush1.msra.mxu0 %v750
    %2093 = vmatprep.subr.mxu0 %v755
    %2094 = vmatpush1.msra.mxu0 %v754
    %2095 = vmatprep.subr.mxu0 %v759
    %2096 = vmatpush1.msra.mxu0 %v758
    %2097 = vmatprep.subr.mxu0 %v763
    %2098 = vmatpush1.msra.mxu0 %v762
    %2099 = vmatprep.subr.mxu0 %v767
    %2100 = vmatpush1.msra.mxu0 %v766
    %2101 = vmatprep.subr.mxu0 %v771
    %2102 = vmatpush1.msra.mxu0 %v770
    %2103 = vmatprep.subr.mxu0 %v775
    %2104 = vmatpush1.msra.mxu0 %v774
    %2105 = vmatprep.subr.mxu0 %v779
    %2106 = vmatpush1.msra.mxu0 %v778
    %2107 = vmatprep.subr.mxu0 %v783
    %2108 = vmatpush1.msra.mxu0 %v782
    %2109 = vmatprep.subr.mxu0 %v787
    %2110 = vmatpush1.msra.mxu0 %v786
    %2111 = vmatprep.subr.mxu0 %v791
    %2112 = vmatpush1.msra.mxu0 %v790
    %2113 = vmatprep.mubr.f32.mxu0 %v1835
    %2114 = vmatmul.mubr.f32.gmra.mrb[0].mxu0 %v1822
    %v2115 = vpop.f32.mrb[0].mxu0
    %v2116 = vadd.f32 %v2045, %v2115
    %v2117 = vpop.f32.mrb[0].mxu0
    %v2118 = vadd.f32 %v2047, %v2117
    %2119 = vdwg.mxu0
    %v2120 = vlaneseq
    %v2121 = vshrl.u32 %v2120, 7
    %v2122 = vsub.s32 0, %v2121
    %v2123 = vrot.slane %v1974, %v2122
    %v2124 = vlaneseq
    %v2125 = vshrl.u32 %v2124, 7
    %v2126 = vsub.s32 0, %v2125
    %v2127 = vrot.slane %v1976, %v2126
    %v2128 = vlaneseq
    %v2129 = vshrl.u32 %v2128, 7
    %v2130 = vsub.s32 0, %v2129
    %v2131 = vrot.slane %v2116, %v2130
    %v2132 = vlaneseq
    %v2133 = vshrl.u32 %v2132, 7
    %v2134 = vsub.s32 0, %v2133
    %v2135 = vrot.slane %v2118, %v2134
    %v2136 = vmul.f32 %v2123, %v420
    %v2137 = vmul.f32 %v2127, %v421
    %v2138 = vmul.f32 %v2131, %v422
    %v2139 = vmul.f32 %v2135, %v423
    %v2140 = vmul.f32 %v2123, %v424
    %v2141 = vmul.f32 %v2127, %v425
    %v2142 = vmul.f32 %v2131, %v426
    %v2143 = vmul.f32 %v2135, %v427
    %v2144 = vmul.f32 %v2123, %v428
    %v2145 = vmul.f32 %v2127, %v429
    %v2146 = vmul.f32 %v2131, %v430
    %v2147 = vmul.f32 %v2135, %v431
    %v2148 = vmul.f32 %v2123, %v432
    %v2149 = vmul.f32 %v2127, %v433
    %v2150 = vmul.f32 %v2131, %v434
    %v2151 = vmul.f32 %v2135, %v435
    %v2152 = vmul.f32 %v2123, %v436
    %v2153 = vmul.f32 %v2127, %v437
    %v2154 = vmul.f32 %v2131, %v438
    %v2155 = vmul.f32 %v2135, %v439
    %v2156 = vmul.f32 %v2123, %v440
    %v2157 = vmul.f32 %v2127, %v441
    %v2158 = vmul.f32 %v2131, %v442
    %v2159 = vmul.f32 %v2135, %v443
    %v2160 = vmul.f32 %v2123, %v444
    %v2161 = vmul.f32 %v2127, %v445
    %v2162 = vmul.f32 %v2131, %v446
    %v2163 = vmul.f32 %v2135, %v447
    %v2164 = vmul.f32 %v2123, %v448
    %v2165 = vmul.f32 %v2127, %v449
    %v2166 = vmul.f32 %v2131, %v450
    %v2167 = vmul.f32 %v2135, %v451
    %2168 = vmatprep.subr.mxu0 0.0
    %2169 = vmatpush1.msra.mxu0 %v1124
    %2170 = vmatprep.subr.mxu0 0.0
    %2171 = vmatpush1.msra.mxu0 %v1125
    %2172 = vmatprep.subr.mxu0 0.0
    %2173 = vmatpush1.msra.mxu0 %v1126
    %2174 = vmatprep.subr.mxu0 0.0
    %2175 = vmatpush1.msra.mxu0 %v1127
    %2176 = vmatprep.subr.mxu0 0.0
    %2177 = vmatpush1.msra.mxu0 %v1128
    %2178 = vmatprep.subr.mxu0 0.0
    %2179 = vmatpush1.msra.mxu0 %v1129
    %2180 = vmatprep.subr.mxu0 0.0
    %2181 = vmatpush1.msra.mxu0 %v1130
    %2182 = vmatprep.subr.mxu0 0.0
    %2183 = vmatpush1.msra.mxu0 %v1131
    %2184 = vmatprep.subr.mxu0 0.0
    %2185 = vmatpush1.msra.mxu0 %v1132
    %2186 = vmatprep.subr.mxu0 0.0
    %2187 = vmatpush1.msra.mxu0 %v1133
    %2188 = vmatprep.subr.mxu0 0.0
    %2189 = vmatpush1.msra.mxu0 %v1134
    %2190 = vmatprep.subr.mxu0 0.0
    %2191 = vmatpush1.msra.mxu0 %v1135
    %2192 = vmatprep.subr.mxu0 0.0
    %2193 = vmatpush1.msra.mxu0 %v1136
    %2194 = vmatprep.subr.mxu0 0.0
    %2195 = vmatpush1.msra.mxu0 %v1137
    %2196 = vmatprep.subr.mxu0 0.0
    %2197 = vmatpush1.msra.mxu0 %v1138
    %2198 = vmatprep.subr.mxu0 0.0
    %2199 = vmatpush1.msra.mxu0 %v1139
    %2200 = vmatprep.subr.mxu0 0.0
    %2201 = vmatpush1.msra.mxu0 %v1140
    %2202 = vmatprep.subr.mxu0 0.0
    %2203 = vmatpush1.msra.mxu0 %v1141
    %2204 = vmatprep.subr.mxu0 0.0
    %2205 = vmatpush1.msra.mxu0 %v1142
    %2206 = vmatprep.subr.mxu0 0.0
    %2207 = vmatpush1.msra.mxu0 %v1143
    %2208 = vmatprep.subr.mxu0 0.0
    %2209 = vmatpush1.msra.mxu0 %v1144
    %2210 = vmatprep.subr.mxu0 0.0
    %2211 = vmatpush1.msra.mxu0 %v1145
    %2212 = vmatprep.subr.mxu0 0.0
    %2213 = vmatpush1.msra.mxu0 %v1146
    %2214 = vmatprep.subr.mxu0 0.0
    %2215 = vmatpush1.msra.mxu0 %v1147
    %2216 = vmatprep.subr.mxu0 0.0
    %2217 = vmatpush1.msra.mxu0 %v1148
    %2218 = vmatprep.subr.mxu0 0.0
    %2219 = vmatpush1.msra.mxu0 %v1149
    %2220 = vmatprep.subr.mxu0 0.0
    %2221 = vmatpush1.msra.mxu0 %v1150
    %2222 = vmatprep.subr.mxu0 0.0
    %2223 = vmatpush1.msra.mxu0 %v1151
    %2224 = vmatprep.subr.mxu0 0.0
    %2225 = vmatpush1.msra.mxu0 %v1152
    %2226 = vmatprep.subr.mxu0 0.0
    %2227 = vmatpush1.msra.mxu0 %v1153
    %2228 = vmatprep.subr.mxu0 0.0
    %2229 = vmatpush1.msra.mxu0 %v1154
    %2230 = vmatprep.subr.mxu0 0.0
    %2231 = vmatpush1.msra.mxu0 %v1155
    %2232 = vmatprep.mubr.f32.mxu0 %v2137
    %2233 = vmatmul.mubr.f32.gmra.mrb[0].mxu0 %v2136
    %v2234 = vpop.f32.mrb[0].mxu0
    %v2235 = vadd.f32 0.0, %v2234
    %v2236 = vpop.f32.mrb[0].mxu0
    %2237 = vmatprep.mubr.f32.mxu0 %v2141
    %2238 = vmatmul.mubr.f32.gmra.mrb[0].mxu0 %v2140
    %v2239 = vpop.f32.mrb[0].mxu0
    %v2240 = vadd.f32 0.0, %v2239
    %v2241 = vpop.f32.mrb[0].mxu0
    %2242 = vmatprep.mubr.f32.mxu0 %v2145
    %2243 = vmatmul.mubr.f32.gmra.mrb[0].mxu0 %v2144
    %v2244 = vpop.f32.mrb[0].mxu0
    %v2245 = vadd.f32 0.0, %v2244
    %v2246 = vpop.f32.mrb[0].mxu0
    %2247 = vmatprep.mubr.f32.mxu0 %v2149
    %2248 = vmatmul.mubr.f32.gmra.mrb[0].mxu0 %v2148
    %v2249 = vpop.f32.mrb[0].mxu0
    %v2250 = vadd.f32 0.0, %v2249
    %v2251 = vpop.f32.mrb[0].mxu0
    %2252 = vmatprep.mubr.f32.mxu0 %v2153
    %2253 = vmatmul.mubr.f32.gmra.mrb[0].mxu0 %v2152
    %v2254 = vpop.f32.mrb[0].mxu0
    %v2255 = vadd.f32 0.0, %v2254
    %v2256 = vpop.f32.mrb[0].mxu0
    %2257 = vmatprep.mubr.f32.mxu0 %v2157
    %2258 = vmatmul.mubr.f32.gmra.mrb[0].mxu0 %v2156
    %v2259 = vpop.f32.mrb[0].mxu0
    %v2260 = vadd.f32 0.0, %v2259
    %v2261 = vpop.f32.mrb[0].mxu0
    %2262 = vmatprep.mubr.f32.mxu0 %v2161
    %2263 = vmatmul.mubr.f32.gmra.mrb[0].mxu0 %v2160
    %v2264 = vpop.f32.mrb[0].mxu0
    %v2265 = vadd.f32 0.0, %v2264
    %v2266 = vpop.f32.mrb[0].mxu0
    %2267 = vmatprep.mubr.f32.mxu0 %v2165
    %2268 = vmatmul.mubr.f32.gmra.mrb[0].mxu0 %v2164
    %v2269 = vpop.f32.mrb[0].mxu0
    %v2270 = vadd.f32 0.0, %v2269
    %v2271 = vpop.f32.mrb[0].mxu0
    %2272 = vdwg.mxu0
    %2273 = vmatprep.subr.mxu0 0.0
    %2274 = vmatpush1.msra.mxu0 %v1156
    %2275 = vmatprep.subr.mxu0 0.0
    %2276 = vmatpush1.msra.mxu0 %v1157
    %2277 = vmatprep.subr.mxu0 0.0
    %2278 = vmatpush1.msra.mxu0 %v1158
    %2279 = vmatprep.subr.mxu0 0.0
    %2280 = vmatpush1.msra.mxu0 %v1159
    %2281 = vmatprep.subr.mxu0 0.0
    %2282 = vmatpush1.msra.mxu0 %v1160
    %2283 = vmatprep.subr.mxu0 0.0
    %2284 = vmatpush1.msra.mxu0 %v1161
    %2285 = vmatprep.subr.mxu0 0.0
    %2286 = vmatpush1.msra.mxu0 %v1162
    %2287 = vmatprep.subr.mxu0 0.0
    %2288 = vmatpush1.msra.mxu0 %v1163
    %2289 = vmatprep.subr.mxu0 0.0
    %2290 = vmatpush1.msra.mxu0 %v1164
    %2291 = vmatprep.subr.mxu0 0.0
    %2292 = vmatpush1.msra.mxu0 %v1165
    %2293 = vmatprep.subr.mxu0 0.0
    %2294 = vmatpush1.msra.mxu0 %v1166
    %2295 = vmatprep.subr.mxu0 0.0
    %2296 = vmatpush1.msra.mxu0 %v1167
    %2297 = vmatprep.subr.mxu0 0.0
    %2298 = vmatpush1.msra.mxu0 %v1168
    %2299 = vmatprep.subr.mxu0 0.0
    %2300 = vmatpush1.msra.mxu0 %v1169
    %2301 = vmatprep.subr.mxu0 0.0
    %2302 = vmatpush1.msra.mxu0 %v1170
    %2303 = vmatprep.subr.mxu0 0.0
    %2304 = vmatpush1.msra.mxu0 %v1171
    %2305 = vmatprep.subr.mxu0 0.0
    %2306 = vmatpush1.msra.mxu0 %v1172
    %2307 = vmatprep.subr.mxu0 0.0
    %2308 = vmatpush1.msra.mxu0 %v1173
    %2309 = vmatprep.subr.mxu0 0.0
    %2310 = vmatpush1.msra.mxu0 %v1174
    %2311 = vmatprep.subr.mxu0 0.0
    %2312 = vmatpush1.msra.mxu0 %v1175
    %2313 = vmatprep.subr.mxu0 0.0
    %2314 = vmatpush1.msra.mxu0 %v1176
    %2315 = vmatprep.subr.mxu0 0.0
    %2316 = vmatpush1.msra.mxu0 %v1177
    %2317 = vmatprep.subr.mxu0 0.0
    %2318 = vmatpush1.msra.mxu0 %v1178
    %2319 = vmatprep.subr.mxu0 0.0
    %2320 = vmatpush1.msra.mxu0 %v1179
    %2321 = vmatprep.subr.mxu0 0.0
    %2322 = vmatpush1.msra.mxu0 %v1180
    %2323 = vmatprep.subr.mxu0 0.0
    %2324 = vmatpush1.msra.mxu0 %v1181
    %2325 = vmatprep.subr.mxu0 0.0
    %2326 = vmatpush1.msra.mxu0 %v1182
    %2327 = vmatprep.subr.mxu0 0.0
    %2328 = vmatpush1.msra.mxu0 %v1183
    %2329 = vmatprep.subr.mxu0 0.0
    %2330 = vmatpush1.msra.mxu0 %v1184
    %2331 = vmatprep.subr.mxu0 0.0
    %2332 = vmatpush1.msra.mxu0 %v1185
    %2333 = vmatprep.subr.mxu0 0.0
    %2334 = vmatpush1.msra.mxu0 %v1186
    %2335 = vmatprep.subr.mxu0 0.0
    %2336 = vmatpush1.msra.mxu0 %v1187
    %2337 = vmatprep.mubr.f32.mxu0 %v2139
    %2338 = vmatmul.mubr.f32.gmra.mrb[0].mxu0 %v2138
    %v2339 = vpop.f32.mrb[0].mxu0
    %v2340 = vadd.f32 %v2235, %v2339
    %v2341 = vpop.f32.mrb[0].mxu0
    %2342 = vmatprep.mubr.f32.mxu0 %v2143
    %2343 = vmatmul.mubr.f32.gmra.mrb[0].mxu0 %v2142
    %v2344 = vpop.f32.mrb[0].mxu0
    %v2345 = vadd.f32 %v2240, %v2344
    %v2346 = vpop.f32.mrb[0].mxu0
    %2347 = vmatprep.mubr.f32.mxu0 %v2147
    %2348 = vmatmul.mubr.f32.gmra.mrb[0].mxu0 %v2146
    %v2349 = vpop.f32.mrb[0].mxu0
    %v2350 = vadd.f32 %v2245, %v2349
    %v2351 = vpop.f32.mrb[0].mxu0
    %2352 = vmatprep.mubr.f32.mxu0 %v2151
    %2353 = vmatmul.mubr.f32.gmra.mrb[0].mxu0 %v2150
    %v2354 = vpop.f32.mrb[0].mxu0
    %v2355 = vadd.f32 %v2250, %v2354
    %v2356 = vpop.f32.mrb[0].mxu0
    %2357 = vmatprep.mubr.f32.mxu0 %v2155
    %2358 = vmatmul.mubr.f32.gmra.mrb[0].mxu0 %v2154
    %v2359 = vpop.f32.mrb[0].mxu0
    %v2360 = vadd.f32 %v2255, %v2359
    %v2361 = vpop.f32.mrb[0].mxu0
    %2362 = vmatprep.mubr.f32.mxu0 %v2159
    %2363 = vmatmul.mubr.f32.gmra.mrb[0].mxu0 %v2158
    %v2364 = vpop.f32.mrb[0].mxu0
    %v2365 = vadd.f32 %v2260, %v2364
    %v2366 = vpop.f32.mrb[0].mxu0
    %2367 = vmatprep.mubr.f32.mxu0 %v2163
    %2368 = vmatmul.mubr.f32.gmra.mrb[0].mxu0 %v2162
    %v2369 = vpop.f32.mrb[0].mxu0
    %v2370 = vadd.f32 %v2265, %v2369
    %v2371 = vpop.f32.mrb[0].mxu0
    %2372 = vmatprep.mubr.f32.mxu0 %v2167
    %2373 = vmatmul.mubr.f32.gmra.mrb[0].mxu0 %v2166
    %v2374 = vpop.f32.mrb[0].mxu0
    %v2375 = vadd.f32 %v2270, %v2374
    %v2376 = vpop.f32.mrb[0].mxu0
    %2377 = vdwg.mxu0
    %v2378 = vmul.f32 %v2340, -100.0
    %v2379 = vmul.f32 %v2345, -100.0
    %v2380 = vmul.f32 %v2350, -100.0
    %v2381 = vmul.f32 %v2355, -100.0
    %v2382 = vmul.f32 %v2360, -100.0
    %v2383 = vmul.f32 %v2365, -100.0
    %v2384 = vmul.f32 %v2370, -100.0
    %v2385 = vmul.f32 %v2375, -100.0
    %v2386 = vadd.f32 %v61, %v2378
    %v2387 = vadd.f32 %v62, %v2379
    %v2388 = vadd.f32 %v63, %v2380
    %v2389 = vadd.f32 %v64, %v2381
    %v2390 = vadd.f32 %v65, %v2382
    %v2391 = vadd.f32 %v66, %v2383
    %v2392 = vadd.f32 %v67, %v2384
    %v2393 = vadd.f32 %v68, %v2385
    %v2394 = vsel %vm77, %v2386, -inf
    %2395 = vmax.xlane.f32.xlu0 %v2394
    %v2396 = vpop.xlane.xlu0 %2395
    %v2397 = vsel %vm77, %v2387, -inf
    %2398 = vmax.xlane.f32.xlu0 %v2397
    %v2399 = vpop.xlane.xlu0 %2398
    %v2400 = vsel %vm77, %v2388, -inf
    %2401 = vmax.xlane.f32.xlu0 %v2400
    %v2402 = vpop.xlane.xlu0 %2401
    %v2403 = vsel %vm77, %v2389, -inf
    %2404 = vmax.xlane.f32.xlu0 %v2403
    %v2405 = vpop.xlane.xlu0 %2404
    %v2406 = vsel %vm77, %v2390, -inf
    %2407 = vmax.xlane.f32.xlu0 %v2406
    %v2408 = vpop.xlane.xlu0 %2407
    %v2409 = vsel %vm77, %v2391, -inf
    %2410 = vmax.xlane.f32.xlu0 %v2409
    %v2411 = vpop.xlane.xlu0 %2410
    %v2412 = vsel %vm77, %v2392, -inf
    %2413 = vmax.xlane.f32.xlu0 %v2412
    %v2414 = vpop.xlane.xlu0 %2413
    %v2415 = vsel %vm77, %v2393, -inf
    %2416 = vmax.xlane.f32.xlu0 %v2415
    %v2417 = vpop.xlane.xlu0 %2416
    %v2418 = vsub.f32 %v2386, %v2396
    %v2419 = vsub.f32 %v2387, %v2399
    %v2420 = vsub.f32 %v2388, %v2402
    %v2421 = vsub.f32 %v2389, %v2405
    %v2422 = vsub.f32 %v2390, %v2408
    %v2423 = vsub.f32 %v2391, %v2411
    %v2424 = vsub.f32 %v2392, %v2414
    %v2425 = vsub.f32 %v2393, %v2417
    %v2426 = vmul.f32 %v2418, 1.442695
    %v2427 = vpow.pop %v2426
    %v2428 = vmul.f32 %v2419, 1.442695
    %v2429 = vpow.pop %v2428
    %v2430 = vmul.f32 %v2420, 1.442695
    %v2431 = vpow.pop %v2430
    %v2432 = vmul.f32 %v2421, 1.442695
    %v2433 = vpow.pop %v2432
    %v2434 = vmul.f32 %v2422, 1.442695
    %v2435 = vpow.pop %v2434
    %v2436 = vmul.f32 %v2423, 1.442695
    %v2437 = vpow.pop %v2436
    %v2438 = vmul.f32 %v2424, 1.442695
    %v2439 = vpow.pop %v2438
    %v2440 = vmul.f32 %v2425, 1.442695
    %v2441 = vpow.pop %v2440
    %v2442 = vsel %vm77, %v2427, 0.0
    %2443 = vadd.xlane.f32.xlu0 %v2442
    %v2444 = vpop.xlane.xlu0 %2443
    %v2445 = vsel %vm77, %v2429, 0.0
    %2446 = vadd.xlane.f32.xlu0 %v2445
    %v2447 = vpop.xlane.xlu0 %2446
    %v2448 = vsel %vm77, %v2431, 0.0
    %2449 = vadd.xlane.f32.xlu0 %v2448
    %v2450 = vpop.xlane.xlu0 %2449
    %v2451 = vsel %vm77, %v2433, 0.0
    %2452 = vadd.xlane.f32.xlu0 %v2451
    %v2453 = vpop.xlane.xlu0 %2452
    %v2454 = vsel %vm77, %v2435, 0.0
    %2455 = vadd.xlane.f32.xlu0 %v2454
    %v2456 = vpop.xlane.xlu0 %2455
    %v2457 = vsel %vm77, %v2437, 0.0
    %2458 = vadd.xlane.f32.xlu0 %v2457
    %v2459 = vpop.xlane.xlu0 %2458
    %v2460 = vsel %vm77, %v2439, 0.0
    %2461 = vadd.xlane.f32.xlu0 %v2460
    %v2462 = vpop.xlane.xlu0 %2461
    %v2463 = vsel %vm77, %v2441, 0.0
    %2464 = vadd.xlane.f32.xlu0 %v2463
    %v2465 = vpop.xlane.xlu0 %2464
    %v2466 = vrcp.pop %v2444
    %v2467 = vmul.f32 %v2427, %v2466
    %v2468 = vrcp.pop %v2447
    %v2469 = vmul.f32 %v2429, %v2468
    %v2470 = vrcp.pop %v2450
    %v2471 = vmul.f32 %v2431, %v2470
    %v2472 = vrcp.pop %v2453
    %v2473 = vmul.f32 %v2433, %v2472
    %v2474 = vrcp.pop %v2456
    %v2475 = vmul.f32 %v2435, %v2474
    %v2476 = vrcp.pop %v2459
    %v2477 = vmul.f32 %v2437, %v2476
    %v2478 = vrcp.pop %v2462
    %v2479 = vmul.f32 %v2439, %v2478
    %v2480 = vrcp.pop %v2465
    %v2481 = vmul.f32 %v2441, %v2480
    %v2483 = vsel %vm77, %v2467, 0
    %v2486 = vsel %vm77, %v2469, 0
    %v2489 = vsel %vm77, %v2471, 0
    %v2492 = vsel %vm77, %v2473, 0
    %v2495 = vsel %vm77, %v2475, 0
    %v2498 = vsel %vm77, %v2477, 0
    %v2501 = vsel %vm77, %v2479, 0
    %v2504 = vsel %vm77, %v2481, 0
    %2506 = vmatprep.subr.mxu0 %v167
    %2507 = vmatpush1.msra.mxu0 %v166
    %2508 = vmatprep.subr.mxu0 0.0
    %2509 = vmatpush1.msra.mxu0 0.0
    %2510 = vmatprep.subr.mxu0 0.0
    %2511 = vmatpush1.msra.mxu0 0.0
    %2512 = vmatprep.subr.mxu0 0.0
    %2513 = vmatpush1.msra.mxu0 0.0
    %2514 = vmatprep.subr.mxu0 0.0
    %2515 = vmatpush1.msra.mxu0 0.0
    %2516 = vmatprep.subr.mxu0 0.0
    %2517 = vmatpush1.msra.mxu0 0.0
    %2518 = vmatprep.subr.mxu0 0.0
    %2519 = vmatpush1.msra.mxu0 0.0
    %2520 = vmatprep.subr.mxu0 0.0
    %2521 = vmatpush1.msra.mxu0 0.0
    %2522 = vmatprep.subr.mxu0 0.0
    %2523 = vmatpush1.msra.mxu0 0.0
    %2524 = vmatprep.subr.mxu0 0.0
    %2525 = vmatpush1.msra.mxu0 0.0
    %2526 = vmatprep.subr.mxu0 0.0
    %2527 = vmatpush1.msra.mxu0 0.0
    %2528 = vmatprep.subr.mxu0 0.0
    %2529 = vmatpush1.msra.mxu0 0.0
    %2530 = vmatprep.subr.mxu0 0.0
    %2531 = vmatpush1.msra.mxu0 0.0
    %2532 = vmatprep.subr.mxu0 0.0
    %2533 = vmatpush1.msra.mxu0 0.0
    %2534 = vmatprep.subr.mxu0 0.0
    %2535 = vmatpush1.msra.mxu0 0.0
    %2536 = vmatprep.subr.mxu0 0.0
    %2537 = vmatpush1.msra.mxu0 0.0
    %2538 = vmatprep.subr.mxu0 0.0
    %2539 = vmatpush1.msra.mxu0 0.0
    %2540 = vmatprep.subr.mxu0 0.0
    %2541 = vmatpush1.msra.mxu0 0.0
    %2542 = vmatprep.subr.mxu0 0.0
    %2543 = vmatpush1.msra.mxu0 0.0
    %2544 = vmatprep.subr.mxu0 0.0
    %2545 = vmatpush1.msra.mxu0 0.0
    %2546 = vmatprep.subr.mxu0 0.0
    %2547 = vmatpush1.msra.mxu0 0.0
    %2548 = vmatprep.subr.mxu0 0.0
    %2549 = vmatpush1.msra.mxu0 0.0
    %2550 = vmatprep.subr.mxu0 0.0
    %2551 = vmatpush1.msra.mxu0 0.0
    %2552 = vmatprep.subr.mxu0 0.0
    %2553 = vmatpush1.msra.mxu0 0.0
    %2554 = vmatprep.subr.mxu0 0.0
    %2555 = vmatpush1.msra.mxu0 0.0
    %2556 = vmatprep.subr.mxu0 0.0
    %2557 = vmatpush1.msra.mxu0 0.0
    %2558 = vmatprep.subr.mxu0 0.0
    %2559 = vmatpush1.msra.mxu0 0.0
    %2560 = vmatprep.subr.mxu0 0.0
    %2561 = vmatpush1.msra.mxu0 0.0
    %2562 = vmatprep.subr.mxu0 0.0
    %2563 = vmatpush1.msra.mxu0 0.0
    %2564 = vmatprep.subr.mxu0 0.0
    %2565 = vmatpush1.msra.mxu0 0.0
    %2566 = vmatprep.subr.mxu0 0.0
    %2567 = vmatpush1.msra.mxu0 0.0
    %2568 = vmatprep.subr.mxu0 0.0
    %2569 = vmatpush1.msra.mxu0 0.0
    %2570 = vmatprep.mubr.f32.mxu0 0.0
    %2571 = vmatmul.mubr.f32.gmra.mrb[0].mxu0 %v2483
    %v2572 = vpop.f32.mrb[0].mxu0
    %v2573 = vadd.f32 0.0, %v2572
    %v2574 = vpop.f32.mrb[0].mxu0
    %v2575 = vadd.f32 0.0, %v2574
    %2576 = vmatprep.mubr.f32.mxu0 0.0
    %2577 = vmatmul.mubr.f32.gmra.mrb[0].mxu0 %v2486
    %v2578 = vpop.f32.mrb[0].mxu0
    %v2579 = vadd.f32 0.0, %v2578
    %v2580 = vpop.f32.mrb[0].mxu0
    %v2581 = vadd.f32 0.0, %v2580
    %2582 = vmatprep.mubr.f32.mxu0 0.0
    %2583 = vmatmul.mubr.f32.gmra.mrb[0].mxu0 %v2489
    %v2584 = vpop.f32.mrb[0].mxu0
    %v2585 = vadd.f32 0.0, %v2584
    %v2586 = vpop.f32.mrb[0].mxu0
    %v2587 = vadd.f32 0.0, %v2586
    %2588 = vmatprep.mubr.f32.mxu0 0.0
    %2589 = vmatmul.mubr.f32.gmra.mrb[0].mxu0 %v2492
    %v2590 = vpop.f32.mrb[0].mxu0
    %v2591 = vadd.f32 0.0, %v2590
    %v2592 = vpop.f32.mrb[0].mxu0
    %v2593 = vadd.f32 0.0, %v2592
    %2594 = vmatprep.mubr.f32.mxu0 0.0
    %2595 = vmatmul.mubr.f32.gmra.mrb[0].mxu0 %v2495
    %v2596 = vpop.f32.mrb[0].mxu0
    %v2597 = vadd.f32 0.0, %v2596
    %v2598 = vpop.f32.mrb[0].mxu0
    %v2599 = vadd.f32 0.0, %v2598
    %2600 = vmatprep.mubr.f32.mxu0 0.0
    %2601 = vmatmul.mubr.f32.gmra.mrb[0].mxu0 %v2498
    %v2602 = vpop.f32.mrb[0].mxu0
    %v2603 = vadd.f32 0.0, %v2602
    %v2604 = vpop.f32.mrb[0].mxu0
    %v2605 = vadd.f32 0.0, %v2604
    %2606 = vmatprep.mubr.f32.mxu0 0.0
    %2607 = vmatmul.mubr.f32.gmra.mrb[0].mxu0 %v2501
    %v2608 = vpop.f32.mrb[0].mxu0
    %v2609 = vadd.f32 0.0, %v2608
    %v2610 = vpop.f32.mrb[0].mxu0
    %v2611 = vadd.f32 0.0, %v2610
    %2612 = vmatprep.mubr.f32.mxu0 0.0
    %2613 = vmatmul.mubr.f32.gmra.mrb[0].mxu0 %v2504
    %v2614 = vpop.f32.mrb[0].mxu0
    %v2615 = vadd.f32 0.0, %v2614
    %v2616 = vpop.f32.mrb[0].mxu0
    %v2617 = vadd.f32 0.0, %v2616
    %2618 = vdwg.mxu0
    %2619 = vmatprep.subr.mxu0 %v169
    %2620 = vmatpush1.msra.mxu0 %v168
    %2621 = vmatprep.subr.mxu0 0.0
    %2622 = vmatpush1.msra.mxu0 0.0
    %2623 = vmatprep.subr.mxu0 0.0
    %2624 = vmatpush1.msra.mxu0 0.0
    %2625 = vmatprep.subr.mxu0 0.0
    %2626 = vmatpush1.msra.mxu0 0.0
    %2627 = vmatprep.subr.mxu0 0.0
    %2628 = vmatpush1.msra.mxu0 0.0
    %2629 = vmatprep.subr.mxu0 0.0
    %2630 = vmatpush1.msra.mxu0 0.0
    %2631 = vmatprep.subr.mxu0 0.0
    %2632 = vmatpush1.msra.mxu0 0.0
    %2633 = vmatprep.subr.mxu0 0.0
    %2634 = vmatpush1.msra.mxu0 0.0
    %2635 = vmatprep.subr.mxu0 0.0
    %2636 = vmatpush1.msra.mxu0 0.0
    %2637 = vmatprep.subr.mxu0 0.0
    %2638 = vmatpush1.msra.mxu0 0.0
    %2639 = vmatprep.subr.mxu0 0.0
    %2640 = vmatpush1.msra.mxu0 0.0
    %2641 = vmatprep.subr.mxu0 0.0
    %2642 = vmatpush1.msra.mxu0 0.0
    %2643 = vmatprep.subr.mxu0 0.0
    %2644 = vmatpush1.msra.mxu0 0.0
    %2645 = vmatprep.subr.mxu0 0.0
    %2646 = vmatpush1.msra.mxu0 0.0
    %2647 = vmatprep.subr.mxu0 0.0
    %2648 = vmatpush1.msra.mxu0 0.0
    %2649 = vmatprep.subr.mxu0 0.0
    %2650 = vmatpush1.msra.mxu0 0.0
    %2651 = vmatprep.subr.mxu0 0.0
    %2652 = vmatpush1.msra.mxu0 0.0
    %2653 = vmatprep.subr.mxu0 0.0
    %2654 = vmatpush1.msra.mxu0 0.0
    %2655 = vmatprep.subr.mxu0 0.0
    %2656 = vmatpush1.msra.mxu0 0.0
    %2657 = vmatprep.subr.mxu0 0.0
    %2658 = vmatpush1.msra.mxu0 0.0
    %2659 = vmatprep.subr.mxu0 0.0
    %2660 = vmatpush1.msra.mxu0 0.0
    %2661 = vmatprep.subr.mxu0 0.0
    %2662 = vmatpush1.msra.mxu0 0.0
    %2663 = vmatprep.subr.mxu0 0.0
    %2664 = vmatpush1.msra.mxu0 0.0
    %2665 = vmatprep.subr.mxu0 0.0
    %2666 = vmatpush1.msra.mxu0 0.0
    %2667 = vmatprep.subr.mxu0 0.0
    %2668 = vmatpush1.msra.mxu0 0.0
    %2669 = vmatprep.subr.mxu0 0.0
    %2670 = vmatpush1.msra.mxu0 0.0
    %2671 = vmatprep.subr.mxu0 0.0
    %2672 = vmatpush1.msra.mxu0 0.0
    %2673 = vmatprep.subr.mxu0 0.0
    %2674 = vmatpush1.msra.mxu0 0.0
    %2675 = vmatprep.subr.mxu0 0.0
    %2676 = vmatpush1.msra.mxu0 0.0
    %2677 = vmatprep.subr.mxu0 0.0
    %2678 = vmatpush1.msra.mxu0 0.0
    %2679 = vmatprep.subr.mxu0 0.0
    %2680 = vmatpush1.msra.mxu0 0.0
    %2681 = vmatprep.subr.mxu0 0.0
    %2682 = vmatpush1.msra.mxu0 0.0
    %2683 = vmatprep.mubr.f32.mxu0 0.0
    %2684 = vmatmul.mubr.f32.gmra.mrb[0].mxu0 %v2483
    %v2685 = vpop.f32.mrb[0].mxu0
    %v2686 = vadd.f32 0.0, %v2685
    %v2687 = vpop.f32.mrb[0].mxu0
    %v2688 = vadd.f32 0.0, %v2687
    %2689 = vmatprep.mubr.f32.mxu0 0.0
    %2690 = vmatmul.mubr.f32.gmra.mrb[0].mxu0 %v2486
    %v2691 = vpop.f32.mrb[0].mxu0
    %v2692 = vadd.f32 0.0, %v2691
    %v2693 = vpop.f32.mrb[0].mxu0
    %v2694 = vadd.f32 0.0, %v2693
    %2695 = vmatprep.mubr.f32.mxu0 0.0
    %2696 = vmatmul.mubr.f32.gmra.mrb[0].mxu0 %v2489
    %v2697 = vpop.f32.mrb[0].mxu0
    %v2698 = vadd.f32 0.0, %v2697
    %v2699 = vpop.f32.mrb[0].mxu0
    %v2700 = vadd.f32 0.0, %v2699
    %2701 = vmatprep.mubr.f32.mxu0 0.0
    %2702 = vmatmul.mubr.f32.gmra.mrb[0].mxu0 %v2492
    %v2703 = vpop.f32.mrb[0].mxu0
    %v2704 = vadd.f32 0.0, %v2703
    %v2705 = vpop.f32.mrb[0].mxu0
    %v2706 = vadd.f32 0.0, %v2705
    %2707 = vmatprep.mubr.f32.mxu0 0.0
    %2708 = vmatmul.mubr.f32.gmra.mrb[0].mxu0 %v2495
    %v2709 = vpop.f32.mrb[0].mxu0
    %v2710 = vadd.f32 0.0, %v2709
    %v2711 = vpop.f32.mrb[0].mxu0
    %v2712 = vadd.f32 0.0, %v2711
    %2713 = vmatprep.mubr.f32.mxu0 0.0
    %2714 = vmatmul.mubr.f32.gmra.mrb[0].mxu0 %v2498
    %v2715 = vpop.f32.mrb[0].mxu0
    %v2716 = vadd.f32 0.0, %v2715
    %v2717 = vpop.f32.mrb[0].mxu0
    %v2718 = vadd.f32 0.0, %v2717
    %2719 = vmatprep.mubr.f32.mxu0 0.0
    %2720 = vmatmul.mubr.f32.gmra.mrb[0].mxu0 %v2501
    %v2721 = vpop.f32.mrb[0].mxu0
    %v2722 = vadd.f32 0.0, %v2721
    %v2723 = vpop.f32.mrb[0].mxu0
    %v2724 = vadd.f32 0.0, %v2723
    %2725 = vmatprep.mubr.f32.mxu0 0.0
    %2726 = vmatmul.mubr.f32.gmra.mrb[0].mxu0 %v2504
    %v2727 = vpop.f32.mrb[0].mxu0
    %v2728 = vadd.f32 0.0, %v2727
    %v2729 = vpop.f32.mrb[0].mxu0
    %v2730 = vadd.f32 0.0, %v2729
    %2731 = vdwg.mxu0
    %v2732 = vmul.f32 %v2573, %v420
    %v2733 = vmul.f32 %v2575, %v421
    %v2734 = vmul.f32 %v2686, %v422
    %v2735 = vmul.f32 %v2688, %v423
    %v2736 = vmul.f32 %v2579, %v424
    %v2737 = vmul.f32 %v2581, %v425
    %v2738 = vmul.f32 %v2692, %v426
    %v2739 = vmul.f32 %v2694, %v427
    %v2740 = vmul.f32 %v2585, %v428
    %v2741 = vmul.f32 %v2587, %v429
    %v2742 = vmul.f32 %v2698, %v430
    %v2743 = vmul.f32 %v2700, %v431
    %v2744 = vmul.f32 %v2591, %v432
    %v2745 = vmul.f32 %v2593, %v433
    %v2746 = vmul.f32 %v2704, %v434
    %v2747 = vmul.f32 %v2706, %v435
    %v2748 = vmul.f32 %v2597, %v436
    %v2749 = vmul.f32 %v2599, %v437
    %v2750 = vmul.f32 %v2710, %v438
    %v2751 = vmul.f32 %v2712, %v439
    %v2752 = vmul.f32 %v2603, %v440
    %v2753 = vmul.f32 %v2605, %v441
    %v2754 = vmul.f32 %v2716, %v442
    %v2755 = vmul.f32 %v2718, %v443
    %v2756 = vmul.f32 %v2609, %v444
    %v2757 = vmul.f32 %v2611, %v445
    %v2758 = vmul.f32 %v2722, %v446
    %v2759 = vmul.f32 %v2724, %v447
    %v2760 = vmul.f32 %v2615, %v448
    %v2761 = vmul.f32 %v2617, %v449
    %v2762 = vmul.f32 %v2728, %v450
    %v2763 = vmul.f32 %v2730, %v451
    %v2764 = vadd.f32 %v2732, %v2736
    %v2765 = vadd.f32 %v2764, %v2740
    %v2766 = vadd.f32 %v2765, %v2744
    %v2767 = vadd.f32 %v2766, %v2748
    %v2768 = vadd.f32 %v2767, %v2752
    %v2769 = vadd.f32 %v2768, %v2756
    %v2770 = vadd.f32 %v2769, %v2760
    %v2771 = vrot.slane %v2770, 4
    %v2772 = vadd.f32 %v2770, %v2771
    %v2773 = vrot.slane %v2772, 2
    %v2774 = vadd.f32 %v2772, %v2773
    %v2775 = vrot.slane %v2774, 1
    %v2776 = vadd.f32 %v2774, %v2775
    %v2777 = vadd.f32 %v2733, %v2737
    %v2778 = vadd.f32 %v2777, %v2741
    %v2779 = vadd.f32 %v2778, %v2745
    %v2780 = vadd.f32 %v2779, %v2749
    %v2781 = vadd.f32 %v2780, %v2753
    %v2782 = vadd.f32 %v2781, %v2757
    %v2783 = vadd.f32 %v2782, %v2761
    %v2784 = vrot.slane %v2783, 4
    %v2785 = vadd.f32 %v2783, %v2784
    %v2786 = vrot.slane %v2785, 2
    %v2787 = vadd.f32 %v2785, %v2786
    %v2788 = vrot.slane %v2787, 1
    %v2789 = vadd.f32 %v2787, %v2788
    %v2790 = vadd.f32 %v2734, %v2738
    %v2791 = vadd.f32 %v2790, %v2742
    %v2792 = vadd.f32 %v2791, %v2746
    %v2793 = vadd.f32 %v2792, %v2750
    %v2794 = vadd.f32 %v2793, %v2754
    %v2795 = vadd.f32 %v2794, %v2758
    %v2796 = vadd.f32 %v2795, %v2762
    %v2797 = vrot.slane %v2796, 4
    %v2798 = vadd.f32 %v2796, %v2797
    %v2799 = vrot.slane %v2798, 2
    %v2800 = vadd.f32 %v2798, %v2799
    %v2801 = vrot.slane %v2800, 1
    %v2802 = vadd.f32 %v2800, %v2801
    %v2803 = vadd.f32 %v2735, %v2739
    %v2804 = vadd.f32 %v2803, %v2743
    %v2805 = vadd.f32 %v2804, %v2747
    %v2806 = vadd.f32 %v2805, %v2751
    %v2807 = vadd.f32 %v2806, %v2755
    %v2808 = vadd.f32 %v2807, %v2759
    %v2809 = vadd.f32 %v2808, %v2763
    %v2810 = vrot.slane %v2809, 4
    %v2811 = vadd.f32 %v2809, %v2810
    %v2812 = vrot.slane %v2811, 2
    %v2813 = vadd.f32 %v2811, %v2812
    %v2814 = vrot.slane %v2813, 1
    %v2815 = vadd.f32 %v2813, %v2814
    %2816 = vmatprep.subr.mxu0 %v537
    %2817 = vmatpush1.msra.mxu0 %v536
    %2818 = vmatprep.subr.mxu0 %v541
    %2819 = vmatpush1.msra.mxu0 %v540
    %2820 = vmatprep.subr.mxu0 %v545
    %2821 = vmatpush1.msra.mxu0 %v544
    %2822 = vmatprep.subr.mxu0 %v549
    %2823 = vmatpush1.msra.mxu0 %v548
    %2824 = vmatprep.subr.mxu0 %v553
    %2825 = vmatpush1.msra.mxu0 %v552
    %2826 = vmatprep.subr.mxu0 %v557
    %2827 = vmatpush1.msra.mxu0 %v556
    %2828 = vmatprep.subr.mxu0 %v561
    %2829 = vmatpush1.msra.mxu0 %v560
    %2830 = vmatprep.subr.mxu0 %v565
    %2831 = vmatpush1.msra.mxu0 %v564
    %2832 = vmatprep.subr.mxu0 %v569
    %2833 = vmatpush1.msra.mxu0 %v568
    %2834 = vmatprep.subr.mxu0 %v573
    %2835 = vmatpush1.msra.mxu0 %v572
    %2836 = vmatprep.subr.mxu0 %v577
    %2837 = vmatpush1.msra.mxu0 %v576
    %2838 = vmatprep.subr.mxu0 %v581
    %2839 = vmatpush1.msra.mxu0 %v580
    %2840 = vmatprep.subr.mxu0 %v585
    %2841 = vmatpush1.msra.mxu0 %v584
    %2842 = vmatprep.subr.mxu0 %v589
    %2843 = vmatpush1.msra.mxu0 %v588
    %2844 = vmatprep.subr.mxu0 %v593
    %2845 = vmatpush1.msra.mxu0 %v592
    %2846 = vmatprep.subr.mxu0 %v597
    %2847 = vmatpush1.msra.mxu0 %v596
    %2848 = vmatprep.subr.mxu0 %v601
    %2849 = vmatpush1.msra.mxu0 %v600
    %2850 = vmatprep.subr.mxu0 %v605
    %2851 = vmatpush1.msra.mxu0 %v604
    %2852 = vmatprep.subr.mxu0 %v609
    %2853 = vmatpush1.msra.mxu0 %v608
    %2854 = vmatprep.subr.mxu0 %v613
    %2855 = vmatpush1.msra.mxu0 %v612
    %2856 = vmatprep.subr.mxu0 %v617
    %2857 = vmatpush1.msra.mxu0 %v616
    %2858 = vmatprep.subr.mxu0 %v621
    %2859 = vmatpush1.msra.mxu0 %v620
    %2860 = vmatprep.subr.mxu0 %v625
    %2861 = vmatpush1.msra.mxu0 %v624
    %2862 = vmatprep.subr.mxu0 %v629
    %2863 = vmatpush1.msra.mxu0 %v628
    %2864 = vmatprep.subr.mxu0 %v633
    %2865 = vmatpush1.msra.mxu0 %v632
    %2866 = vmatprep.subr.mxu0 %v637
    %2867 = vmatpush1.msra.mxu0 %v636
    %2868 = vmatprep.subr.mxu0 %v641
    %2869 = vmatpush1.msra.mxu0 %v640
    %2870 = vmatprep.subr.mxu0 %v645
    %2871 = vmatpush1.msra.mxu0 %v644
    %2872 = vmatprep.subr.mxu0 %v649
    %2873 = vmatpush1.msra.mxu0 %v648
    %2874 = vmatprep.subr.mxu0 %v653
    %2875 = vmatpush1.msra.mxu0 %v652
    %2876 = vmatprep.subr.mxu0 %v657
    %2877 = vmatpush1.msra.mxu0 %v656
    %2878 = vmatprep.subr.mxu0 %v661
    %2879 = vmatpush1.msra.mxu0 %v660
    %2880 = vmatprep.mubr.f32.mxu0 %v2789
    %2881 = vmatmul.mubr.f32.gmra.mrb[0].mxu0 %v2776
    %v2882 = vpop.f32.mrb[0].mxu0
    %v2883 = vadd.f32 0.0, %v2882
    %v2884 = vpop.f32.mrb[0].mxu0
    %v2885 = vadd.f32 0.0, %v2884
    %2886 = vdwg.mxu0
    %2887 = vmatprep.subr.mxu0 %v665
    %2888 = vmatpush1.msra.mxu0 %v664
    %2889 = vmatprep.subr.mxu0 %v669
    %2890 = vmatpush1.msra.mxu0 %v668
    %2891 = vmatprep.subr.mxu0 %v673
    %2892 = vmatpush1.msra.mxu0 %v672
    %2893 = vmatprep.subr.mxu0 %v677
    %2894 = vmatpush1.msra.mxu0 %v676
    %2895 = vmatprep.subr.mxu0 %v681
    %2896 = vmatpush1.msra.mxu0 %v680
    %2897 = vmatprep.subr.mxu0 %v685
    %2898 = vmatpush1.msra.mxu0 %v684
    %2899 = vmatprep.subr.mxu0 %v689
    %2900 = vmatpush1.msra.mxu0 %v688
    %2901 = vmatprep.subr.mxu0 %v693
    %2902 = vmatpush1.msra.mxu0 %v692
    %2903 = vmatprep.subr.mxu0 %v697
    %2904 = vmatpush1.msra.mxu0 %v696
    %2905 = vmatprep.subr.mxu0 %v701
    %2906 = vmatpush1.msra.mxu0 %v700
    %2907 = vmatprep.subr.mxu0 %v705
    %2908 = vmatpush1.msra.mxu0 %v704
    %2909 = vmatprep.subr.mxu0 %v709
    %2910 = vmatpush1.msra.mxu0 %v708
    %2911 = vmatprep.subr.mxu0 %v713
    %2912 = vmatpush1.msra.mxu0 %v712
    %2913 = vmatprep.subr.mxu0 %v717
    %2914 = vmatpush1.msra.mxu0 %v716
    %2915 = vmatprep.subr.mxu0 %v721
    %2916 = vmatpush1.msra.mxu0 %v720
    %2917 = vmatprep.subr.mxu0 %v725
    %2918 = vmatpush1.msra.mxu0 %v724
    %2919 = vmatprep.subr.mxu0 %v729
    %2920 = vmatpush1.msra.mxu0 %v728
    %2921 = vmatprep.subr.mxu0 %v733
    %2922 = vmatpush1.msra.mxu0 %v732
    %2923 = vmatprep.subr.mxu0 %v737
    %2924 = vmatpush1.msra.mxu0 %v736
    %2925 = vmatprep.subr.mxu0 %v741
    %2926 = vmatpush1.msra.mxu0 %v740
    %2927 = vmatprep.subr.mxu0 %v745
    %2928 = vmatpush1.msra.mxu0 %v744
    %2929 = vmatprep.subr.mxu0 %v749
    %2930 = vmatpush1.msra.mxu0 %v748
    %2931 = vmatprep.subr.mxu0 %v753
    %2932 = vmatpush1.msra.mxu0 %v752
    %2933 = vmatprep.subr.mxu0 %v757
    %2934 = vmatpush1.msra.mxu0 %v756
    %2935 = vmatprep.subr.mxu0 %v761
    %2936 = vmatpush1.msra.mxu0 %v760
    %2937 = vmatprep.subr.mxu0 %v765
    %2938 = vmatpush1.msra.mxu0 %v764
    %2939 = vmatprep.subr.mxu0 %v769
    %2940 = vmatpush1.msra.mxu0 %v768
    %2941 = vmatprep.subr.mxu0 %v773
    %2942 = vmatpush1.msra.mxu0 %v772
    %2943 = vmatprep.subr.mxu0 %v777
    %2944 = vmatpush1.msra.mxu0 %v776
    %2945 = vmatprep.subr.mxu0 %v781
    %2946 = vmatpush1.msra.mxu0 %v780
    %2947 = vmatprep.subr.mxu0 %v785
    %2948 = vmatpush1.msra.mxu0 %v784
    %2949 = vmatprep.subr.mxu0 %v789
    %2950 = vmatpush1.msra.mxu0 %v788
    %2951 = vmatprep.mubr.f32.mxu0 %v2815
    %2952 = vmatmul.mubr.f32.gmra.mrb[0].mxu0 %v2802
    %v2953 = vpop.f32.mrb[0].mxu0
    %v2954 = vadd.f32 %v2883, %v2953
    %v2955 = vpop.f32.mrb[0].mxu0
    %v2956 = vadd.f32 %v2885, %v2955
    %2957 = vdwg.mxu0
    %2958 = vmatprep.subr.mxu0 %v539
    %2959 = vmatpush1.msra.mxu0 %v538
    %2960 = vmatprep.subr.mxu0 %v543
    %2961 = vmatpush1.msra.mxu0 %v542
    %2962 = vmatprep.subr.mxu0 %v547
    %2963 = vmatpush1.msra.mxu0 %v546
    %2964 = vmatprep.subr.mxu0 %v551
    %2965 = vmatpush1.msra.mxu0 %v550
    %2966 = vmatprep.subr.mxu0 %v555
    %2967 = vmatpush1.msra.mxu0 %v554
    %2968 = vmatprep.subr.mxu0 %v559
    %2969 = vmatpush1.msra.mxu0 %v558
    %2970 = vmatprep.subr.mxu0 %v563
    %2971 = vmatpush1.msra.mxu0 %v562
    %2972 = vmatprep.subr.mxu0 %v567
    %2973 = vmatpush1.msra.mxu0 %v566
    %2974 = vmatprep.subr.mxu0 %v571
    %2975 = vmatpush1.msra.mxu0 %v570
    %2976 = vmatprep.subr.mxu0 %v575
    %2977 = vmatpush1.msra.mxu0 %v574
    %2978 = vmatprep.subr.mxu0 %v579
    %2979 = vmatpush1.msra.mxu0 %v578
    %2980 = vmatprep.subr.mxu0 %v583
    %2981 = vmatpush1.msra.mxu0 %v582
    %2982 = vmatprep.subr.mxu0 %v587
    %2983 = vmatpush1.msra.mxu0 %v586
    %2984 = vmatprep.subr.mxu0 %v591
    %2985 = vmatpush1.msra.mxu0 %v590
    %2986 = vmatprep.subr.mxu0 %v595
    %2987 = vmatpush1.msra.mxu0 %v594
    %2988 = vmatprep.subr.mxu0 %v599
    %2989 = vmatpush1.msra.mxu0 %v598
    %2990 = vmatprep.subr.mxu0 %v603
    %2991 = vmatpush1.msra.mxu0 %v602
    %2992 = vmatprep.subr.mxu0 %v607
    %2993 = vmatpush1.msra.mxu0 %v606
    %2994 = vmatprep.subr.mxu0 %v611
    %2995 = vmatpush1.msra.mxu0 %v610
    %2996 = vmatprep.subr.mxu0 %v615
    %2997 = vmatpush1.msra.mxu0 %v614
    %2998 = vmatprep.subr.mxu0 %v619
    %2999 = vmatpush1.msra.mxu0 %v618
    %3000 = vmatprep.subr.mxu0 %v623
    %3001 = vmatpush1.msra.mxu0 %v622
    %3002 = vmatprep.subr.mxu0 %v627
    %3003 = vmatpush1.msra.mxu0 %v626
    %3004 = vmatprep.subr.mxu0 %v631
    %3005 = vmatpush1.msra.mxu0 %v630
    %3006 = vmatprep.subr.mxu0 %v635
    %3007 = vmatpush1.msra.mxu0 %v634
    %3008 = vmatprep.subr.mxu0 %v639
    %3009 = vmatpush1.msra.mxu0 %v638
    %3010 = vmatprep.subr.mxu0 %v643
    %3011 = vmatpush1.msra.mxu0 %v642
    %3012 = vmatprep.subr.mxu0 %v647
    %3013 = vmatpush1.msra.mxu0 %v646
    %3014 = vmatprep.subr.mxu0 %v651
    %3015 = vmatpush1.msra.mxu0 %v650
    %3016 = vmatprep.subr.mxu0 %v655
    %3017 = vmatpush1.msra.mxu0 %v654
    %3018 = vmatprep.subr.mxu0 %v659
    %3019 = vmatpush1.msra.mxu0 %v658
    %3020 = vmatprep.subr.mxu0 %v663
    %3021 = vmatpush1.msra.mxu0 %v662
    %3022 = vmatprep.mubr.f32.mxu0 %v2789
    %3023 = vmatmul.mubr.f32.gmra.mrb[0].mxu0 %v2776
    %v3024 = vpop.f32.mrb[0].mxu0
    %v3025 = vadd.f32 0.0, %v3024
    %v3026 = vpop.f32.mrb[0].mxu0
    %v3027 = vadd.f32 0.0, %v3026
    %3028 = vdwg.mxu0
    %3029 = vmatprep.subr.mxu0 %v667
    %3030 = vmatpush1.msra.mxu0 %v666
    %3031 = vmatprep.subr.mxu0 %v671
    %3032 = vmatpush1.msra.mxu0 %v670
    %3033 = vmatprep.subr.mxu0 %v675
    %3034 = vmatpush1.msra.mxu0 %v674
    %3035 = vmatprep.subr.mxu0 %v679
    %3036 = vmatpush1.msra.mxu0 %v678
    %3037 = vmatprep.subr.mxu0 %v683
    %3038 = vmatpush1.msra.mxu0 %v682
    %3039 = vmatprep.subr.mxu0 %v687
    %3040 = vmatpush1.msra.mxu0 %v686
    %3041 = vmatprep.subr.mxu0 %v691
    %3042 = vmatpush1.msra.mxu0 %v690
    %3043 = vmatprep.subr.mxu0 %v695
    %3044 = vmatpush1.msra.mxu0 %v694
    %3045 = vmatprep.subr.mxu0 %v699
    %3046 = vmatpush1.msra.mxu0 %v698
    %3047 = vmatprep.subr.mxu0 %v703
    %3048 = vmatpush1.msra.mxu0 %v702
    %3049 = vmatprep.subr.mxu0 %v707
    %3050 = vmatpush1.msra.mxu0 %v706
    %3051 = vmatprep.subr.mxu0 %v711
    %3052 = vmatpush1.msra.mxu0 %v710
    %3053 = vmatprep.subr.mxu0 %v715
    %3054 = vmatpush1.msra.mxu0 %v714
    %3055 = vmatprep.subr.mxu0 %v719
    %3056 = vmatpush1.msra.mxu0 %v718
    %3057 = vmatprep.subr.mxu0 %v723
    %3058 = vmatpush1.msra.mxu0 %v722
    %3059 = vmatprep.subr.mxu0 %v727
    %3060 = vmatpush1.msra.mxu0 %v726
    %3061 = vmatprep.subr.mxu0 %v731
    %3062 = vmatpush1.msra.mxu0 %v730
    %3063 = vmatprep.subr.mxu0 %v735
    %3064 = vmatpush1.msra.mxu0 %v734
    %3065 = vmatprep.subr.mxu0 %v739
    %3066 = vmatpush1.msra.mxu0 %v738
    %3067 = vmatprep.subr.mxu0 %v743
    %3068 = vmatpush1.msra.mxu0 %v742
    %3069 = vmatprep.subr.mxu0 %v747
    %3070 = vmatpush1.msra.mxu0 %v746
    %3071 = vmatprep.subr.mxu0 %v751
    %3072 = vmatpush1.msra.mxu0 %v750
    %3073 = vmatprep.subr.mxu0 %v755
    %3074 = vmatpush1.msra.mxu0 %v754
    %3075 = vmatprep.subr.mxu0 %v759
    %3076 = vmatpush1.msra.mxu0 %v758
    %3077 = vmatprep.subr.mxu0 %v763
    %3078 = vmatpush1.msra.mxu0 %v762
    %3079 = vmatprep.subr.mxu0 %v767
    %3080 = vmatpush1.msra.mxu0 %v766
    %3081 = vmatprep.subr.mxu0 %v771
    %3082 = vmatpush1.msra.mxu0 %v770
    %3083 = vmatprep.subr.mxu0 %v775
    %3084 = vmatpush1.msra.mxu0 %v774
    %3085 = vmatprep.subr.mxu0 %v779
    %3086 = vmatpush1.msra.mxu0 %v778
    %3087 = vmatprep.subr.mxu0 %v783
    %3088 = vmatpush1.msra.mxu0 %v782
    %3089 = vmatprep.subr.mxu0 %v787
    %3090 = vmatpush1.msra.mxu0 %v786
    %3091 = vmatprep.subr.mxu0 %v791
    %3092 = vmatpush1.msra.mxu0 %v790
    %3093 = vmatprep.mubr.f32.mxu0 %v2815
    %3094 = vmatmul.mubr.f32.gmra.mrb[0].mxu0 %v2802
    %v3095 = vpop.f32.mrb[0].mxu0
    %v3096 = vadd.f32 %v3025, %v3095
    %v3097 = vpop.f32.mrb[0].mxu0
    %v3098 = vadd.f32 %v3027, %v3097
    %3099 = vdwg.mxu0
    %v3100 = vlaneseq
    %v3101 = vshrl.u32 %v3100, 7
    %v3102 = vsub.s32 0, %v3101
    %v3103 = vrot.slane %v2954, %v3102
    %v3104 = vlaneseq
    %v3105 = vshrl.u32 %v3104, 7
    %v3106 = vsub.s32 0, %v3105
    %v3107 = vrot.slane %v2956, %v3106
    %v3108 = vlaneseq
    %v3109 = vshrl.u32 %v3108, 7
    %v3110 = vsub.s32 0, %v3109
    %v3111 = vrot.slane %v3096, %v3110
    %v3112 = vlaneseq
    %v3113 = vshrl.u32 %v3112, 7
    %v3114 = vsub.s32 0, %v3113
    %v3115 = vrot.slane %v3098, %v3114
    %v3116 = vmul.f32 %v3103, %v420
    %v3117 = vmul.f32 %v3107, %v421
    %v3118 = vmul.f32 %v3111, %v422
    %v3119 = vmul.f32 %v3115, %v423
    %v3120 = vmul.f32 %v3103, %v424
    %v3121 = vmul.f32 %v3107, %v425
    %v3122 = vmul.f32 %v3111, %v426
    %v3123 = vmul.f32 %v3115, %v427
    %v3124 = vmul.f32 %v3103, %v428
    %v3125 = vmul.f32 %v3107, %v429
    %v3126 = vmul.f32 %v3111, %v430
    %v3127 = vmul.f32 %v3115, %v431
    %v3128 = vmul.f32 %v3103, %v432
    %v3129 = vmul.f32 %v3107, %v433
    %v3130 = vmul.f32 %v3111, %v434
    %v3131 = vmul.f32 %v3115, %v435
    %v3132 = vmul.f32 %v3103, %v436
    %v3133 = vmul.f32 %v3107, %v437
    %v3134 = vmul.f32 %v3111, %v438
    %v3135 = vmul.f32 %v3115, %v439
    %v3136 = vmul.f32 %v3103, %v440
    %v3137 = vmul.f32 %v3107, %v441
    %v3138 = vmul.f32 %v3111, %v442
    %v3139 = vmul.f32 %v3115, %v443
    %v3140 = vmul.f32 %v3103, %v444
    %v3141 = vmul.f32 %v3107, %v445
    %v3142 = vmul.f32 %v3111, %v446
    %v3143 = vmul.f32 %v3115, %v447
    %v3144 = vmul.f32 %v3103, %v448
    %v3145 = vmul.f32 %v3107, %v449
    %v3146 = vmul.f32 %v3111, %v450
    %v3147 = vmul.f32 %v3115, %v451
    %3148 = vmatprep.subr.mxu0 0.0
    %3149 = vmatpush1.msra.mxu0 %v1124
    %3150 = vmatprep.subr.mxu0 0.0
    %3151 = vmatpush1.msra.mxu0 %v1125
    %3152 = vmatprep.subr.mxu0 0.0
    %3153 = vmatpush1.msra.mxu0 %v1126
    %3154 = vmatprep.subr.mxu0 0.0
    %3155 = vmatpush1.msra.mxu0 %v1127
    %3156 = vmatprep.subr.mxu0 0.0
    %3157 = vmatpush1.msra.mxu0 %v1128
    %3158 = vmatprep.subr.mxu0 0.0
    %3159 = vmatpush1.msra.mxu0 %v1129
    %3160 = vmatprep.subr.mxu0 0.0
    %3161 = vmatpush1.msra.mxu0 %v1130
    %3162 = vmatprep.subr.mxu0 0.0
    %3163 = vmatpush1.msra.mxu0 %v1131
    %3164 = vmatprep.subr.mxu0 0.0
    %3165 = vmatpush1.msra.mxu0 %v1132
    %3166 = vmatprep.subr.mxu0 0.0
    %3167 = vmatpush1.msra.mxu0 %v1133
    %3168 = vmatprep.subr.mxu0 0.0
    %3169 = vmatpush1.msra.mxu0 %v1134
    %3170 = vmatprep.subr.mxu0 0.0
    %3171 = vmatpush1.msra.mxu0 %v1135
    %3172 = vmatprep.subr.mxu0 0.0
    %3173 = vmatpush1.msra.mxu0 %v1136
    %3174 = vmatprep.subr.mxu0 0.0
    %3175 = vmatpush1.msra.mxu0 %v1137
    %3176 = vmatprep.subr.mxu0 0.0
    %3177 = vmatpush1.msra.mxu0 %v1138
    %3178 = vmatprep.subr.mxu0 0.0
    %3179 = vmatpush1.msra.mxu0 %v1139
    %3180 = vmatprep.subr.mxu0 0.0
    %3181 = vmatpush1.msra.mxu0 %v1140
    %3182 = vmatprep.subr.mxu0 0.0
    %3183 = vmatpush1.msra.mxu0 %v1141
    %3184 = vmatprep.subr.mxu0 0.0
    %3185 = vmatpush1.msra.mxu0 %v1142
    %3186 = vmatprep.subr.mxu0 0.0
    %3187 = vmatpush1.msra.mxu0 %v1143
    %3188 = vmatprep.subr.mxu0 0.0
    %3189 = vmatpush1.msra.mxu0 %v1144
    %3190 = vmatprep.subr.mxu0 0.0
    %3191 = vmatpush1.msra.mxu0 %v1145
    %3192 = vmatprep.subr.mxu0 0.0
    %3193 = vmatpush1.msra.mxu0 %v1146
    %3194 = vmatprep.subr.mxu0 0.0
    %3195 = vmatpush1.msra.mxu0 %v1147
    %3196 = vmatprep.subr.mxu0 0.0
    %3197 = vmatpush1.msra.mxu0 %v1148
    %3198 = vmatprep.subr.mxu0 0.0
    %3199 = vmatpush1.msra.mxu0 %v1149
    %3200 = vmatprep.subr.mxu0 0.0
    %3201 = vmatpush1.msra.mxu0 %v1150
    %3202 = vmatprep.subr.mxu0 0.0
    %3203 = vmatpush1.msra.mxu0 %v1151
    %3204 = vmatprep.subr.mxu0 0.0
    %3205 = vmatpush1.msra.mxu0 %v1152
    %3206 = vmatprep.subr.mxu0 0.0
    %3207 = vmatpush1.msra.mxu0 %v1153
    %3208 = vmatprep.subr.mxu0 0.0
    %3209 = vmatpush1.msra.mxu0 %v1154
    %3210 = vmatprep.subr.mxu0 0.0
    %3211 = vmatpush1.msra.mxu0 %v1155
    %3212 = vmatprep.mubr.f32.mxu0 %v3117
    %3213 = vmatmul.mubr.f32.gmra.mrb[0].mxu0 %v3116
    %v3214 = vpop.f32.mrb[0].mxu0
    %v3215 = vadd.f32 0.0, %v3214
    %v3216 = vpop.f32.mrb[0].mxu0
    %3217 = vmatprep.mubr.f32.mxu0 %v3121
    %3218 = vmatmul.mubr.f32.gmra.mrb[0].mxu0 %v3120
    %v3219 = vpop.f32.mrb[0].mxu0
    %v3220 = vadd.f32 0.0, %v3219
    %v3221 = vpop.f32.mrb[0].mxu0
    %3222 = vmatprep.mubr.f32.mxu0 %v3125
    %3223 = vmatmul.mubr.f32.gmra.mrb[0].mxu0 %v3124
    %v3224 = vpop.f32.mrb[0].mxu0
    %v3225 = vadd.f32 0.0, %v3224
    %v3226 = vpop.f32.mrb[0].mxu0
    %3227 = vmatprep.mubr.f32.mxu0 %v3129
    %3228 = vmatmul.mubr.f32.gmra.mrb[0].mxu0 %v3128
    %v3229 = vpop.f32.mrb[0].mxu0
    %v3230 = vadd.f32 0.0, %v3229
    %v3231 = vpop.f32.mrb[0].mxu0
    %3232 = vmatprep.mubr.f32.mxu0 %v3133
    %3233 = vmatmul.mubr.f32.gmra.mrb[0].mxu0 %v3132
    %v3234 = vpop.f32.mrb[0].mxu0
    %v3235 = vadd.f32 0.0, %v3234
    %v3236 = vpop.f32.mrb[0].mxu0
    %3237 = vmatprep.mubr.f32.mxu0 %v3137
    %3238 = vmatmul.mubr.f32.gmra.mrb[0].mxu0 %v3136
    %v3239 = vpop.f32.mrb[0].mxu0
    %v3240 = vadd.f32 0.0, %v3239
    %v3241 = vpop.f32.mrb[0].mxu0
    %3242 = vmatprep.mubr.f32.mxu0 %v3141
    %3243 = vmatmul.mubr.f32.gmra.mrb[0].mxu0 %v3140
    %v3244 = vpop.f32.mrb[0].mxu0
    %v3245 = vadd.f32 0.0, %v3244
    %v3246 = vpop.f32.mrb[0].mxu0
    %3247 = vmatprep.mubr.f32.mxu0 %v3145
    %3248 = vmatmul.mubr.f32.gmra.mrb[0].mxu0 %v3144
    %v3249 = vpop.f32.mrb[0].mxu0
    %v3250 = vadd.f32 0.0, %v3249
    %v3251 = vpop.f32.mrb[0].mxu0
    %3252 = vdwg.mxu0
    %3253 = vmatprep.subr.mxu0 0.0
    %3254 = vmatpush1.msra.mxu0 %v1156
    %3255 = vmatprep.subr.mxu0 0.0
    %3256 = vmatpush1.msra.mxu0 %v1157
    %3257 = vmatprep.subr.mxu0 0.0
    %3258 = vmatpush1.msra.mxu0 %v1158
    %3259 = vmatprep.subr.mxu0 0.0
    %3260 = vmatpush1.msra.mxu0 %v1159
    %3261 = vmatprep.subr.mxu0 0.0
    %3262 = vmatpush1.msra.mxu0 %v1160
    %3263 = vmatprep.subr.mxu0 0.0
    %3264 = vmatpush1.msra.mxu0 %v1161
    %3265 = vmatprep.subr.mxu0 0.0
    %3266 = vmatpush1.msra.mxu0 %v1162
    %3267 = vmatprep.subr.mxu0 0.0
    %3268 = vmatpush1.msra.mxu0 %v1163
    %3269 = vmatprep.subr.mxu0 0.0
    %3270 = vmatpush1.msra.mxu0 %v1164
    %3271 = vmatprep.subr.mxu0 0.0
    %3272 = vmatpush1.msra.mxu0 %v1165
    %3273 = vmatprep.subr.mxu0 0.0
    %3274 = vmatpush1.msra.mxu0 %v1166
    %3275 = vmatprep.subr.mxu0 0.0
    %3276 = vmatpush1.msra.mxu0 %v1167
    %3277 = vmatprep.subr.mxu0 0.0
    %3278 = vmatpush1.msra.mxu0 %v1168
    %3279 = vmatprep.subr.mxu0 0.0
    %3280 = vmatpush1.msra.mxu0 %v1169
    %3281 = vmatprep.subr.mxu0 0.0
    %3282 = vmatpush1.msra.mxu0 %v1170
    %3283 = vmatprep.subr.mxu0 0.0
    %3284 = vmatpush1.msra.mxu0 %v1171
    %3285 = vmatprep.subr.mxu0 0.0
    %3286 = vmatpush1.msra.mxu0 %v1172
    %3287 = vmatprep.subr.mxu0 0.0
    %3288 = vmatpush1.msra.mxu0 %v1173
    %3289 = vmatprep.subr.mxu0 0.0
    %3290 = vmatpush1.msra.mxu0 %v1174
    %3291 = vmatprep.subr.mxu0 0.0
    %3292 = vmatpush1.msra.mxu0 %v1175
    %3293 = vmatprep.subr.mxu0 0.0
    %3294 = vmatpush1.msra.mxu0 %v1176
    %3295 = vmatprep.subr.mxu0 0.0
    %3296 = vmatpush1.msra.mxu0 %v1177
    %3297 = vmatprep.subr.mxu0 0.0
    %3298 = vmatpush1.msra.mxu0 %v1178
    %3299 = vmatprep.subr.mxu0 0.0
    %3300 = vmatpush1.msra.mxu0 %v1179
    %3301 = vmatprep.subr.mxu0 0.0
    %3302 = vmatpush1.msra.mxu0 %v1180
    %3303 = vmatprep.subr.mxu0 0.0
    %3304 = vmatpush1.msra.mxu0 %v1181
    %3305 = vmatprep.subr.mxu0 0.0
    %3306 = vmatpush1.msra.mxu0 %v1182
    %3307 = vmatprep.subr.mxu0 0.0
    %3308 = vmatpush1.msra.mxu0 %v1183
    %3309 = vmatprep.subr.mxu0 0.0
    %3310 = vmatpush1.msra.mxu0 %v1184
    %3311 = vmatprep.subr.mxu0 0.0
    %3312 = vmatpush1.msra.mxu0 %v1185
    %3313 = vmatprep.subr.mxu0 0.0
    %3314 = vmatpush1.msra.mxu0 %v1186
    %3315 = vmatprep.subr.mxu0 0.0
    %3316 = vmatpush1.msra.mxu0 %v1187
    %3317 = vmatprep.mubr.f32.mxu0 %v3119
    %3318 = vmatmul.mubr.f32.gmra.mrb[0].mxu0 %v3118
    %v3319 = vpop.f32.mrb[0].mxu0
    %v3320 = vadd.f32 %v3215, %v3319
    %v3321 = vpop.f32.mrb[0].mxu0
    %3322 = vmatprep.mubr.f32.mxu0 %v3123
    %3323 = vmatmul.mubr.f32.gmra.mrb[0].mxu0 %v3122
    %v3324 = vpop.f32.mrb[0].mxu0
    %v3325 = vadd.f32 %v3220, %v3324
    %v3326 = vpop.f32.mrb[0].mxu0
    %3327 = vmatprep.mubr.f32.mxu0 %v3127
    %3328 = vmatmul.mubr.f32.gmra.mrb[0].mxu0 %v3126
    %v3329 = vpop.f32.mrb[0].mxu0
    %v3330 = vadd.f32 %v3225, %v3329
    %v3331 = vpop.f32.mrb[0].mxu0
    %3332 = vmatprep.mubr.f32.mxu0 %v3131
    %3333 = vmatmul.mubr.f32.gmra.mrb[0].mxu0 %v3130
    %v3334 = vpop.f32.mrb[0].mxu0
    %v3335 = vadd.f32 %v3230, %v3334
    %v3336 = vpop.f32.mrb[0].mxu0
    %3337 = vmatprep.mubr.f32.mxu0 %v3135
    %3338 = vmatmul.mubr.f32.gmra.mrb[0].mxu0 %v3134
    %v3339 = vpop.f32.mrb[0].mxu0
    %v3340 = vadd.f32 %v3235, %v3339
    %v3341 = vpop.f32.mrb[0].mxu0
    %3342 = vmatprep.mubr.f32.mxu0 %v3139
    %3343 = vmatmul.mubr.f32.gmra.mrb[0].mxu0 %v3138
    %v3344 = vpop.f32.mrb[0].mxu0
    %v3345 = vadd.f32 %v3240, %v3344
    %v3346 = vpop.f32.mrb[0].mxu0
    %3347 = vmatprep.mubr.f32.mxu0 %v3143
    %3348 = vmatmul.mubr.f32.gmra.mrb[0].mxu0 %v3142
    %v3349 = vpop.f32.mrb[0].mxu0
    %v3350 = vadd.f32 %v3245, %v3349
    %v3351 = vpop.f32.mrb[0].mxu0
    %3352 = vmatprep.mubr.f32.mxu0 %v3147
    %3353 = vmatmul.mubr.f32.gmra.mrb[0].mxu0 %v3146
    %v3354 = vpop.f32.mrb[0].mxu0
    %v3355 = vadd.f32 %v3250, %v3354
    %v3356 = vpop.f32.mrb[0].mxu0
    %3357 = vdwg.mxu0
    %v3358 = vmul.f32 %v3320, -100.0
    %v3359 = vmul.f32 %v3325, -100.0
    %v3360 = vmul.f32 %v3330, -100.0
    %v3361 = vmul.f32 %v3335, -100.0
    %v3362 = vmul.f32 %v3340, -100.0
    %v3363 = vmul.f32 %v3345, -100.0
    %v3364 = vmul.f32 %v3350, -100.0
    %v3365 = vmul.f32 %v3355, -100.0
    %v3366 = vadd.f32 %v61, %v3358
    %v3367 = vadd.f32 %v62, %v3359
    %v3368 = vadd.f32 %v63, %v3360
    %v3369 = vadd.f32 %v64, %v3361
    %v3370 = vadd.f32 %v65, %v3362
    %v3371 = vadd.f32 %v66, %v3363
    %v3372 = vadd.f32 %v67, %v3364
    %v3373 = vadd.f32 %v68, %v3365
    %3374 = vst.msk [vmem:[%s6] sm:$0xff] %vm77, %v3366
    %3375 = vst.msk [vmem:[%s6 + $0x8] sm:$0xff] %vm77, %v3367
    %3376 = vst.msk [vmem:[%s6 + $0x10] sm:$0xff] %vm77, %v3368
    %3377 = vst.msk [vmem:[%s6 + $0x18] sm:$0xff] %vm77, %v3369
    %3378 = vst.msk [vmem:[%s6 + $0x20] sm:$0xff] %vm77, %v3370
    %3379 = vst.msk [vmem:[%s6 + $0x28] sm:$0xff] %vm77, %v3371
    %3380 = vst.msk [vmem:[%s6 + $0x30] sm:$0xff] %vm77, %v3372
    %3381 = vst.msk [vmem:[%s6 + $0x38] sm:$0xff] %vm77, %v3373
    // Predicated region
    $region30: #{tpu_custom_call.1} parent=1 // pred_check
      _
    $region31: #{tpu_custom_call.1} parent=1 // pred_check_branch
      %3383 = sbr.rel (0) target = $region33
    $region32: #{tpu_custom_call.1} parent=1 // pred_region
      _
    $region33: #{tpu_custom_call.1} parent=1 // pred_fallthru
      _
    // Predicated region
    $region34: #{tpu_custom_call.1} parent=1 // pred_check
      _
    $region35: #{tpu_custom_call.1} parent=1 // pred_check_branch
      %3385 = sbr.rel (0) target = $region37
    $region36: #{tpu_custom_call.1} parent=1 // pred_region
      _
    $region37: #{tpu_custom_call.1} parent=1 // pred_fallthru
      _
    %3386 = vsyncpa [#allocation3], 1

</llo_original>
